<compile_context>
chip_gen: v7x
topology: tpu7x:2x2x1
jax: 0.10.0
libtpu: 0.0.40
codegen_flags: <defaults>
</compile_context>

<pallas_src>
import jax
import jax.numpy as jnp
from jax.experimental import pallas as pl
from jax.experimental.pallas import tpu as pltpu

# ---- model hyper-params (small demo config, consistent with the module) -----
NX = 12        # categorical dimension (module default)
NZ = 5         # latent dimension      (module default)
NH = 128       # hidden width (module default 1024; shrunk for a small demo)
LANE = 128     # TPU lane width
NXP = 128      # NX padded up to a full lane width for lane-dense stores
BATCH = 512    # minibatch processed by one call
TB = 256       # batch tile (MXU rows on v6e/v7x)

_NEG_SLOPE = 0.01  # nn.LeakyReLU default


def _leaky_relu(x):
    return jnp.where(x > 0, x, _NEG_SLOPE * x)


def catgan_kernel(z_ref,
                  gw1_ref, gb1_ref, gw2_ref, gb2_ref, gw3_ref, gb3_ref,
                  dw1_ref, db1_ref, dw2_ref, db2_ref, dw3_ref, db3_ref,
                  xgen_ref, dlogit_ref):
    z = z_ref[...]                                            # (TB, NZ)

    # ---------------- Generator Gx ----------------
    h = jnp.dot(z, gw1_ref[...], preferred_element_type=jnp.float32) + gb1_ref[...]
    h = _leaky_relu(h)
    h = jnp.dot(h, gw2_ref[...], preferred_element_type=jnp.float32) + gb2_ref[...]
    h = _leaky_relu(h)
    # gw3/gb3 are padded to NXP=128 output lanes; padded lanes carry a -1e9
    # bias, so after max-subtracted exp they are exactly 0 probability and the
    # softmax over 128 lanes equals the softmax over the 12 real categories.
    logits = jnp.dot(h, gw3_ref[...], preferred_element_type=jnp.float32) + gb3_ref[...]

    m = jnp.max(logits, axis=-1, keepdims=True)
    e = jnp.exp(logits - m)
    denom = jnp.sum(e, axis=-1, keepdims=True)
    x_gen = e * pl.reciprocal(denom, approx=True)             # (TB, NXP), lane-dense
    xgen_ref[...] = x_gen

    # ---------------- Discriminator Dx ----------------
    # dw1 is zero-padded on its (padded) input rows, so the padded x_gen lanes
    # contribute nothing.
    d = jnp.dot(x_gen, dw1_ref[...], preferred_element_type=jnp.float32) + db1_ref[...]
    d = _leaky_relu(d)
    d = jnp.dot(d, dw2_ref[...], preferred_element_type=jnp.float32) + db2_ref[...]
    d = _leaky_relu(d)
    # NH -> 1 head on VPU + XLU (broadcast-multiply + lane reduction) instead of
    # an N=1 MXU matmul.
    d_logit = jnp.sum(d * dw3_ref[...], axis=-1, keepdims=True) + db3_ref[...]
    # Lane-dense store: broadcast the scalar logit across 128 lanes.
    dlogit_ref[...] = jnp.broadcast_to(d_logit, dlogit_ref.shape)


def catgan_forward(z, padded_params):
    """z: (B, NZ) f32; padded_params: 12 arrays (lane-padded, see pad_params)."""
    B = z.shape[0]
    assert B % TB == 0, "batch must be a multiple of the batch tile"
    grid = (B // TB,)

    batch_map = lambda i: (i, 0)   # activation tiles walk the batch axis
    const_map = lambda i: (0, 0)   # weights/biases stay VMEM-resident

    in_specs = [pl.BlockSpec((TB, NZ), batch_map)]
    in_specs += [pl.BlockSpec(p.shape, const_map) for p in padded_params]
    out_specs = (pl.BlockSpec((TB, NXP), batch_map),
                 pl.BlockSpec((TB, LANE), batch_map))
    out_shape = (jax.ShapeDtypeStruct((B, NXP), jnp.float32),   # x_gen slab
                 jax.ShapeDtypeStruct((B, LANE), jnp.float32))  # d_logit slab

    # Advisory cost estimate for XLA's scheduler.
    param_elems = sum(int(p.size) for p in padded_params)
    flops = 2 * B * (NZ * NH + NH * NH + NH * NXP + NXP * NH + NH * NH + NH)
    transcendentals = B * (NXP + 1)                       # exp + approx recip
    bytes_accessed = 4 * (B * NZ + param_elems + B * NXP + B * LANE)

    xg_slab, dl_slab = pl.pallas_call(
        catgan_kernel,
        grid=grid,
        in_specs=in_specs,
        out_specs=out_specs,
        out_shape=out_shape,
        compiler_params=pltpu.CompilerParams(
            dimension_semantics=("parallel",)),           # megacore on v7x
        cost_estimate=pl.CostEstimate(
            flops=flops,
            transcendentals=transcendentals,
            bytes_accessed=bytes_accessed),
    )(z, *padded_params)

    # Slice the lane-dense slabs back to the logical shapes (free vs. kernel).
    return xg_slab[:, :NX], dl_slab[:, :1]


# ---------------- deterministic parameter init (PyTorch-Linear-style) --------
def _init_linear(key, fan_in, fan_out):
    kw, kb = jax.random.split(key)
    bound = 1.0 / jnp.sqrt(jnp.float32(fan_in))
    # stored as (in, out); bias kept 2-D (1, out) for TPU friendliness
    w = jax.random.uniform(kw, (fan_in, fan_out), jnp.float32, -bound, bound)
    b = jax.random.uniform(kb, (1, fan_out), jnp.float32, -bound, bound)
    return w, b


def build_params(key):
    dims_g = [(NZ, NH), (NH, NH), (NH, NX)]   # Gx
    dims_d = [(NX, NH), (NH, NH), (NH, 1)]    # Dx
    keys = jax.random.split(key, len(dims_g) + len(dims_d))
    params = []
    for k, (fi, fo) in zip(keys, dims_g + dims_d):
        w, b = _init_linear(k, fi, fo)
        params += [w, b]
    return params


def pad_params(params):
    """Lane-pad the NX-wide and 1-wide layers so all kernel I/O is lane-dense."""
    gw1, gb1, gw2, gb2, gw3, gb3, dw1, db1, dw2, db2, dw3, db3 = params
    gw3_p = jnp.zeros((NH, NXP), jnp.float32).at[:, :NX].set(gw3)
    gb3_p = jnp.full((1, NXP), -1e9, jnp.float32).at[:, :NX].set(gb3)
    dw1_p = jnp.zeros((NXP, NH), jnp.float32).at[:NX, :].set(dw1)
    dw3_row = dw3.reshape(1, NH)        # (NH,1) -> (1,NH) row for VPU head
    db3_s = db3.reshape(1, 1)
    return [gw1, gb1, gw2, gb2, gw3_p, gb3_p,
            dw1_p, db1, dw2, db2, dw3_row, db3_s]


# Pure-JAX reference (unpadded) for a sanity check.
def _ref_forward(z, params):
    gw1, gb1, gw2, gb2, gw3, gb3, dw1, db1, dw2, db2, dw3, db3 = params
    h = _leaky_relu(z @ gw1 + gb1)
    h = _leaky_relu(h @ gw2 + gb2)
    x = jax.nn.softmax(h @ gw3 + gb3, axis=-1)
    d = _leaky_relu(x @ dw1 + db1)
    d = _leaky_relu(d @ dw2 + db2)
    return x, d @ dw3 + db3


if __name__ == "__main__":
    root = jax.random.PRNGKey(0)
    kz, kp = jax.random.split(root)

    # z ~ N(0, 1), matching self.generate(z=None) / z_prior sampling shape.
    z = jax.random.normal(kz, (BATCH, NZ), dtype=jnp.float32)
    params = build_params(kp)
    padded = pad_params(params)

    x_gen, d_logits = jax.block_until_ready(catgan_forward(z, padded))

    # sanity: shapes, softmax sums to ~1, matches pure-JAX reference
    # (tolerances relaxed for the approx-reciprocal softmax denominator)
    x_ref, d_ref = _ref_forward(z, params)
    assert x_gen.shape == (BATCH, NX) and d_logits.shape == (BATCH, 1)
    assert jnp.allclose(jnp.sum(x_gen, axis=-1), 1.0, atol=2e-3)
    assert jnp.allclose(x_gen, x_ref, atol=2e-3)
    assert jnp.allclose(d_logits, d_ref, atol=1e-2)

    print("KERNEL_OK")
</pallas_src>

<mosaic_0001>
module attributes {stable_mosaic.version = 11 : i64} {
  func.func @catgan_kernel(%arg0: i32, %arg1: memref<256x5xf32, #tpu.memory_space<vmem>>, %arg2: memref<5x128xf32, #tpu.memory_space<vmem>>, %arg3: memref<1x128xf32, #tpu.memory_space<vmem>>, %arg4: memref<128x128xf32, #tpu.memory_space<vmem>>, %arg5: memref<1x128xf32, #tpu.memory_space<vmem>>, %arg6: memref<128x128xf32, #tpu.memory_space<vmem>>, %arg7: memref<1x128xf32, #tpu.memory_space<vmem>>, %arg8: memref<128x128xf32, #tpu.memory_space<vmem>>, %arg9: memref<1x128xf32, #tpu.memory_space<vmem>>, %arg10: memref<128x128xf32, #tpu.memory_space<vmem>>, %arg11: memref<1x128xf32, #tpu.memory_space<vmem>>, %arg12: memref<1x128xf32, #tpu.memory_space<vmem>>, %arg13: memref<1x1xf32, #tpu.memory_space<vmem>>, %arg14: memref<256x128xf32, #tpu.memory_space<vmem>>, %arg15: memref<256x128xf32, #tpu.memory_space<vmem>>) attributes {dimension_semantics = [#tpu.dimension_semantics<parallel>], iteration_bounds = array<i64: 2>, scalar_prefetch = 0 : i64, scratch_operands = 0 : i64, tpu.core_type = #tpu.core_type<tc>, window_params = [{transform_indices = @transform_0, window_bounds = array<i64: 256, 5>}, {pipeline_mode = #tpu.pipeline_mode<synchronous>, transform_indices = @transform_1, window_bounds = array<i64: 5, 128>}, {pipeline_mode = #tpu.pipeline_mode<synchronous>, transform_indices = @transform_2, window_bounds = array<i64: 1, 128>}, {pipeline_mode = #tpu.pipeline_mode<synchronous>, transform_indices = @transform_3, window_bounds = array<i64: 128, 128>}, {pipeline_mode = #tpu.pipeline_mode<synchronous>, transform_indices = @transform_4, window_bounds = array<i64: 1, 128>}, {pipeline_mode = #tpu.pipeline_mode<synchronous>, transform_indices = @transform_5, window_bounds = array<i64: 128, 128>}, {pipeline_mode = #tpu.pipeline_mode<synchronous>, transform_indices = @transform_6, window_bounds = array<i64: 1, 128>}, {pipeline_mode = #tpu.pipeline_mode<synchronous>, transform_indices = @transform_7, window_bounds = array<i64: 128, 128>}, {pipeline_mode = #tpu.pipeline_mode<synchronous>, transform_indices = @transform_8, window_bounds = array<i64: 1, 128>}, {pipeline_mode = #tpu.pipeline_mode<synchronous>, transform_indices = @transform_9, window_bounds = array<i64: 128, 128>}, {pipeline_mode = #tpu.pipeline_mode<synchronous>, transform_indices = @transform_10, window_bounds = array<i64: 1, 128>}, {pipeline_mode = #tpu.pipeline_mode<synchronous>, transform_indices = @transform_11, window_bounds = array<i64: 1, 128>}, {pipeline_mode = #tpu.pipeline_mode<synchronous>, transform_indices = @transform_12, window_bounds = array<i64: 1, 1>}, {transform_indices = @transform_13, window_bounds = array<i64: 256, 128>}, {transform_indices = @transform_14, window_bounds = array<i64: 256, 128>}]} {
    %c0 = arith.constant 0 : index
    %c0_0 = arith.constant 0 : index
    %0 = vector.load %arg1[%c0, %c0_0] : memref<256x5xf32, #tpu.memory_space<vmem>>, vector<256x5xf32>
    %c0_1 = arith.constant 0 : index
    %c0_2 = arith.constant 0 : index
    %1 = vector.load %arg2[%c0_1, %c0_2] : memref<5x128xf32, #tpu.memory_space<vmem>>, vector<5x128xf32>
    %cst = arith.constant dense<0.000000e+00> : vector<256x128xf32>
    %2 = tpu.matmul %0, %1, %cst {dimension_numbers = #tpu.dot_dimension_numbers<[1], [0], [0], [1], [0, 0, 1, 1], [], []>} : vector<256x5xf32>, vector<5x128xf32>, vector<256x128xf32> -> vector<256x128xf32>
    %c0_3 = arith.constant 0 : index
    %c0_4 = arith.constant 0 : index
    %3 = vector.load %arg3[%c0_3, %c0_4] : memref<1x128xf32, #tpu.memory_space<vmem>>, vector<1x128xf32>
    %4 = vector.broadcast %3 : vector<1x128xf32> to vector<256x128xf32>
    %5 = arith.addf %2, %4 : vector<256x128xf32>
    %cst_5 = arith.constant 0.000000e+00 : f32
    %6 = vector.broadcast %cst_5 : f32 to vector<256x128xf32>
    %7 = arith.cmpf ogt, %5, %6 : vector<256x128xf32>
    %cst_6 = arith.constant 0.00999999977 : f32
    %8 = vector.broadcast %cst_6 : f32 to vector<256x128xf32>
    %9 = arith.mulf %8, %5 : vector<256x128xf32>
    %10 = arith.select %7, %5, %9 : vector<256x128xi1>, vector<256x128xf32>
    %c0_7 = arith.constant 0 : index
    %c0_8 = arith.constant 0 : index
    %11 = vector.load %arg4[%c0_7, %c0_8] : memref<128x128xf32, #tpu.memory_space<vmem>>, vector<128x128xf32>
    %cst_9 = arith.constant dense<0.000000e+00> : vector<256x128xf32>
    %12 = tpu.matmul %10, %11, %cst_9 {dimension_numbers = #tpu.dot_dimension_numbers<[1], [0], [0], [1], [0, 0, 1, 1], [], []>} : vector<256x128xf32>, vector<128x128xf32>, vector<256x128xf32> -> vector<256x128xf32>
    %c0_10 = arith.constant 0 : index
    %c0_11 = arith.constant 0 : index
    %13 = vector.load %arg5[%c0_10, %c0_11] : memref<1x128xf32, #tpu.memory_space<vmem>>, vector<1x128xf32>
    %14 = vector.broadcast %13 : vector<1x128xf32> to vector<256x128xf32>
    %15 = arith.addf %12, %14 : vector<256x128xf32>
    %cst_12 = arith.constant 0.000000e+00 : f32
    %16 = vector.broadcast %cst_12 : f32 to vector<256x128xf32>
    %17 = arith.cmpf ogt, %15, %16 : vector<256x128xf32>
    %cst_13 = arith.constant 0.00999999977 : f32
    %18 = vector.broadcast %cst_13 : f32 to vector<256x128xf32>
    %19 = arith.mulf %18, %15 : vector<256x128xf32>
    %20 = arith.select %17, %15, %19 : vector<256x128xi1>, vector<256x128xf32>
    %c0_14 = arith.constant 0 : index
    %c0_15 = arith.constant 0 : index
    %21 = vector.load %arg6[%c0_14, %c0_15] : memref<128x128xf32, #tpu.memory_space<vmem>>, vector<128x128xf32>
    %cst_16 = arith.constant dense<0.000000e+00> : vector<256x128xf32>
    %22 = tpu.matmul %20, %21, %cst_16 {dimension_numbers = #tpu.dot_dimension_numbers<[1], [0], [0], [1], [0, 0, 1, 1], [], []>} : vector<256x128xf32>, vector<128x128xf32>, vector<256x128xf32> -> vector<256x128xf32>
    %c0_17 = arith.constant 0 : index
    %c0_18 = arith.constant 0 : index
    %23 = vector.load %arg7[%c0_17, %c0_18] : memref<1x128xf32, #tpu.memory_space<vmem>>, vector<1x128xf32>
    %24 = vector.broadcast %23 : vector<1x128xf32> to vector<256x128xf32>
    %25 = arith.addf %22, %24 : vector<256x128xf32>
    %cst_19 = arith.constant dense<0xFF800000> : vector<256xf32>
    %26 = vector.multi_reduction <maximumf>, %25, %cst_19 [1] : vector<256x128xf32> to vector<256xf32>
    %27 = vector.shape_cast %26 : vector<256xf32> to vector<256x1xf32>
    %28 = vector.broadcast %27 : vector<256x1xf32> to vector<256x128xf32>
    %29 = arith.subf %25, %28 : vector<256x128xf32>
    %30 = math.exp %29 : vector<256x128xf32>
    %cst_20 = arith.constant dense<0.000000e+00> : vector<256xf32>
    %31 = vector.multi_reduction <add>, %30, %cst_20 [1] : vector<256x128xf32> to vector<256xf32>
    %32 = vector.shape_cast %31 : vector<256xf32> to vector<256x1xf32>
    %33 = tpu.reciprocal %32 {approx = true} : vector<256x1xf32> -> vector<256x1xf32>
    %34 = vector.broadcast %33 : vector<256x1xf32> to vector<256x128xf32>
    %35 = arith.mulf %30, %34 : vector<256x128xf32>
    %c0_21 = arith.constant 0 : index
    %c0_22 = arith.constant 0 : index
    %36 = vector.load %arg14[%c0_21, %c0_22] : memref<256x128xf32, #tpu.memory_space<vmem>>, vector<256x128xf32>
    tpu.vector_store %arg14[%c0_21, %c0_22], %35 {strides = array<i32>} : memref<256x128xf32, #tpu.memory_space<vmem>>, vector<256x128xf32>,
    %c0_23 = arith.constant 0 : index
    %c0_24 = arith.constant 0 : index
    %37 = vector.load %arg8[%c0_23, %c0_24] : memref<128x128xf32, #tpu.memory_space<vmem>>, vector<128x128xf32>
    %cst_25 = arith.constant dense<0.000000e+00> : vector<256x128xf32>
    %38 = tpu.matmul %35, %37, %cst_25 {dimension_numbers = #tpu.dot_dimension_numbers<[1], [0], [0], [1], [0, 0, 1, 1], [], []>} : vector<256x128xf32>, vector<128x128xf32>, vector<256x128xf32> -> vector<256x128xf32>
    %c0_26 = arith.constant 0 : index
    %c0_27 = arith.constant 0 : index
    %39 = vector.load %arg9[%c0_26, %c0_27] : memref<1x128xf32, #tpu.memory_space<vmem>>, vector<1x128xf32>
    %40 = vector.broadcast %39 : vector<1x128xf32> to vector<256x128xf32>
    %41 = arith.addf %38, %40 : vector<256x128xf32>
    %cst_28 = arith.constant 0.000000e+00 : f32
    %42 = vector.broadcast %cst_28 : f32 to vector<256x128xf32>
    %43 = arith.cmpf ogt, %41, %42 : vector<256x128xf32>
    %cst_29 = arith.constant 0.00999999977 : f32
    %44 = vector.broadcast %cst_29 : f32 to vector<256x128xf32>
    %45 = arith.mulf %44, %41 : vector<256x128xf32>
    %46 = arith.select %43, %41, %45 : vector<256x128xi1>, vector<256x128xf32>
    %c0_30 = arith.constant 0 : index
    %c0_31 = arith.constant 0 : index
    %47 = vector.load %arg10[%c0_30, %c0_31] : memref<128x128xf32, #tpu.memory_space<vmem>>, vector<128x128xf32>
    %cst_32 = arith.constant dense<0.000000e+00> : vector<256x128xf32>
    %48 = tpu.matmul %46, %47, %cst_32 {dimension_numbers = #tpu.dot_dimension_numbers<[1], [0], [0], [1], [0, 0, 1, 1], [], []>} : vector<256x128xf32>, vector<128x128xf32>, vector<256x128xf32> -> vector<256x128xf32>
    %c0_33 = arith.constant 0 : index
    %c0_34 = arith.constant 0 : index
    %49 = vector.load %arg11[%c0_33, %c0_34] : memref<1x128xf32, #tpu.memory_space<vmem>>, vector<1x128xf32>
    %50 = vector.broadcast %49 : vector<1x128xf32> to vector<256x128xf32>
    %51 = arith.addf %48, %50 : vector<256x128xf32>
    %cst_35 = arith.constant 0.000000e+00 : f32
    %52 = vector.broadcast %cst_35 : f32 to vector<256x128xf32>
    %53 = arith.cmpf ogt, %51, %52 : vector<256x128xf32>
    %cst_36 = arith.constant 0.00999999977 : f32
    %54 = vector.broadcast %cst_36 : f32 to vector<256x128xf32>
    %55 = arith.mulf %54, %51 : vector<256x128xf32>
    %56 = arith.select %53, %51, %55 : vector<256x128xi1>, vector<256x128xf32>
    %c0_37 = arith.constant 0 : index
    %c0_38 = arith.constant 0 : index
    %57 = vector.load %arg12[%c0_37, %c0_38] : memref<1x128xf32, #tpu.memory_space<vmem>>, vector<1x128xf32>
    %58 = vector.broadcast %57 : vector<1x128xf32> to vector<256x128xf32>
    %59 = arith.mulf %56, %58 : vector<256x128xf32>
    %cst_39 = arith.constant dense<0.000000e+00> : vector<256xf32>
    %60 = vector.multi_reduction <add>, %59, %cst_39 [1] : vector<256x128xf32> to vector<256xf32>
    %61 = vector.shape_cast %60 : vector<256xf32> to vector<256x1xf32>
    %c0_40 = arith.constant 0 : index
    %c0_41 = arith.constant 0 : index
    %62 = vector.load %arg13[%c0_40, %c0_41] : memref<1x1xf32, #tpu.memory_space<vmem>>, vector<1x1xf32>
    %63 = vector.broadcast %62 : vector<1x1xf32> to vector<256x1xf32>
    %64 = arith.addf %61, %63 : vector<256x1xf32>
    %65 = vector.shape_cast %64 : vector<256x1xf32> to vector<256x1xf32>
    %66 = vector.broadcast %65 : vector<256x1xf32> to vector<256x128xf32>
    %c0_42 = arith.constant 0 : index
    %c0_43 = arith.constant 0 : index
    %67 = vector.load %arg15[%c0_42, %c0_43] : memref<256x128xf32, #tpu.memory_space<vmem>>, vector<256x128xf32>
    tpu.vector_store %arg15[%c0_42, %c0_43], %66 {strides = array<i32>} : memref<256x128xf32, #tpu.memory_space<vmem>>, vector<256x128xf32>,
    return
  }
  func.func @transform_0(%arg0: i32) -> (i32, i32) {
    %c0_i32 = arith.constant 0 : i32
    %c0_i32_0 = arith.constant 0 : i32
    return %arg0, %c0_i32 : i32, i32
  }
  func.func @transform_1(%arg0: i32) -> (i32, i32) {
    %c0_i32 = arith.constant 0 : i32
    %c0_i32_0 = arith.constant 0 : i32
    %c0_i32_1 = arith.constant 0 : i32
    return %c0_i32, %c0_i32_0 : i32, i32
  }
  func.func @transform_2(%arg0: i32) -> (i32, i32) {
    %c0_i32 = arith.constant 0 : i32
    %c0_i32_0 = arith.constant 0 : i32
    %c0_i32_1 = arith.constant 0 : i32
    return %c0_i32, %c0_i32_0 : i32, i32
  }
  func.func @transform_3(%arg0: i32) -> (i32, i32) {
    %c0_i32 = arith.constant 0 : i32
    %c0_i32_0 = arith.constant 0 : i32
    %c0_i32_1 = arith.constant 0 : i32
    return %c0_i32, %c0_i32_0 : i32, i32
  }
  func.func @transform_4(%arg0: i32) -> (i32, i32) {
    %c0_i32 = arith.constant 0 : i32
    %c0_i32_0 = arith.constant 0 : i32
    %c0_i32_1 = arith.constant 0 : i32
    return %c0_i32, %c0_i32_0 : i32, i32
  }
  func.func @transform_5(%arg0: i32) -> (i32, i32) {
    %c0_i32 = arith.constant 0 : i32
    %c0_i32_0 = arith.constant 0 : i32
    %c0_i32_1 = arith.constant 0 : i32
    return %c0_i32, %c0_i32_0 : i32, i32
  }
  func.func @transform_6(%arg0: i32) -> (i32, i32) {
    %c0_i32 = arith.constant 0 : i32
    %c0_i32_0 = arith.constant 0 : i32
    %c0_i32_1 = arith.constant 0 : i32
    return %c0_i32, %c0_i32_0 : i32, i32
  }
  func.func @transform_7(%arg0: i32) -> (i32, i32) {
    %c0_i32 = arith.constant 0 : i32
    %c0_i32_0 = arith.constant 0 : i32
    %c0_i32_1 = arith.constant 0 : i32
    return %c0_i32, %c0_i32_0 : i32, i32
  }
  func.func @transform_8(%arg0: i32) -> (i32, i32) {
    %c0_i32 = arith.constant 0 : i32
    %c0_i32_0 = arith.constant 0 : i32
    %c0_i32_1 = arith.constant 0 : i32
    return %c0_i32, %c0_i32_0 : i32, i32
  }
  func.func @transform_9(%arg0: i32) -> (i32, i32) {
    %c0_i32 = arith.constant 0 : i32
    %c0_i32_0 = arith.constant 0 : i32
    %c0_i32_1 = arith.constant 0 : i32
    return %c0_i32, %c0_i32_0 : i32, i32
  }
  func.func @transform_10(%arg0: i32) -> (i32, i32) {
    %c0_i32 = arith.constant 0 : i32
    %c0_i32_0 = arith.constant 0 : i32
    %c0_i32_1 = arith.constant 0 : i32
    return %c0_i32, %c0_i32_0 : i32, i32
  }
  func.func @transform_11(%arg0: i32) -> (i32, i32) {
    %c0_i32 = arith.constant 0 : i32
    %c0_i32_0 = arith.constant 0 : i32
    %c0_i32_1 = arith.constant 0 : i32
    return %c0_i32, %c0_i32_0 : i32, i32
  }
  func.func @transform_12(%arg0: i32) -> (i32, i32) {
    %c0_i32 = arith.constant 0 : i32
    %c0_i32_0 = arith.constant 0 : i32
    %c0_i32_1 = arith.constant 0 : i32
    return %c0_i32, %c0_i32_0 : i32, i32
  }
  func.func @transform_13(%arg0: i32) -> (i32, i32) {
    %c0_i32 = arith.constant 0 : i32
    %c0_i32_0 = arith.constant 0 : i32
    return %arg0, %c0_i32 : i32, i32
  }
  func.func @transform_14(%arg0: i32) -> (i32, i32) {
    %c0_i32 = arith.constant 0 : i32
    %c0_i32_0 = arith.constant 0 : i32
    return %arg0, %c0_i32 : i32, i32
  }
}

</mosaic_0001>

<llo_original>
// kernel: tpu_custom_call.1
$region0: #{tpu_custom_call.1}
  #allocation0 [shape = 'u32[]', space=smem, size = 0x4, offset = 0x4, fixed_abs, tag = 'smem constant byte address 0x4 - core index']
  #allocation1 [shape = 'u32[144,128]{1,0:T(1,128)}', space=vmem, size = 0x12000, scoped, tag = 'internal scratch']
  #allocation2 [shape = 'f32[1,1]{1,0:T(1,128)S(1)}', space=vmem, size = 0x200, scoped, tag = 'scoped memory for tpu_custom_call.1']
  %s0 = inlined_call_operand.vmem [shape: f32[512,5], index: 0, kind: input, shape index: {}]
  %s1 = inlined_call_operand.vmem [shape: f32[5,128], index: 1, kind: input, shape index: {}]
  %s2 = inlined_call_operand.vmem [shape: f32[1,128], index: 2, kind: input, shape index: {}]
  %s3 = inlined_call_operand.vmem [shape: f32[128,128], index: 3, kind: input, shape index: {}]
  %s4 = inlined_call_operand.vmem [shape: f32[1,128], index: 4, kind: input, shape index: {}]
  %s5 = inlined_call_operand.vmem [shape: f32[128,128], index: 5, kind: input, shape index: {}]
  %s6 = inlined_call_operand.vmem [shape: f32[1,128], index: 6, kind: input, shape index: {}]
  %s7 = inlined_call_operand.vmem [shape: f32[128,128], index: 7, kind: input, shape index: {}]
  %s8 = inlined_call_operand.vmem [shape: f32[1,128], index: 8, kind: input, shape index: {}]
  %s9 = inlined_call_operand.vmem [shape: f32[128,128], index: 9, kind: input, shape index: {}]
  %s10 = inlined_call_operand.vmem [shape: f32[1,128], index: 10, kind: input, shape index: {}]
  %s11 = inlined_call_operand.vmem [shape: f32[1,128], index: 11, kind: input, shape index: {}]
  %s12 = inlined_call_operand.<no memory space> [shape: f32[1,1], index: 12, kind: input, shape index: {}]
  %s13 = inlined_call_operand.hbm [shape: f32[512,128], index: 13, kind: output, shape index: {0}]
  %s14 = inlined_call_operand.hbm [shape: f32[512,128], index: 14, kind: output, shape index: {1}]
  %15 = xla_tuple %s13, %s14
  %s16 = sld [smem:[#allocation0]]
  $region93: #{tpu_custom_call.1} parent=0
    _
  %s18 = ssub.s32 1, %s16
  %s19 = scalar_select 0, %s18, %s16
  %v20 = vstv %s12
  %21 = vst [vmem:[#allocation2] sm:$0x1] %v20
  $region1: #{tpu_custom_call.1} parent=0
    #allocation3 [shape = 'u8[262144]{0}', space=vmem, size = 0x40000, scoped, tag = 'output window, operand 0']
    #allocation4 [shape = 's32[2]{0}', space=sflag, size = 0x8, scoped, tag = 'scoped memory for tpu_custom_call.1']
    #allocation5 [shape = 'u8[262144]{0}', space=vmem, size = 0x40000, scoped, tag = 'output window, operand 1']
    #allocation6 [shape = 's32[2]{0}', space=sflag, size = 0x8, scoped, tag = 'scoped memory for tpu_custom_call.1']
    %22 = vsyncpa [#allocation4], 0
    %s23 = scalar_lea.sflag [#allocation4], 1
    %24 = vsyncpa %s23, 0
    %25 = vsyncpa [#allocation6], 0
    %s26 = scalar_lea.sflag [#allocation6], 1
    %27 = vsyncpa %s26, 0
    loop: start=0, step=1, limit=4
    $region2: #{tpu_custom_call.1} parent=1 // loop_pre_header
      _
    $region3: #{tpu_custom_call.1} parent=1 // loop_header
      %s29 = sphi 0, %s33
      %p30 = scmp.ge.s32.totalorder %s29, 4
      %s39 = sphi 0, %s41
      %s42 = sphi 0, %s39
      %s43 = sphi 0, %s42
      %s59 = sphi 0, %s43
      %s63 = sphi 0, %s63
      %s65 = sphi 0, %s63
      %s66 = sphi 0, %s65
      %s80 = sphi 0, %s66
      %s84 = sphi 0, %s84
      %s86 = sphi 0, %s84
      %s87 = sphi 0, %s86
      %s101 = sphi 0, %s87
      %s105 = sphi 0, %s105
      %s107 = sphi 0, %s105
      %s108 = sphi 0, %s107
      %s122 = sphi 0, %s108
      %s126 = sphi 0, %s126
      %s128 = sphi 0, %s126
      %s129 = sphi 0, %s128
      %s143 = sphi 0, %s129
      %s147 = sphi 0, %s147
      %s149 = sphi 0, %s147
      %s150 = sphi 0, %s149
      %s164 = sphi 0, %s150
      %s168 = sphi 0, %s168
      %s170 = sphi 0, %s168
      %s171 = sphi 0, %s170
      %s185 = sphi 0, %s171
      %s189 = sphi 0, %s189
      %s191 = sphi 0, %s189
      %s192 = sphi 0, %s191
      %s206 = sphi 0, %s192
      %s210 = sphi 0, %s210
      %s212 = sphi 0, %s210
      %s213 = sphi 0, %s212
      %s227 = sphi 0, %s213
      %s231 = sphi 0, %s231
      %s233 = sphi 0, %s231
      %s234 = sphi 0, %s233
      %s248 = sphi 0, %s234
      %s252 = sphi 0, %s252
      %s254 = sphi 0, %s252
      %s255 = sphi 0, %s254
      %s269 = sphi 0, %s255
      %s273 = sphi 0, %s273
      %s275 = sphi 0, %s273
      %s276 = sphi 0, %s275
      %s290 = sphi 0, %s276
      %s294 = sphi 0, %s294
      %s296 = sphi 0, %s294
      %s297 = sphi 0, %s296
      %s311 = sphi 0, %s297
      %s317 = sphi 0, %s319
      %s320 = sphi 0, %s317
      %s321 = sphi 0, %s320
      %s337 = sphi 0, %s321
      %s343 = sphi 0, %s345
      %s346 = sphi 0, %s343
      %s347 = sphi 0, %s346
      %s363 = sphi 0, %s347
    $region4: #{tpu_custom_call.1} parent=1 // loop_header_branch
      %32 = sbr.rel (%p30) target = $region8
    $region5: #{tpu_custom_call.1} parent=1 // loop_body
      %s34 = ssub.s32 %s29, 1
      %s35 = ssub.s32 %s29, 2
      %s36 = sadd.s32 %s29, 1
      %s37 = ssub.s32 %s29, %s36
      %p38 = scmp.eq.s32.totalorder %s37, 0
      %s40 = sadd.s32 %s39, 1
      %s41 = scalar_select %p38, %s39, %s40
      %p44 = pneg %p38
      %p45 = scmp.eq.s32.totalorder %s29, 1
      %p46 = por %p44, %p45
      %p47 = scmp.ne.s32.totalorder %s39, %s42
      %p48 = scmp.eq.s32.totalorder %s29, 0
      %p49 = por %p47, %p48
      %p50 = scmp.ne.s32.totalorder %s39, %s42
      %p51 = scmp.eq.s32.totalorder %s34, 1
      %p52 = por %p50, %p51
      %p53 = scmp.ne.s32.totalorder %s42, %s43
      %p54 = scmp.eq.s32.totalorder %s34, 0
      %p55 = por %p53, %p54
      %p56 = scmp.ne.s32.totalorder %s42, %s43
      %p57 = scmp.eq.s32.totalorder %s35, 1
      %p58 = por %p56, %p57
      %p60 = scmp.ne.s32.totalorder %s43, %s59
      %p61 = scmp.eq.s32.totalorder %s35, 0
      %p62 = por %p60, %p61
      %s64 = sadd.s32 %s63, 1
      %p67 = scmp.eq.s32.totalorder %s29, 1
      %p68 = scmp.ne.s32.totalorder %s63, %s65
      %p69 = scmp.eq.s32.totalorder %s29, 0
      %p70 = por %p68, %p69
      %p71 = scmp.ne.s32.totalorder %s63, %s65
      %p72 = scmp.eq.s32.totalorder %s34, 1
      %p73 = por %p71, %p72
      %p74 = scmp.ne.s32.totalorder %s65, %s66
      %p75 = scmp.eq.s32.totalorder %s34, 0
      %p76 = por %p74, %p75
      %p77 = scmp.ne.s32.totalorder %s65, %s66
      %p78 = scmp.eq.s32.totalorder %s35, 1
      %p79 = por %p77, %p78
      %p81 = scmp.ne.s32.totalorder %s66, %s80
      %p82 = scmp.eq.s32.totalorder %s35, 0
      %p83 = por %p81, %p82
      %s85 = sadd.s32 %s84, 1
      %p88 = scmp.eq.s32.totalorder %s29, 1
      %p89 = scmp.ne.s32.totalorder %s84, %s86
      %p90 = scmp.eq.s32.totalorder %s29, 0
      %p91 = por %p89, %p90
      %p92 = scmp.ne.s32.totalorder %s84, %s86
      %p93 = scmp.eq.s32.totalorder %s34, 1
      %p94 = por %p92, %p93
      %p95 = scmp.ne.s32.totalorder %s86, %s87
      %p96 = scmp.eq.s32.totalorder %s34, 0
      %p97 = por %p95, %p96
      %p98 = scmp.ne.s32.totalorder %s86, %s87
      %p99 = scmp.eq.s32.totalorder %s35, 1
      %p100 = por %p98, %p99
      %p102 = scmp.ne.s32.totalorder %s87, %s101
      %p103 = scmp.eq.s32.totalorder %s35, 0
      %p104 = por %p102, %p103
      %s106 = sadd.s32 %s105, 1
      %p109 = scmp.eq.s32.totalorder %s29, 1
      %p110 = scmp.ne.s32.totalorder %s105, %s107
      %p111 = scmp.eq.s32.totalorder %s29, 0
      %p112 = por %p110, %p111
      %p113 = scmp.ne.s32.totalorder %s105, %s107
      %p114 = scmp.eq.s32.totalorder %s34, 1
      %p115 = por %p113, %p114
      %p116 = scmp.ne.s32.totalorder %s107, %s108
      %p117 = scmp.eq.s32.totalorder %s34, 0
      %p118 = por %p116, %p117
      %p119 = scmp.ne.s32.totalorder %s107, %s108
      %p120 = scmp.eq.s32.totalorder %s35, 1
      %p121 = por %p119, %p120
      %p123 = scmp.ne.s32.totalorder %s108, %s122
      %p124 = scmp.eq.s32.totalorder %s35, 0
      %p125 = por %p123, %p124
      %s127 = sadd.s32 %s126, 1
      %p130 = scmp.eq.s32.totalorder %s29, 1
      %p131 = scmp.ne.s32.totalorder %s126, %s128
      %p132 = scmp.eq.s32.totalorder %s29, 0
      %p133 = por %p131, %p132
      %p134 = scmp.ne.s32.totalorder %s126, %s128
      %p135 = scmp.eq.s32.totalorder %s34, 1
      %p136 = por %p134, %p135
      %p137 = scmp.ne.s32.totalorder %s128, %s129
      %p138 = scmp.eq.s32.totalorder %s34, 0
      %p139 = por %p137, %p138
      %p140 = scmp.ne.s32.totalorder %s128, %s129
      %p141 = scmp.eq.s32.totalorder %s35, 1
      %p142 = por %p140, %p141
      %p144 = scmp.ne.s32.totalorder %s129, %s143
      %p145 = scmp.eq.s32.totalorder %s35, 0
      %p146 = por %p144, %p145
      %s148 = sadd.s32 %s147, 1
      %p151 = scmp.eq.s32.totalorder %s29, 1
      %p152 = scmp.ne.s32.totalorder %s147, %s149
      %p153 = scmp.eq.s32.totalorder %s29, 0
      %p154 = por %p152, %p153
      %p155 = scmp.ne.s32.totalorder %s147, %s149
      %p156 = scmp.eq.s32.totalorder %s34, 1
      %p157 = por %p155, %p156
      %p158 = scmp.ne.s32.totalorder %s149, %s150
      %p159 = scmp.eq.s32.totalorder %s34, 0
      %p160 = por %p158, %p159
      %p161 = scmp.ne.s32.totalorder %s149, %s150
      %p162 = scmp.eq.s32.totalorder %s35, 1
      %p163 = por %p161, %p162
      %p165 = scmp.ne.s32.totalorder %s150, %s164
      %p166 = scmp.eq.s32.totalorder %s35, 0
      %p167 = por %p165, %p166
      %s169 = sadd.s32 %s168, 1
      %p172 = scmp.eq.s32.totalorder %s29, 1
      %p173 = scmp.ne.s32.totalorder %s168, %s170
      %p174 = scmp.eq.s32.totalorder %s29, 0
      %p175 = por %p173, %p174
      %p176 = scmp.ne.s32.totalorder %s168, %s170
      %p177 = scmp.eq.s32.totalorder %s34, 1
      %p178 = por %p176, %p177
      %p179 = scmp.ne.s32.totalorder %s170, %s171
      %p180 = scmp.eq.s32.totalorder %s34, 0
      %p181 = por %p179, %p180
      %p182 = scmp.ne.s32.totalorder %s170, %s171
      %p183 = scmp.eq.s32.totalorder %s35, 1
      %p184 = por %p182, %p183
      %p186 = scmp.ne.s32.totalorder %s171, %s185
      %p187 = scmp.eq.s32.totalorder %s35, 0
      %p188 = por %p186, %p187
      %s190 = sadd.s32 %s189, 1
      %p193 = scmp.eq.s32.totalorder %s29, 1
      %p194 = scmp.ne.s32.totalorder %s189, %s191
      %p195 = scmp.eq.s32.totalorder %s29, 0
      %p196 = por %p194, %p195
      %p197 = scmp.ne.s32.totalorder %s189, %s191
      %p198 = scmp.eq.s32.totalorder %s34, 1
      %p199 = por %p197, %p198
      %p200 = scmp.ne.s32.totalorder %s191, %s192
      %p201 = scmp.eq.s32.totalorder %s34, 0
      %p202 = por %p200, %p201
      %p203 = scmp.ne.s32.totalorder %s191, %s192
      %p204 = scmp.eq.s32.totalorder %s35, 1
      %p205 = por %p203, %p204
      %p207 = scmp.ne.s32.totalorder %s192, %s206
      %p208 = scmp.eq.s32.totalorder %s35, 0
      %p209 = por %p207, %p208
      %s211 = sadd.s32 %s210, 1
      %p214 = scmp.eq.s32.totalorder %s29, 1
      %p215 = scmp.ne.s32.totalorder %s210, %s212
      %p216 = scmp.eq.s32.totalorder %s29, 0
      %p217 = por %p215, %p216
      %p218 = scmp.ne.s32.totalorder %s210, %s212
      %p219 = scmp.eq.s32.totalorder %s34, 1
      %p220 = por %p218, %p219
      %p221 = scmp.ne.s32.totalorder %s212, %s213
      %p222 = scmp.eq.s32.totalorder %s34, 0
      %p223 = por %p221, %p222
      %p224 = scmp.ne.s32.totalorder %s212, %s213
      %p225 = scmp.eq.s32.totalorder %s35, 1
      %p226 = por %p224, %p225
      %p228 = scmp.ne.s32.totalorder %s213, %s227
      %p229 = scmp.eq.s32.totalorder %s35, 0
      %p230 = por %p228, %p229
      %s232 = sadd.s32 %s231, 1
      %p235 = scmp.eq.s32.totalorder %s29, 1
      %p236 = scmp.ne.s32.totalorder %s231, %s233
      %p237 = scmp.eq.s32.totalorder %s29, 0
      %p238 = por %p236, %p237
      %p239 = scmp.ne.s32.totalorder %s231, %s233
      %p240 = scmp.eq.s32.totalorder %s34, 1
      %p241 = por %p239, %p240
      %p242 = scmp.ne.s32.totalorder %s233, %s234
      %p243 = scmp.eq.s32.totalorder %s34, 0
      %p244 = por %p242, %p243
      %p245 = scmp.ne.s32.totalorder %s233, %s234
      %p246 = scmp.eq.s32.totalorder %s35, 1
      %p247 = por %p245, %p246
      %p249 = scmp.ne.s32.totalorder %s234, %s248
      %p250 = scmp.eq.s32.totalorder %s35, 0
      %p251 = por %p249, %p250
      %s253 = sadd.s32 %s252, 1
      %p256 = scmp.eq.s32.totalorder %s29, 1
      %p257 = scmp.ne.s32.totalorder %s252, %s254
      %p258 = scmp.eq.s32.totalorder %s29, 0
      %p259 = por %p257, %p258
      %p260 = scmp.ne.s32.totalorder %s252, %s254
      %p261 = scmp.eq.s32.totalorder %s34, 1
      %p262 = por %p260, %p261
      %p263 = scmp.ne.s32.totalorder %s254, %s255
      %p264 = scmp.eq.s32.totalorder %s34, 0
      %p265 = por %p263, %p264
      %p266 = scmp.ne.s32.totalorder %s254, %s255
      %p267 = scmp.eq.s32.totalorder %s35, 1
      %p268 = por %p266, %p267
      %p270 = scmp.ne.s32.totalorder %s255, %s269
      %p271 = scmp.eq.s32.totalorder %s35, 0
      %p272 = por %p270, %p271
      %s274 = sadd.s32 %s273, 1
      %p277 = scmp.eq.s32.totalorder %s29, 1
      %p278 = scmp.ne.s32.totalorder %s273, %s275
      %p279 = scmp.eq.s32.totalorder %s29, 0
      %p280 = por %p278, %p279
      %p281 = scmp.ne.s32.totalorder %s273, %s275
      %p282 = scmp.eq.s32.totalorder %s34, 1
      %p283 = por %p281, %p282
      %p284 = scmp.ne.s32.totalorder %s275, %s276
      %p285 = scmp.eq.s32.totalorder %s34, 0
      %p286 = por %p284, %p285
      %p287 = scmp.ne.s32.totalorder %s275, %s276
      %p288 = scmp.eq.s32.totalorder %s35, 1
      %p289 = por %p287, %p288
      %p291 = scmp.ne.s32.totalorder %s276, %s290
      %p292 = scmp.eq.s32.totalorder %s35, 0
      %p293 = por %p291, %p292
      %s295 = sadd.s32 %s294, 1
      %p298 = scmp.eq.s32.totalorder %s29, 1
      %p299 = scmp.ne.s32.totalorder %s294, %s296
      %p300 = scmp.eq.s32.totalorder %s29, 0
      %p301 = por %p299, %p300
      %p302 = scmp.ne.s32.totalorder %s294, %s296
      %p303 = scmp.eq.s32.totalorder %s34, 1
      %p304 = por %p302, %p303
      %p305 = scmp.ne.s32.totalorder %s296, %s297
      %p306 = scmp.eq.s32.totalorder %s34, 0
      %p307 = por %p305, %p306
      %p308 = scmp.ne.s32.totalorder %s296, %s297
      %p309 = scmp.eq.s32.totalorder %s35, 1
      %p310 = por %p308, %p309
      %p312 = scmp.ne.s32.totalorder %s297, %s311
      %p313 = scmp.eq.s32.totalorder %s35, 0
      %p314 = por %p312, %p313
      %s315 = ssub.s32 %s29, %s36
      %p316 = scmp.eq.s32.totalorder %s315, 0
      %s318 = sadd.s32 %s317, 1
      %s319 = scalar_select %p316, %s317, %s318
      %p322 = pneg %p316
      %p323 = scmp.eq.s32.totalorder %s29, 1
      %p324 = por %p322, %p323
      %p325 = scmp.ne.s32.totalorder %s317, %s320
      %p326 = scmp.eq.s32.totalorder %s29, 0
      %p327 = por %p325, %p326
      %p328 = scmp.ne.s32.totalorder %s317, %s320
      %p329 = scmp.eq.s32.totalorder %s34, 1
      %p330 = por %p328, %p329
      %p331 = scmp.ne.s32.totalorder %s320, %s321
      %p332 = scmp.eq.s32.totalorder %s34, 0
      %p333 = por %p331, %p332
      %p334 = scmp.ne.s32.totalorder %s320, %s321
      %p335 = scmp.eq.s32.totalorder %s35, 1
      %p336 = por %p334, %p335
      %p338 = scmp.ne.s32.totalorder %s321, %s337
      %p339 = scmp.eq.s32.totalorder %s35, 0
      %p340 = por %p338, %p339
      %s341 = ssub.s32 %s29, %s36
      %p342 = scmp.eq.s32.totalorder %s341, 0
      %s344 = sadd.s32 %s343, 1
      %s345 = scalar_select %p342, %s343, %s344
      %p348 = pneg %p342
      %p349 = scmp.eq.s32.totalorder %s29, 1
      %p350 = por %p348, %p349
      %p351 = scmp.ne.s32.totalorder %s343, %s346
      %p352 = scmp.eq.s32.totalorder %s29, 0
      %p353 = por %p351, %p352
      %p354 = scmp.ne.s32.totalorder %s343, %s346
      %p355 = scmp.eq.s32.totalorder %s34, 1
      %p356 = por %p354, %p355
      %p357 = scmp.ne.s32.totalorder %s346, %s347
      %p358 = scmp.eq.s32.totalorder %s34, 0
      %p359 = por %p357, %p358
      %p360 = scmp.ne.s32.totalorder %s346, %s347
      %p361 = scmp.eq.s32.totalorder %s35, 1
      %p362 = por %p360, %p361
      %p364 = scmp.ne.s32.totalorder %s347, %s363
      %p365 = scmp.eq.s32.totalorder %s35, 0
      %p366 = por %p364, %p365
      %p367 = scmp.le.s32.totalorder 1, %s29
      %p368 = scmp.lt.s32.totalorder %s29, 3
      %p369 = pnand %p367, %p368
      %p370 = pneg %p369
      // Predicated region
      $region9: #{tpu_custom_call.1} parent=5 // pred_check
        _
      $region10: #{tpu_custom_call.1} parent=5 // pred_check_branch
        %372 = sbr.rel (%p369) target = $region12
      $region11: #{tpu_custom_call.1} parent=5 // pred_region
        %s373 = ssub.s32 %s29, 1
        // Predicated region
        $region13: #{tpu_custom_call.1} parent=11 // pred_check
          %p374 = pneg %p76
        $region14: #{tpu_custom_call.1} parent=11 // pred_check_branch
          %376 = sbr.rel (%p374) target = $region16
        $region15: #{tpu_custom_call.1} parent=11 // pred_region
          _
        $region16: #{tpu_custom_call.1} parent=11 // pred_fallthru
          _
        // Predicated region
        $region17: #{tpu_custom_call.1} parent=11 // pred_check
          %p377 = pneg %p97
        $region18: #{tpu_custom_call.1} parent=11 // pred_check_branch
          %379 = sbr.rel (%p377) target = $region20
        $region19: #{tpu_custom_call.1} parent=11 // pred_region
          _
        $region20: #{tpu_custom_call.1} parent=11 // pred_fallthru
          _
        // Predicated region
        $region21: #{tpu_custom_call.1} parent=11 // pred_check
          %p380 = pneg %p118
        $region22: #{tpu_custom_call.1} parent=11 // pred_check_branch
          %382 = sbr.rel (%p380) target = $region24
        $region23: #{tpu_custom_call.1} parent=11 // pred_region
          _
        $region24: #{tpu_custom_call.1} parent=11 // pred_fallthru
          _
        // Predicated region
        $region25: #{tpu_custom_call.1} parent=11 // pred_check
          %p383 = pneg %p139
        $region26: #{tpu_custom_call.1} parent=11 // pred_check_branch
          %385 = sbr.rel (%p383) target = $region28
        $region27: #{tpu_custom_call.1} parent=11 // pred_region
          _
        $region28: #{tpu_custom_call.1} parent=11 // pred_fallthru
          _
        // Predicated region
        $region29: #{tpu_custom_call.1} parent=11 // pred_check
          %p386 = pneg %p160
        $region30: #{tpu_custom_call.1} parent=11 // pred_check_branch
          %388 = sbr.rel (%p386) target = $region32
        $region31: #{tpu_custom_call.1} parent=11 // pred_region
          _
        $region32: #{tpu_custom_call.1} parent=11 // pred_fallthru
          _
        // Predicated region
        $region33: #{tpu_custom_call.1} parent=11 // pred_check
          %p389 = pneg %p181
        $region34: #{tpu_custom_call.1} parent=11 // pred_check_branch
          %391 = sbr.rel (%p389) target = $region36
        $region35: #{tpu_custom_call.1} parent=11 // pred_region
          _
        $region36: #{tpu_custom_call.1} parent=11 // pred_fallthru
          _
        // Predicated region
        $region37: #{tpu_custom_call.1} parent=11 // pred_check
          %p392 = pneg %p202
        $region38: #{tpu_custom_call.1} parent=11 // pred_check_branch
          %394 = sbr.rel (%p392) target = $region40
        $region39: #{tpu_custom_call.1} parent=11 // pred_region
          _
        $region40: #{tpu_custom_call.1} parent=11 // pred_fallthru
          _
        // Predicated region
        $region41: #{tpu_custom_call.1} parent=11 // pred_check
          %p395 = pneg %p223
        $region42: #{tpu_custom_call.1} parent=11 // pred_check_branch
          %397 = sbr.rel (%p395) target = $region44
        $region43: #{tpu_custom_call.1} parent=11 // pred_region
          _
        $region44: #{tpu_custom_call.1} parent=11 // pred_fallthru
          _
        // Predicated region
        $region45: #{tpu_custom_call.1} parent=11 // pred_check
          %p398 = pneg %p244
        $region46: #{tpu_custom_call.1} parent=11 // pred_check_branch
          %400 = sbr.rel (%p398) target = $region48
        $region47: #{tpu_custom_call.1} parent=11 // pred_region
          _
        $region48: #{tpu_custom_call.1} parent=11 // pred_fallthru
          _
        // Predicated region
        $region49: #{tpu_custom_call.1} parent=11 // pred_check
          %p401 = pneg %p265
        $region50: #{tpu_custom_call.1} parent=11 // pred_check_branch
          %403 = sbr.rel (%p401) target = $region52
        $region51: #{tpu_custom_call.1} parent=11 // pred_region
          _
        $region52: #{tpu_custom_call.1} parent=11 // pred_fallthru
          _
        // Predicated region
        $region53: #{tpu_custom_call.1} parent=11 // pred_check
          %p404 = pneg %p286
        $region54: #{tpu_custom_call.1} parent=11 // pred_check_branch
          %406 = sbr.rel (%p404) target = $region56
        $region55: #{tpu_custom_call.1} parent=11 // pred_region
          _
        $region56: #{tpu_custom_call.1} parent=11 // pred_fallthru
          _
        // Predicated region
        $region57: #{tpu_custom_call.1} parent=11 // pred_check
          %p407 = pneg %p307
        $region58: #{tpu_custom_call.1} parent=11 // pred_check_branch
          %409 = sbr.rel (%p407) target = $region60
        $region59: #{tpu_custom_call.1} parent=11 // pred_region
          _
        $region60: #{tpu_custom_call.1} parent=11 // pred_fallthru
          _
      $region12: #{tpu_custom_call.1} parent=5 // pred_fallthru
        _
      %p410 = scmp.lt.s32.totalorder %s29, 2
      // Predicated region
      $region61: #{tpu_custom_call.1} parent=5 // pred_check
        %p411 = pneg %p410
      $region62: #{tpu_custom_call.1} parent=5 // pred_check_branch
        %413 = sbr.rel (%p411) target = $region64
      $region63: #{tpu_custom_call.1} parent=5 // pred_region
        // Predicated region
        $region65: #{tpu_custom_call.1} parent=63 // pred_check
          %p414 = pneg %p49
        $region66: #{tpu_custom_call.1} parent=63 // pred_check_branch
          %416 = sbr.rel (%p414) target = $region68
        $region67: #{tpu_custom_call.1} parent=63 // pred_region
          %s417 = smul.u32 32, %s29
          %p418 = scmp.lt.s32.totalorder %s417, 63
          %s419 = scalar_select %p418, %s417, 63
          %s420 = smul.addr %s419, 8
          %s421 = scalar_lea.vmem %s0, %s420
          %s422 = smul.u32 32, %s29
        $region68: #{tpu_custom_call.1} parent=63 // pred_fallthru
          _
      $region64: #{tpu_custom_call.1} parent=5 // pred_fallthru
        _
      %p423 = scmp.le.s32.totalorder 1, %s29
      %p424 = scmp.lt.s32.totalorder %s29, 3
      %p425 = pnand %p423, %p424
      %p426 = pneg %p425
      // Predicated region
      $region69: #{tpu_custom_call.1} parent=5 // pred_check
        _
      $region70: #{tpu_custom_call.1} parent=5 // pred_check_branch
        %428 = sbr.rel (%p425) target = $region72
      $region71: #{tpu_custom_call.1} parent=5 // pred_region
        %s429 = ssub.s32 %s29, 1
        %s430 = smul.u32 32, %s34
        %p431 = scmp.lt.s32.totalorder %s430, 63
        %s432 = scalar_select %p431, %s430, 63
        %s433 = smul.addr %s432, 8
        %s434 = scalar_lea.vmem %s0, %s433
        %p435 = pneg %p55
        %p436 = pneg %p52
        %p437 = pneg %p76
        %p438 = pneg %p73
        %p439 = pneg %p97
        %p440 = pneg %p94
        %p441 = pneg %p118
        %p442 = pneg %p115
        %p443 = pneg %p139
        %p444 = pneg %p136
        %p445 = pneg %p160
        %p446 = pneg %p157
        %p447 = pneg %p181
        %p448 = pneg %p178
        %p449 = pneg %p202
        %p450 = pneg %p199
        %p451 = pneg %p223
        %p452 = pneg %p220
        %p453 = pneg %p244
        %p454 = pneg %p241
        %p455 = pneg %p265
        %p456 = pneg %p262
        %p457 = pneg %p286
        %p458 = pneg %p283
        %p459 = pneg %p307
        %p460 = pneg %p304
        %p461 = pneg %p333
        %p462 = pneg %p330
        %s463 = sand.u32 %s320, 1
        %s464 = scalar_lea.sflag [#allocation4], %s463
        %s465 = sand.u32 %s320, 1
        %s466 = smul.addr %s465, 256
        %s467 = scalar_lea.vmem [#allocation3], %s466
        %p468 = pneg %p359
        %p469 = pneg %p356
        %s470 = sand.u32 %s346, 1
        %s471 = scalar_lea.sflag [#allocation6], %s470
        %s472 = sand.u32 %s346, 1
        %s473 = smul.addr %s472, 256
        %s474 = scalar_lea.vmem [#allocation5], %s473
        %s475 = smul.u32 32, %s34
        %p476 = scmp.lt.s32.totalorder %s475, 63
        %s477 = scalar_select %p476, %s475, 63
        %s478 = smul.addr %s477, 8
        %s479 = scalar_lea.vmem %s0, %s478
        %s480 = smul.u32 32, %s34
        %s481 = smul.u32 32, %s34
        %s482 = smul.u32 32, %s34
        %v483 = vld [vmem:[%s479] sm:$0xff]
        %v484 = vld [vmem:[%s479 + $0x8] sm:$0xff]
        %v485 = vld [vmem:[%s479 + $0x10] sm:$0xff]
        %v486 = vld [vmem:[%s479 + $0x18] sm:$0xff]
        %v487 = vld [vmem:[%s479 + $0x20] sm:$0xff]
        %v488 = vld [vmem:[%s479 + $0x28] sm:$0xff]
        %v489 = vld [vmem:[%s479 + $0x30] sm:$0xff]
        %v490 = vld [vmem:[%s479 + $0x38] sm:$0xff]
        %v491 = vld [vmem:[%s479 + $0x40] sm:$0xff]
        %v492 = vld [vmem:[%s479 + $0x48] sm:$0xff]
        %v493 = vld [vmem:[%s479 + $0x50] sm:$0xff]
        %v494 = vld [vmem:[%s479 + $0x58] sm:$0xff]
        %v495 = vld [vmem:[%s479 + $0x60] sm:$0xff]
        %v496 = vld [vmem:[%s479 + $0x68] sm:$0xff]
        %v497 = vld [vmem:[%s479 + $0x70] sm:$0xff]
        %v498 = vld [vmem:[%s479 + $0x78] sm:$0xff]
        %v499 = vld [vmem:[%s479 + $0x80] sm:$0xff]
        %v500 = vld [vmem:[%s479 + $0x88] sm:$0xff]
        %v501 = vld [vmem:[%s479 + $0x90] sm:$0xff]
        %v502 = vld [vmem:[%s479 + $0x98] sm:$0xff]
        %v503 = vld [vmem:[%s479 + $0xa0] sm:$0xff]
        %v504 = vld [vmem:[%s479 + $0xa8] sm:$0xff]
        %v505 = vld [vmem:[%s479 + $0xb0] sm:$0xff]
        %v506 = vld [vmem:[%s479 + $0xb8] sm:$0xff]
        %v507 = vld [vmem:[%s479 + $0xc0] sm:$0xff]
        %v508 = vld [vmem:[%s479 + $0xc8] sm:$0xff]
        %v509 = vld [vmem:[%s479 + $0xd0] sm:$0xff]
        %v510 = vld [vmem:[%s479 + $0xd8] sm:$0xff]
        %v511 = vld [vmem:[%s479 + $0xe0] sm:$0xff]
        %v512 = vld [vmem:[%s479 + $0xe8] sm:$0xff]
        %v513 = vld [vmem:[%s479 + $0xf0] sm:$0xff]
        %v514 = vld [vmem:[%s479 + $0xf8] sm:$0xff]
        %v515 = vld [vmem:[%s1] sm:$0x1f]
        %v516 = vld [vmem:[%s2] sm:$0x1]
        %v518 = vlaneseq
        %v519 = vshrl.u32 %v518, 7
        %v520 = vsub.s32 0, %v519
        %v521 = vrot.slane %v516, %v520
        %vm523 = vcmask 39936
        %v525 = vsel %vm523, %v483, 0
        %v528 = vsel %vm523, %v484, 0
        %v531 = vsel %vm523, %v485, 0
        %v534 = vsel %vm523, %v486, 0
        %v537 = vsel %vm523, %v487, 0
        %v540 = vsel %vm523, %v488, 0
        %v543 = vsel %vm523, %v489, 0
        %v546 = vsel %vm523, %v490, 0
        %v549 = vsel %vm523, %v491, 0
        %v552 = vsel %vm523, %v492, 0
        %v555 = vsel %vm523, %v493, 0
        %v558 = vsel %vm523, %v494, 0
        %v561 = vsel %vm523, %v495, 0
        %v564 = vsel %vm523, %v496, 0
        %v567 = vsel %vm523, %v497, 0
        %v570 = vsel %vm523, %v498, 0
        %v573 = vsel %vm523, %v499, 0
        %v576 = vsel %vm523, %v500, 0
        %v579 = vsel %vm523, %v501, 0
        %v582 = vsel %vm523, %v502, 0
        %v585 = vsel %vm523, %v503, 0
        %v588 = vsel %vm523, %v504, 0
        %v591 = vsel %vm523, %v505, 0
        %v594 = vsel %vm523, %v506, 0
        %v597 = vsel %vm523, %v507, 0
        %v600 = vsel %vm523, %v508, 0
        %v603 = vsel %vm523, %v509, 0
        %v606 = vsel %vm523, %v510, 0
        %v609 = vsel %vm523, %v511, 0
        %v612 = vsel %vm523, %v512, 0
        %v615 = vsel %vm523, %v513, 0
        %v618 = vsel %vm523, %v514, 0
        %vm620 = vcmask 1044480
        %v622 = vsel %vm620, %v515, 0
        %624 = vmatprep.subr.mxu0 0.0
        %625 = vmatpush1.msra.mxu0 %v622
        %626 = vmatprep.subr.mxu0 0.0
        %627 = vmatpush1.msra.mxu0 0.0
        %628 = vmatprep.subr.mxu0 0.0
        %629 = vmatpush1.msra.mxu0 0.0
        %630 = vmatprep.subr.mxu0 0.0
        %631 = vmatpush1.msra.mxu0 0.0
        %632 = vmatprep.subr.mxu0 0.0
        %633 = vmatpush1.msra.mxu0 0.0
        %634 = vmatprep.subr.mxu0 0.0
        %635 = vmatpush1.msra.mxu0 0.0
        %636 = vmatprep.subr.mxu0 0.0
        %637 = vmatpush1.msra.mxu0 0.0
        %638 = vmatprep.subr.mxu0 0.0
        %639 = vmatpush1.msra.mxu0 0.0
        %640 = vmatprep.subr.mxu0 0.0
        %641 = vmatpush1.msra.mxu0 0.0
        %642 = vmatprep.subr.mxu0 0.0
        %643 = vmatpush1.msra.mxu0 0.0
        %644 = vmatprep.subr.mxu0 0.0
        %645 = vmatpush1.msra.mxu0 0.0
        %646 = vmatprep.subr.mxu0 0.0
        %647 = vmatpush1.msra.mxu0 0.0
        %648 = vmatprep.subr.mxu0 0.0
        %649 = vmatpush1.msra.mxu0 0.0
        %650 = vmatprep.subr.mxu0 0.0
        %651 = vmatpush1.msra.mxu0 0.0
        %652 = vmatprep.subr.mxu0 0.0
        %653 = vmatpush1.msra.mxu0 0.0
        %654 = vmatprep.subr.mxu0 0.0
        %655 = vmatpush1.msra.mxu0 0.0
        %656 = vmatprep.subr.mxu0 0.0
        %657 = vmatpush1.msra.mxu0 0.0
        %658 = vmatprep.subr.mxu0 0.0
        %659 = vmatpush1.msra.mxu0 0.0
        %660 = vmatprep.subr.mxu0 0.0
        %661 = vmatpush1.msra.mxu0 0.0
        %662 = vmatprep.subr.mxu0 0.0
        %663 = vmatpush1.msra.mxu0 0.0
        %664 = vmatprep.subr.mxu0 0.0
        %665 = vmatpush1.msra.mxu0 0.0
        %666 = vmatprep.subr.mxu0 0.0
        %667 = vmatpush1.msra.mxu0 0.0
        %668 = vmatprep.subr.mxu0 0.0
        %669 = vmatpush1.msra.mxu0 0.0
        %670 = vmatprep.subr.mxu0 0.0
        %671 = vmatpush1.msra.mxu0 0.0
        %672 = vmatprep.subr.mxu0 0.0
        %673 = vmatpush1.msra.mxu0 0.0
        %674 = vmatprep.subr.mxu0 0.0
        %675 = vmatpush1.msra.mxu0 0.0
        %676 = vmatprep.subr.mxu0 0.0
        %677 = vmatpush1.msra.mxu0 0.0
        %678 = vmatprep.subr.mxu0 0.0
        %679 = vmatpush1.msra.mxu0 0.0
        %680 = vmatprep.subr.mxu0 0.0
        %681 = vmatpush1.msra.mxu0 0.0
        %682 = vmatprep.subr.mxu0 0.0
        %683 = vmatpush1.msra.mxu0 0.0
        %684 = vmatprep.subr.mxu0 0.0
        %685 = vmatpush1.msra.mxu0 0.0
        %686 = vmatprep.subr.mxu0 0.0
        %687 = vmatpush1.msra.mxu0 0.0
        %688 = vmatprep.mubr.f32.mxu0 0.0
        %689 = vmatmul.mubr.f32.gmra.mrb[0].mxu0 %v525
        %v690 = vpop.f32.mrb[0].mxu0
        %v691 = vadd.f32 %v521, %v690
        %v692 = vpop.f32.mrb[0].mxu0
        %693 = vmatprep.mubr.f32.mxu0 0.0
        %694 = vmatmul.mubr.f32.gmra.mrb[0].mxu0 %v528
        %v695 = vpop.f32.mrb[0].mxu0
        %v696 = vadd.f32 %v521, %v695
        %v697 = vpop.f32.mrb[0].mxu0
        %698 = vmatprep.mubr.f32.mxu0 0.0
        %699 = vmatmul.mubr.f32.gmra.mrb[0].mxu0 %v531
        %v700 = vpop.f32.mrb[0].mxu0
        %v701 = vadd.f32 %v521, %v700
        %v702 = vpop.f32.mrb[0].mxu0
        %703 = vmatprep.mubr.f32.mxu0 0.0
        %704 = vmatmul.mubr.f32.gmra.mrb[0].mxu0 %v534
        %v705 = vpop.f32.mrb[0].mxu0
        %v706 = vadd.f32 %v521, %v705
        %v707 = vpop.f32.mrb[0].mxu0
        %708 = vmatprep.mubr.f32.mxu0 0.0
        %709 = vmatmul.mubr.f32.gmra.mrb[0].mxu0 %v537
        %v710 = vpop.f32.mrb[0].mxu0
        %v711 = vadd.f32 %v521, %v710
        %v712 = vpop.f32.mrb[0].mxu0
        %713 = vmatprep.mubr.f32.mxu0 0.0
        %714 = vmatmul.mubr.f32.gmra.mrb[0].mxu0 %v540
        %v715 = vpop.f32.mrb[0].mxu0
        %v716 = vadd.f32 %v521, %v715
        %v717 = vpop.f32.mrb[0].mxu0
        %718 = vmatprep.mubr.f32.mxu0 0.0
        %719 = vmatmul.mubr.f32.gmra.mrb[0].mxu0 %v543
        %v720 = vpop.f32.mrb[0].mxu0
        %v721 = vadd.f32 %v521, %v720
        %v722 = vpop.f32.mrb[0].mxu0
        %723 = vmatprep.mubr.f32.mxu0 0.0
        %724 = vmatmul.mubr.f32.gmra.mrb[0].mxu0 %v546
        %v725 = vpop.f32.mrb[0].mxu0
        %v726 = vadd.f32 %v521, %v725
        %v727 = vpop.f32.mrb[0].mxu0
        %728 = vmatprep.mubr.f32.mxu0 0.0
        %729 = vmatmul.mubr.f32.gmra.mrb[0].mxu0 %v549
        %v730 = vpop.f32.mrb[0].mxu0
        %v731 = vadd.f32 %v521, %v730
        %v732 = vpop.f32.mrb[0].mxu0
        %733 = vmatprep.mubr.f32.mxu0 0.0
        %734 = vmatmul.mubr.f32.gmra.mrb[0].mxu0 %v552
        %v735 = vpop.f32.mrb[0].mxu0
        %v736 = vadd.f32 %v521, %v735
        %v737 = vpop.f32.mrb[0].mxu0
        %738 = vmatprep.mubr.f32.mxu0 0.0
        %739 = vmatmul.mubr.f32.gmra.mrb[0].mxu0 %v555
        %v740 = vpop.f32.mrb[0].mxu0
        %v741 = vadd.f32 %v521, %v740
        %v742 = vpop.f32.mrb[0].mxu0
        %743 = vmatprep.mubr.f32.mxu0 0.0
        %744 = vmatmul.mubr.f32.gmra.mrb[0].mxu0 %v558
        %v745 = vpop.f32.mrb[0].mxu0
        %v746 = vadd.f32 %v521, %v745
        %v747 = vpop.f32.mrb[0].mxu0
        %748 = vmatprep.mubr.f32.mxu0 0.0
        %749 = vmatmul.mubr.f32.gmra.mrb[0].mxu0 %v561
        %v750 = vpop.f32.mrb[0].mxu0
        %v751 = vadd.f32 %v521, %v750
        %v752 = vpop.f32.mrb[0].mxu0
        %753 = vmatprep.mubr.f32.mxu0 0.0
        %754 = vmatmul.mubr.f32.gmra.mrb[0].mxu0 %v564
        %v755 = vpop.f32.mrb[0].mxu0
        %v756 = vadd.f32 %v521, %v755
        %v757 = vpop.f32.mrb[0].mxu0
        %758 = vmatprep.mubr.f32.mxu0 0.0
        %759 = vmatmul.mubr.f32.gmra.mrb[0].mxu0 %v567
        %v760 = vpop.f32.mrb[0].mxu0
        %v761 = vadd.f32 %v521, %v760
        %v762 = vpop.f32.mrb[0].mxu0
        %763 = vmatprep.mubr.f32.mxu0 0.0
        %764 = vmatmul.mubr.f32.gmra.mrb[0].mxu0 %v570
        %v765 = vpop.f32.mrb[0].mxu0
        %v766 = vadd.f32 %v521, %v765
        %v767 = vpop.f32.mrb[0].mxu0
        %768 = vmatprep.mubr.f32.mxu0 0.0
        %769 = vmatmul.mubr.f32.gmra.mrb[0].mxu0 %v573
        %v770 = vpop.f32.mrb[0].mxu0
        %v771 = vadd.f32 %v521, %v770
        %v772 = vpop.f32.mrb[0].mxu0
        %773 = vmatprep.mubr.f32.mxu0 0.0
        %774 = vmatmul.mubr.f32.gmra.mrb[0].mxu0 %v576
        %v775 = vpop.f32.mrb[0].mxu0
        %v776 = vadd.f32 %v521, %v775
        %v777 = vpop.f32.mrb[0].mxu0
        %778 = vmatprep.mubr.f32.mxu0 0.0
        %779 = vmatmul.mubr.f32.gmra.mrb[0].mxu0 %v579
        %v780 = vpop.f32.mrb[0].mxu0
        %v781 = vadd.f32 %v521, %v780
        %v782 = vpop.f32.mrb[0].mxu0
        %783 = vmatprep.mubr.f32.mxu0 0.0
        %784 = vmatmul.mubr.f32.gmra.mrb[0].mxu0 %v582
        %v785 = vpop.f32.mrb[0].mxu0
        %v786 = vadd.f32 %v521, %v785
        %v787 = vpop.f32.mrb[0].mxu0
        %788 = vmatprep.mubr.f32.mxu0 0.0
        %789 = vmatmul.mubr.f32.gmra.mrb[0].mxu0 %v585
        %v790 = vpop.f32.mrb[0].mxu0
        %v791 = vadd.f32 %v521, %v790
        %v792 = vpop.f32.mrb[0].mxu0
        %793 = vmatprep.mubr.f32.mxu0 0.0
        %794 = vmatmul.mubr.f32.gmra.mrb[0].mxu0 %v588
        %v795 = vpop.f32.mrb[0].mxu0
        %v796 = vadd.f32 %v521, %v795
        %v797 = vpop.f32.mrb[0].mxu0
        %798 = vmatprep.mubr.f32.mxu0 0.0
        %799 = vmatmul.mubr.f32.gmra.mrb[0].mxu0 %v591
        %v800 = vpop.f32.mrb[0].mxu0
        %v801 = vadd.f32 %v521, %v800
        %v802 = vpop.f32.mrb[0].mxu0
        %803 = vmatprep.mubr.f32.mxu0 0.0
        %804 = vmatmul.mubr.f32.gmra.mrb[0].mxu0 %v594
        %v805 = vpop.f32.mrb[0].mxu0
        %v806 = vadd.f32 %v521, %v805
        %v807 = vpop.f32.mrb[0].mxu0
        %808 = vmatprep.mubr.f32.mxu0 0.0
        %809 = vmatmul.mubr.f32.gmra.mrb[0].mxu0 %v597
        %v810 = vpop.f32.mrb[0].mxu0
        %v811 = vadd.f32 %v521, %v810
        %v812 = vpop.f32.mrb[0].mxu0
        %813 = vmatprep.mubr.f32.mxu0 0.0
        %814 = vmatmul.mubr.f32.gmra.mrb[0].mxu0 %v600
        %v815 = vpop.f32.mrb[0].mxu0
        %v816 = vadd.f32 %v521, %v815
        %v817 = vpop.f32.mrb[0].mxu0
        %818 = vmatprep.mubr.f32.mxu0 0.0
        %819 = vmatmul.mubr.f32.gmra.mrb[0].mxu0 %v603
        %v820 = vpop.f32.mrb[0].mxu0
        %v821 = vadd.f32 %v521, %v820
        %v822 = vpop.f32.mrb[0].mxu0
        %823 = vmatprep.mubr.f32.mxu0 0.0
        %824 = vmatmul.mubr.f32.gmra.mrb[0].mxu0 %v606
        %v825 = vpop.f32.mrb[0].mxu0
        %v826 = vadd.f32 %v521, %v825
        %v827 = vpop.f32.mrb[0].mxu0
        %828 = vmatprep.mubr.f32.mxu0 0.0
        %829 = vmatmul.mubr.f32.gmra.mrb[0].mxu0 %v609
        %v830 = vpop.f32.mrb[0].mxu0
        %v831 = vadd.f32 %v521, %v830
        %v832 = vpop.f32.mrb[0].mxu0
        %833 = vmatprep.mubr.f32.mxu0 0.0
        %834 = vmatmul.mubr.f32.gmra.mrb[0].mxu0 %v612
        %v835 = vpop.f32.mrb[0].mxu0
        %v836 = vadd.f32 %v521, %v835
        %v837 = vpop.f32.mrb[0].mxu0
        %838 = vmatprep.mubr.f32.mxu0 0.0
        %839 = vmatmul.mubr.f32.gmra.mrb[0].mxu0 %v615
        %v840 = vpop.f32.mrb[0].mxu0
        %v841 = vadd.f32 %v521, %v840
        %v842 = vpop.f32.mrb[0].mxu0
        %843 = vmatprep.mubr.f32.mxu0 0.0
        %844 = vmatmul.mubr.f32.gmra.mrb[0].mxu0 %v618
        %v845 = vpop.f32.mrb[0].mxu0
        %v846 = vadd.f32 %v521, %v845
        %v847 = vpop.f32.mrb[0].mxu0
        %848 = vdwg.mxu0
        %vm849 = vcmp.gt.f32.partialorder %v691, 0.0
        %vm850 = vcmp.gt.f32.partialorder %v696, 0.0
        %vm851 = vcmp.gt.f32.partialorder %v701, 0.0
        %vm852 = vcmp.gt.f32.partialorder %v706, 0.0
        %vm853 = vcmp.gt.f32.partialorder %v711, 0.0
        %vm854 = vcmp.gt.f32.partialorder %v716, 0.0
        %vm855 = vcmp.gt.f32.partialorder %v721, 0.0
        %vm856 = vcmp.gt.f32.partialorder %v726, 0.0
        %vm857 = vcmp.gt.f32.partialorder %v731, 0.0
        %vm858 = vcmp.gt.f32.partialorder %v736, 0.0
        %vm859 = vcmp.gt.f32.partialorder %v741, 0.0
        %vm860 = vcmp.gt.f32.partialorder %v746, 0.0
        %vm861 = vcmp.gt.f32.partialorder %v751, 0.0
        %vm862 = vcmp.gt.f32.partialorder %v756, 0.0
        %vm863 = vcmp.gt.f32.partialorder %v761, 0.0
        %vm864 = vcmp.gt.f32.partialorder %v766, 0.0
        %vm865 = vcmp.gt.f32.partialorder %v771, 0.0
        %vm866 = vcmp.gt.f32.partialorder %v776, 0.0
        %vm867 = vcmp.gt.f32.partialorder %v781, 0.0
        %vm868 = vcmp.gt.f32.partialorder %v786, 0.0
        %vm869 = vcmp.gt.f32.partialorder %v791, 0.0
        %vm870 = vcmp.gt.f32.partialorder %v796, 0.0
        %vm871 = vcmp.gt.f32.partialorder %v801, 0.0
        %vm872 = vcmp.gt.f32.partialorder %v806, 0.0
        %vm873 = vcmp.gt.f32.partialorder %v811, 0.0
        %vm874 = vcmp.gt.f32.partialorder %v816, 0.0
        %vm875 = vcmp.gt.f32.partialorder %v821, 0.0
        %vm876 = vcmp.gt.f32.partialorder %v826, 0.0
        %vm877 = vcmp.gt.f32.partialorder %v831, 0.0
        %vm878 = vcmp.gt.f32.partialorder %v836, 0.0
        %vm879 = vcmp.gt.f32.partialorder %v841, 0.0
        %vm880 = vcmp.gt.f32.partialorder %v846, 0.0
        %v881 = vmul.f32 %v691, 0.01
        %v882 = vmul.f32 %v696, 0.01
        %v883 = vmul.f32 %v701, 0.01
        %v884 = vmul.f32 %v706, 0.01
        %v885 = vmul.f32 %v711, 0.01
        %v886 = vmul.f32 %v716, 0.01
        %v887 = vmul.f32 %v721, 0.01
        %v888 = vmul.f32 %v726, 0.01
        %v889 = vmul.f32 %v731, 0.01
        %v890 = vmul.f32 %v736, 0.01
        %v891 = vmul.f32 %v741, 0.01
        %v892 = vmul.f32 %v746, 0.01
        %v893 = vmul.f32 %v751, 0.01
        %v894 = vmul.f32 %v756, 0.01
        %v895 = vmul.f32 %v761, 0.01
        %v896 = vmul.f32 %v766, 0.01
        %v897 = vmul.f32 %v771, 0.01
        %v898 = vmul.f32 %v776, 0.01
        %v899 = vmul.f32 %v781, 0.01
        %v900 = vmul.f32 %v786, 0.01
        %v901 = vmul.f32 %v791, 0.01
        %v902 = vmul.f32 %v796, 0.01
        %v903 = vmul.f32 %v801, 0.01
        %v904 = vmul.f32 %v806, 0.01
        %v905 = vmul.f32 %v811, 0.01
        %v906 = vmul.f32 %v816, 0.01
        %v907 = vmul.f32 %v821, 0.01
        %v908 = vmul.f32 %v826, 0.01
        %v909 = vmul.f32 %v831, 0.01
        %v910 = vmul.f32 %v836, 0.01
        %v911 = vmul.f32 %v841, 0.01
        %v912 = vmul.f32 %v846, 0.01
        %v913 = vsel %vm849, %v691, %v881
        %v914 = vsel %vm850, %v696, %v882
        %v915 = vsel %vm851, %v701, %v883
        %v916 = vsel %vm852, %v706, %v884
        %v917 = vsel %vm853, %v711, %v885
        %v918 = vsel %vm854, %v716, %v886
        %v919 = vsel %vm855, %v721, %v887
        %v920 = vsel %vm856, %v726, %v888
        %v921 = vsel %vm857, %v731, %v889
        %v922 = vsel %vm858, %v736, %v890
        %v923 = vsel %vm859, %v741, %v891
        %v924 = vsel %vm860, %v746, %v892
        %v925 = vsel %vm861, %v751, %v893
        %v926 = vsel %vm862, %v756, %v894
        %v927 = vsel %vm863, %v761, %v895
        %v928 = vsel %vm864, %v766, %v896
        %v929 = vsel %vm865, %v771, %v897
        %v930 = vsel %vm866, %v776, %v898
        %v931 = vsel %vm867, %v781, %v899
        %v932 = vsel %vm868, %v786, %v900
        %v933 = vsel %vm869, %v791, %v901
        %v934 = vsel %vm870, %v796, %v902
        %v935 = vsel %vm871, %v801, %v903
        %v936 = vsel %vm872, %v806, %v904
        %v937 = vsel %vm873, %v811, %v905
        %v938 = vsel %vm874, %v816, %v906
        %v939 = vsel %vm875, %v821, %v907
        %v940 = vsel %vm876, %v826, %v908
        %v941 = vsel %vm877, %v831, %v909
        %v942 = vsel %vm878, %v836, %v910
        %v943 = vsel %vm879, %v841, %v911
        %v944 = vsel %vm880, %v846, %v912
        %v945 = vld [vmem:[%s3] sm:$0xff]
        %v946 = vld [vmem:[%s3 + $0x8] sm:$0xff]
        %v947 = vld [vmem:[%s3 + $0x10] sm:$0xff]
        %v948 = vld [vmem:[%s3 + $0x18] sm:$0xff]
        %v949 = vld [vmem:[%s3 + $0x20] sm:$0xff]
        %v950 = vld [vmem:[%s3 + $0x28] sm:$0xff]
        %v951 = vld [vmem:[%s3 + $0x30] sm:$0xff]
        %v952 = vld [vmem:[%s3 + $0x38] sm:$0xff]
        %v953 = vld [vmem:[%s3 + $0x40] sm:$0xff]
        %v954 = vld [vmem:[%s3 + $0x48] sm:$0xff]
        %v955 = vld [vmem:[%s3 + $0x50] sm:$0xff]
        %v956 = vld [vmem:[%s3 + $0x58] sm:$0xff]
        %v957 = vld [vmem:[%s3 + $0x60] sm:$0xff]
        %v958 = vld [vmem:[%s3 + $0x68] sm:$0xff]
        %v959 = vld [vmem:[%s3 + $0x70] sm:$0xff]
        %v960 = vld [vmem:[%s3 + $0x78] sm:$0xff]
        %v961 = vld [vmem:[%s4] sm:$0x1]
        %v963 = vlaneseq
        %v964 = vshrl.u32 %v963, 7
        %v965 = vsub.s32 0, %v964
        %v966 = vrot.slane %v961, %v965
        %968 = vmatprep.subr.mxu0 0.0
        %969 = vmatpush1.msra.mxu0 %v945
        %970 = vmatprep.subr.mxu0 0.0
        %971 = vmatpush1.msra.mxu0 %v946
        %972 = vmatprep.subr.mxu0 0.0
        %973 = vmatpush1.msra.mxu0 %v947
        %974 = vmatprep.subr.mxu0 0.0
        %975 = vmatpush1.msra.mxu0 %v948
        %976 = vmatprep.subr.mxu0 0.0
        %977 = vmatpush1.msra.mxu0 %v949
        %978 = vmatprep.subr.mxu0 0.0
        %979 = vmatpush1.msra.mxu0 %v950
        %980 = vmatprep.subr.mxu0 0.0
        %981 = vmatpush1.msra.mxu0 %v951
        %982 = vmatprep.subr.mxu0 0.0
        %983 = vmatpush1.msra.mxu0 %v952
        %984 = vmatprep.subr.mxu0 0.0
        %985 = vmatpush1.msra.mxu0 %v953
        %986 = vmatprep.subr.mxu0 0.0
        %987 = vmatpush1.msra.mxu0 %v954
        %988 = vmatprep.subr.mxu0 0.0
        %989 = vmatpush1.msra.mxu0 %v955
        %990 = vmatprep.subr.mxu0 0.0
        %991 = vmatpush1.msra.mxu0 %v956
        %992 = vmatprep.subr.mxu0 0.0
        %993 = vmatpush1.msra.mxu0 %v957
        %994 = vmatprep.subr.mxu0 0.0
        %995 = vmatpush1.msra.mxu0 %v958
        %996 = vmatprep.subr.mxu0 0.0
        %997 = vmatpush1.msra.mxu0 %v959
        %998 = vmatprep.subr.mxu0 0.0
        %999 = vmatpush1.msra.mxu0 %v960
        %1000 = vmatprep.subr.mxu0 0.0
        %1001 = vmatpush1.msra.mxu0 0.0
        %1002 = vmatprep.subr.mxu0 0.0
        %1003 = vmatpush1.msra.mxu0 0.0
        %1004 = vmatprep.subr.mxu0 0.0
        %1005 = vmatpush1.msra.mxu0 0.0
        %1006 = vmatprep.subr.mxu0 0.0
        %1007 = vmatpush1.msra.mxu0 0.0
        %1008 = vmatprep.subr.mxu0 0.0
        %1009 = vmatpush1.msra.mxu0 0.0
        %1010 = vmatprep.subr.mxu0 0.0
        %1011 = vmatpush1.msra.mxu0 0.0
        %1012 = vmatprep.subr.mxu0 0.0
        %1013 = vmatpush1.msra.mxu0 0.0
        %1014 = vmatprep.subr.mxu0 0.0
        %1015 = vmatpush1.msra.mxu0 0.0
        %1016 = vmatprep.subr.mxu0 0.0
        %1017 = vmatpush1.msra.mxu0 0.0
        %1018 = vmatprep.subr.mxu0 0.0
        %1019 = vmatpush1.msra.mxu0 0.0
        %1020 = vmatprep.subr.mxu0 0.0
        %1021 = vmatpush1.msra.mxu0 0.0
        %1022 = vmatprep.subr.mxu0 0.0
        %1023 = vmatpush1.msra.mxu0 0.0
        %1024 = vmatprep.subr.mxu0 0.0
        %1025 = vmatpush1.msra.mxu0 0.0
        %1026 = vmatprep.subr.mxu0 0.0
        %1027 = vmatpush1.msra.mxu0 0.0
        %1028 = vmatprep.subr.mxu0 0.0
        %1029 = vmatpush1.msra.mxu0 0.0
        %1030 = vmatprep.subr.mxu0 0.0
        %1031 = vmatpush1.msra.mxu0 0.0
        %1032 = vmatprep.mubr.f32.mxu0 0.0
        %1033 = vmatmul.mubr.f32.gmra.mrb[0].mxu0 %v913
        %v1034 = vpop.f32.mrb[0].mxu0
        %v1035 = vadd.f32 %v966, %v1034
        %v1036 = vpop.f32.mrb[0].mxu0
        %1037 = vmatprep.mubr.f32.mxu0 0.0
        %1038 = vmatmul.mubr.f32.gmra.mrb[0].mxu0 %v914
        %v1039 = vpop.f32.mrb[0].mxu0
        %v1040 = vadd.f32 %v966, %v1039
        %v1041 = vpop.f32.mrb[0].mxu0
        %1042 = vmatprep.mubr.f32.mxu0 0.0
        %1043 = vmatmul.mubr.f32.gmra.mrb[0].mxu0 %v915
        %v1044 = vpop.f32.mrb[0].mxu0
        %v1045 = vadd.f32 %v966, %v1044
        %v1046 = vpop.f32.mrb[0].mxu0
        %1047 = vmatprep.mubr.f32.mxu0 0.0
        %1048 = vmatmul.mubr.f32.gmra.mrb[0].mxu0 %v916
        %v1049 = vpop.f32.mrb[0].mxu0
        %v1050 = vadd.f32 %v966, %v1049
        %v1051 = vpop.f32.mrb[0].mxu0
        %1052 = vmatprep.mubr.f32.mxu0 0.0
        %1053 = vmatmul.mubr.f32.gmra.mrb[0].mxu0 %v917
        %v1054 = vpop.f32.mrb[0].mxu0
        %v1055 = vadd.f32 %v966, %v1054
        %v1056 = vpop.f32.mrb[0].mxu0
        %1057 = vmatprep.mubr.f32.mxu0 0.0
        %1058 = vmatmul.mubr.f32.gmra.mrb[0].mxu0 %v918
        %v1059 = vpop.f32.mrb[0].mxu0
        %v1060 = vadd.f32 %v966, %v1059
        %v1061 = vpop.f32.mrb[0].mxu0
        %1062 = vmatprep.mubr.f32.mxu0 0.0
        %1063 = vmatmul.mubr.f32.gmra.mrb[0].mxu0 %v919
        %v1064 = vpop.f32.mrb[0].mxu0
        %v1065 = vadd.f32 %v966, %v1064
        %v1066 = vpop.f32.mrb[0].mxu0
        %1067 = vmatprep.mubr.f32.mxu0 0.0
        %1068 = vmatmul.mubr.f32.gmra.mrb[0].mxu0 %v920
        %v1069 = vpop.f32.mrb[0].mxu0
        %v1070 = vadd.f32 %v966, %v1069
        %v1071 = vpop.f32.mrb[0].mxu0
        %1072 = vmatprep.mubr.f32.mxu0 0.0
        %1073 = vmatmul.mubr.f32.gmra.mrb[0].mxu0 %v921
        %v1074 = vpop.f32.mrb[0].mxu0
        %v1075 = vadd.f32 %v966, %v1074
        %v1076 = vpop.f32.mrb[0].mxu0
        %1077 = vmatprep.mubr.f32.mxu0 0.0
        %1078 = vmatmul.mubr.f32.gmra.mrb[0].mxu0 %v922
        %v1079 = vpop.f32.mrb[0].mxu0
        %v1080 = vadd.f32 %v966, %v1079
        %v1081 = vpop.f32.mrb[0].mxu0
        %1082 = vmatprep.mubr.f32.mxu0 0.0
        %1083 = vmatmul.mubr.f32.gmra.mrb[0].mxu0 %v923
        %v1084 = vpop.f32.mrb[0].mxu0
        %v1085 = vadd.f32 %v966, %v1084
        %v1086 = vpop.f32.mrb[0].mxu0
        %1087 = vmatprep.mubr.f32.mxu0 0.0
        %1088 = vmatmul.mubr.f32.gmra.mrb[0].mxu0 %v924
        %v1089 = vpop.f32.mrb[0].mxu0
        %v1090 = vadd.f32 %v966, %v1089
        %v1091 = vpop.f32.mrb[0].mxu0
        %1092 = vmatprep.mubr.f32.mxu0 0.0
        %1093 = vmatmul.mubr.f32.gmra.mrb[0].mxu0 %v925
        %v1094 = vpop.f32.mrb[0].mxu0
        %v1095 = vadd.f32 %v966, %v1094
        %v1096 = vpop.f32.mrb[0].mxu0
        %1097 = vmatprep.mubr.f32.mxu0 0.0
        %1098 = vmatmul.mubr.f32.gmra.mrb[0].mxu0 %v926
        %v1099 = vpop.f32.mrb[0].mxu0
        %v1100 = vadd.f32 %v966, %v1099
        %v1101 = vpop.f32.mrb[0].mxu0
        %1102 = vmatprep.mubr.f32.mxu0 0.0
        %1103 = vmatmul.mubr.f32.gmra.mrb[0].mxu0 %v927
        %v1104 = vpop.f32.mrb[0].mxu0
        %v1105 = vadd.f32 %v966, %v1104
        %v1106 = vpop.f32.mrb[0].mxu0
        %1107 = vmatprep.mubr.f32.mxu0 0.0
        %1108 = vmatmul.mubr.f32.gmra.mrb[0].mxu0 %v928
        %v1109 = vpop.f32.mrb[0].mxu0
        %v1110 = vadd.f32 %v966, %v1109
        %v1111 = vpop.f32.mrb[0].mxu0
        %1112 = vmatprep.mubr.f32.mxu0 0.0
        %1113 = vmatmul.mubr.f32.gmra.mrb[0].mxu0 %v929
        %v1114 = vpop.f32.mrb[0].mxu0
        %v1115 = vadd.f32 %v966, %v1114
        %v1116 = vpop.f32.mrb[0].mxu0
        %1117 = vmatprep.mubr.f32.mxu0 0.0
        %1118 = vmatmul.mubr.f32.gmra.mrb[0].mxu0 %v930
        %v1119 = vpop.f32.mrb[0].mxu0
        %v1120 = vadd.f32 %v966, %v1119
        %v1121 = vpop.f32.mrb[0].mxu0
        %1122 = vmatprep.mubr.f32.mxu0 0.0
        %1123 = vmatmul.mubr.f32.gmra.mrb[0].mxu0 %v931
        %v1124 = vpop.f32.mrb[0].mxu0
        %v1125 = vadd.f32 %v966, %v1124
        %v1126 = vpop.f32.mrb[0].mxu0
        %1127 = vmatprep.mubr.f32.mxu0 0.0
        %1128 = vmatmul.mubr.f32.gmra.mrb[0].mxu0 %v932
        %v1129 = vpop.f32.mrb[0].mxu0
        %v1130 = vadd.f32 %v966, %v1129
        %v1131 = vpop.f32.mrb[0].mxu0
        %1132 = vmatprep.mubr.f32.mxu0 0.0
        %1133 = vmatmul.mubr.f32.gmra.mrb[0].mxu0 %v933
        %v1134 = vpop.f32.mrb[0].mxu0
        %v1135 = vadd.f32 %v966, %v1134
        %v1136 = vpop.f32.mrb[0].mxu0
        %1137 = vmatprep.mubr.f32.mxu0 0.0
        %1138 = vmatmul.mubr.f32.gmra.mrb[0].mxu0 %v934
        %v1139 = vpop.f32.mrb[0].mxu0
        %v1140 = vadd.f32 %v966, %v1139
        %v1141 = vpop.f32.mrb[0].mxu0
        %1142 = vmatprep.mubr.f32.mxu0 0.0
        %1143 = vmatmul.mubr.f32.gmra.mrb[0].mxu0 %v935
        %v1144 = vpop.f32.mrb[0].mxu0
        %v1145 = vadd.f32 %v966, %v1144
        %v1146 = vpop.f32.mrb[0].mxu0
        %1147 = vmatprep.mubr.f32.mxu0 0.0
        %1148 = vmatmul.mubr.f32.gmra.mrb[0].mxu0 %v936
        %v1149 = vpop.f32.mrb[0].mxu0
        %v1150 = vadd.f32 %v966, %v1149
        %v1151 = vpop.f32.mrb[0].mxu0
        %1152 = vmatprep.mubr.f32.mxu0 0.0
        %1153 = vmatmul.mubr.f32.gmra.mrb[0].mxu0 %v937
        %v1154 = vpop.f32.mrb[0].mxu0
        %v1155 = vadd.f32 %v966, %v1154
        %v1156 = vpop.f32.mrb[0].mxu0
        %1157 = vmatprep.mubr.f32.mxu0 0.0
        %1158 = vmatmul.mubr.f32.gmra.mrb[0].mxu0 %v938
        %v1159 = vpop.f32.mrb[0].mxu0
        %v1160 = vadd.f32 %v966, %v1159
        %v1161 = vpop.f32.mrb[0].mxu0
        %1162 = vmatprep.mubr.f32.mxu0 0.0
        %1163 = vmatmul.mubr.f32.gmra.mrb[0].mxu0 %v939
        %v1164 = vpop.f32.mrb[0].mxu0
        %v1165 = vadd.f32 %v966, %v1164
        %v1166 = vpop.f32.mrb[0].mxu0
        %1167 = vmatprep.mubr.f32.mxu0 0.0
        %1168 = vmatmul.mubr.f32.gmra.mrb[0].mxu0 %v940
        %v1169 = vpop.f32.mrb[0].mxu0
        %v1170 = vadd.f32 %v966, %v1169
        %v1171 = vpop.f32.mrb[0].mxu0
        %1172 = vmatprep.mubr.f32.mxu0 0.0
        %1173 = vmatmul.mubr.f32.gmra.mrb[0].mxu0 %v941
        %v1174 = vpop.f32.mrb[0].mxu0
        %v1175 = vadd.f32 %v966, %v1174
        %v1176 = vpop.f32.mrb[0].mxu0
        %1177 = vmatprep.mubr.f32.mxu0 0.0
        %1178 = vmatmul.mubr.f32.gmra.mrb[0].mxu0 %v942
        %v1179 = vpop.f32.mrb[0].mxu0
        %v1180 = vadd.f32 %v966, %v1179
        %v1181 = vpop.f32.mrb[0].mxu0
        %1182 = vmatprep.mubr.f32.mxu0 0.0
        %1183 = vmatmul.mubr.f32.gmra.mrb[0].mxu0 %v943
        %v1184 = vpop.f32.mrb[0].mxu0
        %v1185 = vadd.f32 %v966, %v1184
        %v1186 = vpop.f32.mrb[0].mxu0
        %1187 = vmatprep.mubr.f32.mxu0 0.0
        %1188 = vmatmul.mubr.f32.gmra.mrb[0].mxu0 %v944
        %v1189 = vpop.f32.mrb[0].mxu0
        %v1190 = vadd.f32 %v966, %v1189
        %v1191 = vpop.f32.mrb[0].mxu0
        %1192 = vdwg.mxu0
        %vm1193 = vcmp.gt.f32.partialorder %v1035, 0.0
        %vm1194 = vcmp.gt.f32.partialorder %v1040, 0.0
        %vm1195 = vcmp.gt.f32.partialorder %v1045, 0.0
        %vm1196 = vcmp.gt.f32.partialorder %v1050, 0.0
        %vm1197 = vcmp.gt.f32.partialorder %v1055, 0.0
        %vm1198 = vcmp.gt.f32.partialorder %v1060, 0.0
        %vm1199 = vcmp.gt.f32.partialorder %v1065, 0.0
        %vm1200 = vcmp.gt.f32.partialorder %v1070, 0.0
        %vm1201 = vcmp.gt.f32.partialorder %v1075, 0.0
        %vm1202 = vcmp.gt.f32.partialorder %v1080, 0.0
        %vm1203 = vcmp.gt.f32.partialorder %v1085, 0.0
        %vm1204 = vcmp.gt.f32.partialorder %v1090, 0.0
        %vm1205 = vcmp.gt.f32.partialorder %v1095, 0.0
        %vm1206 = vcmp.gt.f32.partialorder %v1100, 0.0
        %vm1207 = vcmp.gt.f32.partialorder %v1105, 0.0
        %vm1208 = vcmp.gt.f32.partialorder %v1110, 0.0
        %vm1209 = vcmp.gt.f32.partialorder %v1115, 0.0
        %vm1210 = vcmp.gt.f32.partialorder %v1120, 0.0
        %vm1211 = vcmp.gt.f32.partialorder %v1125, 0.0
        %vm1212 = vcmp.gt.f32.partialorder %v1130, 0.0
        %vm1213 = vcmp.gt.f32.partialorder %v1135, 0.0
        %vm1214 = vcmp.gt.f32.partialorder %v1140, 0.0
        %vm1215 = vcmp.gt.f32.partialorder %v1145, 0.0
        %vm1216 = vcmp.gt.f32.partialorder %v1150, 0.0
        %vm1217 = vcmp.gt.f32.partialorder %v1155, 0.0
        %vm1218 = vcmp.gt.f32.partialorder %v1160, 0.0
        %vm1219 = vcmp.gt.f32.partialorder %v1165, 0.0
        %vm1220 = vcmp.gt.f32.partialorder %v1170, 0.0
        %vm1221 = vcmp.gt.f32.partialorder %v1175, 0.0
        %vm1222 = vcmp.gt.f32.partialorder %v1180, 0.0
        %vm1223 = vcmp.gt.f32.partialorder %v1185, 0.0
        %vm1224 = vcmp.gt.f32.partialorder %v1190, 0.0
        %v1225 = vmul.f32 %v1035, 0.01
        %v1226 = vmul.f32 %v1040, 0.01
        %v1227 = vmul.f32 %v1045, 0.01
        %v1228 = vmul.f32 %v1050, 0.01
        %v1229 = vmul.f32 %v1055, 0.01
        %v1230 = vmul.f32 %v1060, 0.01
        %v1231 = vmul.f32 %v1065, 0.01
        %v1232 = vmul.f32 %v1070, 0.01
        %v1233 = vmul.f32 %v1075, 0.01
        %v1234 = vmul.f32 %v1080, 0.01
        %v1235 = vmul.f32 %v1085, 0.01
        %v1236 = vmul.f32 %v1090, 0.01
        %v1237 = vmul.f32 %v1095, 0.01
        %v1238 = vmul.f32 %v1100, 0.01
        %v1239 = vmul.f32 %v1105, 0.01
        %v1240 = vmul.f32 %v1110, 0.01
        %v1241 = vmul.f32 %v1115, 0.01
        %v1242 = vmul.f32 %v1120, 0.01
        %v1243 = vmul.f32 %v1125, 0.01
        %v1244 = vmul.f32 %v1130, 0.01
        %v1245 = vmul.f32 %v1135, 0.01
        %v1246 = vmul.f32 %v1140, 0.01
        %v1247 = vmul.f32 %v1145, 0.01
        %v1248 = vmul.f32 %v1150, 0.01
        %v1249 = vmul.f32 %v1155, 0.01
        %v1250 = vmul.f32 %v1160, 0.01
        %v1251 = vmul.f32 %v1165, 0.01
        %v1252 = vmul.f32 %v1170, 0.01
        %v1253 = vmul.f32 %v1175, 0.01
        %v1254 = vmul.f32 %v1180, 0.01
        %v1255 = vmul.f32 %v1185, 0.01
        %v1256 = vmul.f32 %v1190, 0.01
        %v1257 = vsel %vm1193, %v1035, %v1225
        %v1258 = vsel %vm1194, %v1040, %v1226
        %v1259 = vsel %vm1195, %v1045, %v1227
        %v1260 = vsel %vm1196, %v1050, %v1228
        %v1261 = vsel %vm1197, %v1055, %v1229
        %v1262 = vsel %vm1198, %v1060, %v1230
        %v1263 = vsel %vm1199, %v1065, %v1231
        %v1264 = vsel %vm1200, %v1070, %v1232
        %v1265 = vsel %vm1201, %v1075, %v1233
        %v1266 = vsel %vm1202, %v1080, %v1234
        %v1267 = vsel %vm1203, %v1085, %v1235
        %v1268 = vsel %vm1204, %v1090, %v1236
        %v1269 = vsel %vm1205, %v1095, %v1237
        %v1270 = vsel %vm1206, %v1100, %v1238
        %v1271 = vsel %vm1207, %v1105, %v1239
        %v1272 = vsel %vm1208, %v1110, %v1240
        %v1273 = vsel %vm1209, %v1115, %v1241
        %v1274 = vsel %vm1210, %v1120, %v1242
        %v1275 = vsel %vm1211, %v1125, %v1243
        %v1276 = vsel %vm1212, %v1130, %v1244
        %v1277 = vsel %vm1213, %v1135, %v1245
        %v1278 = vsel %vm1214, %v1140, %v1246
        %v1279 = vsel %vm1215, %v1145, %v1247
        %v1280 = vsel %vm1216, %v1150, %v1248
        %v1281 = vsel %vm1217, %v1155, %v1249
        %v1282 = vsel %vm1218, %v1160, %v1250
        %v1283 = vsel %vm1219, %v1165, %v1251
        %v1284 = vsel %vm1220, %v1170, %v1252
        %v1285 = vsel %vm1221, %v1175, %v1253
        %v1286 = vsel %vm1222, %v1180, %v1254
        %v1287 = vsel %vm1223, %v1185, %v1255
        %v1288 = vsel %vm1224, %v1190, %v1256
        %v1289 = vld [vmem:[%s5] sm:$0xff]
        %v1290 = vld [vmem:[%s5 + $0x8] sm:$0xff]
        %v1291 = vld [vmem:[%s5 + $0x10] sm:$0xff]
        %v1292 = vld [vmem:[%s5 + $0x18] sm:$0xff]
        %v1293 = vld [vmem:[%s5 + $0x20] sm:$0xff]
        %v1294 = vld [vmem:[%s5 + $0x28] sm:$0xff]
        %v1295 = vld [vmem:[%s5 + $0x30] sm:$0xff]
        %v1296 = vld [vmem:[%s5 + $0x38] sm:$0xff]
        %v1297 = vld [vmem:[%s5 + $0x40] sm:$0xff]
        %v1298 = vld [vmem:[%s5 + $0x48] sm:$0xff]
        %v1299 = vld [vmem:[%s5 + $0x50] sm:$0xff]
        %v1300 = vld [vmem:[%s5 + $0x58] sm:$0xff]
        %v1301 = vld [vmem:[%s5 + $0x60] sm:$0xff]
        %v1302 = vld [vmem:[%s5 + $0x68] sm:$0xff]
        %v1303 = vld [vmem:[%s5 + $0x70] sm:$0xff]
        %v1304 = vld [vmem:[%s5 + $0x78] sm:$0xff]
        %v1305 = vld [vmem:[%s6] sm:$0x1]
        %v1307 = vlaneseq
        %v1308 = vshrl.u32 %v1307, 7
        %v1309 = vsub.s32 0, %v1308
        %v1310 = vrot.slane %v1305, %v1309
        %1312 = vmatprep.subr.mxu0 0.0
        %1313 = vmatpush1.msra.mxu0 %v1289
        %1314 = vmatprep.subr.mxu0 0.0
        %1315 = vmatpush1.msra.mxu0 %v1290
        %1316 = vmatprep.subr.mxu0 0.0
        %1317 = vmatpush1.msra.mxu0 %v1291
        %1318 = vmatprep.subr.mxu0 0.0
        %1319 = vmatpush1.msra.mxu0 %v1292
        %1320 = vmatprep.subr.mxu0 0.0
        %1321 = vmatpush1.msra.mxu0 %v1293
        %1322 = vmatprep.subr.mxu0 0.0
        %1323 = vmatpush1.msra.mxu0 %v1294
        %1324 = vmatprep.subr.mxu0 0.0
        %1325 = vmatpush1.msra.mxu0 %v1295
        %1326 = vmatprep.subr.mxu0 0.0
        %1327 = vmatpush1.msra.mxu0 %v1296
        %1328 = vmatprep.subr.mxu0 0.0
        %1329 = vmatpush1.msra.mxu0 %v1297
        %1330 = vmatprep.subr.mxu0 0.0
        %1331 = vmatpush1.msra.mxu0 %v1298
        %1332 = vmatprep.subr.mxu0 0.0
        %1333 = vmatpush1.msra.mxu0 %v1299
        %1334 = vmatprep.subr.mxu0 0.0
        %1335 = vmatpush1.msra.mxu0 %v1300
        %1336 = vmatprep.subr.mxu0 0.0
        %1337 = vmatpush1.msra.mxu0 %v1301
        %1338 = vmatprep.subr.mxu0 0.0
        %1339 = vmatpush1.msra.mxu0 %v1302
        %1340 = vmatprep.subr.mxu0 0.0
        %1341 = vmatpush1.msra.mxu0 %v1303
        %1342 = vmatprep.subr.mxu0 0.0
        %1343 = vmatpush1.msra.mxu0 %v1304
        %1344 = vmatprep.subr.mxu0 0.0
        %1345 = vmatpush1.msra.mxu0 0.0
        %1346 = vmatprep.subr.mxu0 0.0
        %1347 = vmatpush1.msra.mxu0 0.0
        %1348 = vmatprep.subr.mxu0 0.0
        %1349 = vmatpush1.msra.mxu0 0.0
        %1350 = vmatprep.subr.mxu0 0.0
        %1351 = vmatpush1.msra.mxu0 0.0
        %1352 = vmatprep.subr.mxu0 0.0
        %1353 = vmatpush1.msra.mxu0 0.0
        %1354 = vmatprep.subr.mxu0 0.0
        %1355 = vmatpush1.msra.mxu0 0.0
        %1356 = vmatprep.subr.mxu0 0.0
        %1357 = vmatpush1.msra.mxu0 0.0
        %1358 = vmatprep.subr.mxu0 0.0
        %1359 = vmatpush1.msra.mxu0 0.0
        %1360 = vmatprep.subr.mxu0 0.0
        %1361 = vmatpush1.msra.mxu0 0.0
        %1362 = vmatprep.subr.mxu0 0.0
        %1363 = vmatpush1.msra.mxu0 0.0
        %1364 = vmatprep.subr.mxu0 0.0
        %1365 = vmatpush1.msra.mxu0 0.0
        %1366 = vmatprep.subr.mxu0 0.0
        %1367 = vmatpush1.msra.mxu0 0.0
        %1368 = vmatprep.subr.mxu0 0.0
        %1369 = vmatpush1.msra.mxu0 0.0
        %1370 = vmatprep.subr.mxu0 0.0
        %1371 = vmatpush1.msra.mxu0 0.0
        %1372 = vmatprep.subr.mxu0 0.0
        %1373 = vmatpush1.msra.mxu0 0.0
        %1374 = vmatprep.subr.mxu0 0.0
        %1375 = vmatpush1.msra.mxu0 0.0
        %1376 = vmatprep.mubr.f32.mxu0 0.0
        %1377 = vmatmul.mubr.f32.gmra.mrb[0].mxu0 %v1257
        %v1378 = vpop.f32.mrb[0].mxu0
        %v1379 = vadd.f32 %v1310, %v1378
        %v1380 = vpop.f32.mrb[0].mxu0
        %1381 = vmatprep.mubr.f32.mxu0 0.0
        %1382 = vmatmul.mubr.f32.gmra.mrb[0].mxu0 %v1258
        %v1383 = vpop.f32.mrb[0].mxu0
        %v1384 = vadd.f32 %v1310, %v1383
        %v1385 = vpop.f32.mrb[0].mxu0
        %1386 = vmatprep.mubr.f32.mxu0 0.0
        %1387 = vmatmul.mubr.f32.gmra.mrb[0].mxu0 %v1259
        %v1388 = vpop.f32.mrb[0].mxu0
        %v1389 = vadd.f32 %v1310, %v1388
        %v1390 = vpop.f32.mrb[0].mxu0
        %1391 = vmatprep.mubr.f32.mxu0 0.0
        %1392 = vmatmul.mubr.f32.gmra.mrb[0].mxu0 %v1260
        %v1393 = vpop.f32.mrb[0].mxu0
        %v1394 = vadd.f32 %v1310, %v1393
        %v1395 = vpop.f32.mrb[0].mxu0
        %1396 = vmatprep.mubr.f32.mxu0 0.0
        %1397 = vmatmul.mubr.f32.gmra.mrb[0].mxu0 %v1261
        %v1398 = vpop.f32.mrb[0].mxu0
        %v1399 = vadd.f32 %v1310, %v1398
        %v1400 = vpop.f32.mrb[0].mxu0
        %1401 = vmatprep.mubr.f32.mxu0 0.0
        %1402 = vmatmul.mubr.f32.gmra.mrb[0].mxu0 %v1262
        %v1403 = vpop.f32.mrb[0].mxu0
        %v1404 = vadd.f32 %v1310, %v1403
        %v1405 = vpop.f32.mrb[0].mxu0
        %1406 = vmatprep.mubr.f32.mxu0 0.0
        %1407 = vmatmul.mubr.f32.gmra.mrb[0].mxu0 %v1263
        %v1408 = vpop.f32.mrb[0].mxu0
        %v1409 = vadd.f32 %v1310, %v1408
        %v1410 = vpop.f32.mrb[0].mxu0
        %1411 = vmatprep.mubr.f32.mxu0 0.0
        %1412 = vmatmul.mubr.f32.gmra.mrb[0].mxu0 %v1264
        %v1413 = vpop.f32.mrb[0].mxu0
        %v1414 = vadd.f32 %v1310, %v1413
        %v1415 = vpop.f32.mrb[0].mxu0
        %1416 = vmatprep.mubr.f32.mxu0 0.0
        %1417 = vmatmul.mubr.f32.gmra.mrb[0].mxu0 %v1265
        %v1418 = vpop.f32.mrb[0].mxu0
        %v1419 = vadd.f32 %v1310, %v1418
        %v1420 = vpop.f32.mrb[0].mxu0
        %1421 = vmatprep.mubr.f32.mxu0 0.0
        %1422 = vmatmul.mubr.f32.gmra.mrb[0].mxu0 %v1266
        %v1423 = vpop.f32.mrb[0].mxu0
        %v1424 = vadd.f32 %v1310, %v1423
        %v1425 = vpop.f32.mrb[0].mxu0
        %1426 = vmatprep.mubr.f32.mxu0 0.0
        %1427 = vmatmul.mubr.f32.gmra.mrb[0].mxu0 %v1267
        %v1428 = vpop.f32.mrb[0].mxu0
        %v1429 = vadd.f32 %v1310, %v1428
        %v1430 = vpop.f32.mrb[0].mxu0
        %1431 = vmatprep.mubr.f32.mxu0 0.0
        %1432 = vmatmul.mubr.f32.gmra.mrb[0].mxu0 %v1268
        %v1433 = vpop.f32.mrb[0].mxu0
        %v1434 = vadd.f32 %v1310, %v1433
        %v1435 = vpop.f32.mrb[0].mxu0
        %1436 = vmatprep.mubr.f32.mxu0 0.0
        %1437 = vmatmul.mubr.f32.gmra.mrb[0].mxu0 %v1269
        %v1438 = vpop.f32.mrb[0].mxu0
        %v1439 = vadd.f32 %v1310, %v1438
        %v1440 = vpop.f32.mrb[0].mxu0
        %1441 = vmatprep.mubr.f32.mxu0 0.0
        %1442 = vmatmul.mubr.f32.gmra.mrb[0].mxu0 %v1270
        %v1443 = vpop.f32.mrb[0].mxu0
        %v1444 = vadd.f32 %v1310, %v1443
        %v1445 = vpop.f32.mrb[0].mxu0
        %1446 = vmatprep.mubr.f32.mxu0 0.0
        %1447 = vmatmul.mubr.f32.gmra.mrb[0].mxu0 %v1271
        %v1448 = vpop.f32.mrb[0].mxu0
        %v1449 = vadd.f32 %v1310, %v1448
        %v1450 = vpop.f32.mrb[0].mxu0
        %1451 = vmatprep.mubr.f32.mxu0 0.0
        %1452 = vmatmul.mubr.f32.gmra.mrb[0].mxu0 %v1272
        %v1453 = vpop.f32.mrb[0].mxu0
        %v1454 = vadd.f32 %v1310, %v1453
        %v1455 = vpop.f32.mrb[0].mxu0
        %1456 = vmatprep.mubr.f32.mxu0 0.0
        %1457 = vmatmul.mubr.f32.gmra.mrb[0].mxu0 %v1273
        %v1458 = vpop.f32.mrb[0].mxu0
        %v1459 = vadd.f32 %v1310, %v1458
        %v1460 = vpop.f32.mrb[0].mxu0
        %1461 = vmatprep.mubr.f32.mxu0 0.0
        %1462 = vmatmul.mubr.f32.gmra.mrb[0].mxu0 %v1274
        %v1463 = vpop.f32.mrb[0].mxu0
        %v1464 = vadd.f32 %v1310, %v1463
        %v1465 = vpop.f32.mrb[0].mxu0
        %1466 = vmatprep.mubr.f32.mxu0 0.0
        %1467 = vmatmul.mubr.f32.gmra.mrb[0].mxu0 %v1275
        %v1468 = vpop.f32.mrb[0].mxu0
        %v1469 = vadd.f32 %v1310, %v1468
        %v1470 = vpop.f32.mrb[0].mxu0
        %1471 = vmatprep.mubr.f32.mxu0 0.0
        %1472 = vmatmul.mubr.f32.gmra.mrb[0].mxu0 %v1276
        %v1473 = vpop.f32.mrb[0].mxu0
        %v1474 = vadd.f32 %v1310, %v1473
        %v1475 = vpop.f32.mrb[0].mxu0
        %1476 = vmatprep.mubr.f32.mxu0 0.0
        %1477 = vmatmul.mubr.f32.gmra.mrb[0].mxu0 %v1277
        %v1478 = vpop.f32.mrb[0].mxu0
        %v1479 = vadd.f32 %v1310, %v1478
        %v1480 = vpop.f32.mrb[0].mxu0
        %1481 = vmatprep.mubr.f32.mxu0 0.0
        %1482 = vmatmul.mubr.f32.gmra.mrb[0].mxu0 %v1278
        %v1483 = vpop.f32.mrb[0].mxu0
        %v1484 = vadd.f32 %v1310, %v1483
        %v1485 = vpop.f32.mrb[0].mxu0
        %1486 = vmatprep.mubr.f32.mxu0 0.0
        %1487 = vmatmul.mubr.f32.gmra.mrb[0].mxu0 %v1279
        %v1488 = vpop.f32.mrb[0].mxu0
        %v1489 = vadd.f32 %v1310, %v1488
        %v1490 = vpop.f32.mrb[0].mxu0
        %1491 = vmatprep.mubr.f32.mxu0 0.0
        %1492 = vmatmul.mubr.f32.gmra.mrb[0].mxu0 %v1280
        %v1493 = vpop.f32.mrb[0].mxu0
        %v1494 = vadd.f32 %v1310, %v1493
        %v1495 = vpop.f32.mrb[0].mxu0
        %1496 = vmatprep.mubr.f32.mxu0 0.0
        %1497 = vmatmul.mubr.f32.gmra.mrb[0].mxu0 %v1281
        %v1498 = vpop.f32.mrb[0].mxu0
        %v1499 = vadd.f32 %v1310, %v1498
        %v1500 = vpop.f32.mrb[0].mxu0
        %1501 = vmatprep.mubr.f32.mxu0 0.0
        %1502 = vmatmul.mubr.f32.gmra.mrb[0].mxu0 %v1282
        %v1503 = vpop.f32.mrb[0].mxu0
        %v1504 = vadd.f32 %v1310, %v1503
        %v1505 = vpop.f32.mrb[0].mxu0
        %1506 = vmatprep.mubr.f32.mxu0 0.0
        %1507 = vmatmul.mubr.f32.gmra.mrb[0].mxu0 %v1283
        %v1508 = vpop.f32.mrb[0].mxu0
        %v1509 = vadd.f32 %v1310, %v1508
        %v1510 = vpop.f32.mrb[0].mxu0
        %1511 = vmatprep.mubr.f32.mxu0 0.0
        %1512 = vmatmul.mubr.f32.gmra.mrb[0].mxu0 %v1284
        %v1513 = vpop.f32.mrb[0].mxu0
        %v1514 = vadd.f32 %v1310, %v1513
        %v1515 = vpop.f32.mrb[0].mxu0
        %1516 = vmatprep.mubr.f32.mxu0 0.0
        %1517 = vmatmul.mubr.f32.gmra.mrb[0].mxu0 %v1285
        %v1518 = vpop.f32.mrb[0].mxu0
        %v1519 = vadd.f32 %v1310, %v1518
        %v1520 = vpop.f32.mrb[0].mxu0
        %1521 = vmatprep.mubr.f32.mxu0 0.0
        %1522 = vmatmul.mubr.f32.gmra.mrb[0].mxu0 %v1286
        %v1523 = vpop.f32.mrb[0].mxu0
        %v1524 = vadd.f32 %v1310, %v1523
        %v1525 = vpop.f32.mrb[0].mxu0
        %1526 = vmatprep.mubr.f32.mxu0 0.0
        %1527 = vmatmul.mubr.f32.gmra.mrb[0].mxu0 %v1287
        %v1528 = vpop.f32.mrb[0].mxu0
        %v1529 = vadd.f32 %v1310, %v1528
        %v1530 = vpop.f32.mrb[0].mxu0
        %1531 = vmatprep.mubr.f32.mxu0 0.0
        %1532 = vmatmul.mubr.f32.gmra.mrb[0].mxu0 %v1288
        %v1533 = vpop.f32.mrb[0].mxu0
        %v1534 = vadd.f32 %v1310, %v1533
        %v1535 = vpop.f32.mrb[0].mxu0
        %1536 = vdwg.mxu0
        %1537 = vmax.xlane.f32.xlu0 %v1379
        %v1538 = vpop.xlane.xlu0 %1537
        %1539 = vmax.xlane.f32.xlu0 %v1384
        %v1540 = vpop.xlane.xlu0 %1539
        %1541 = vmax.xlane.f32.xlu0 %v1389
        %v1542 = vpop.xlane.xlu0 %1541
        %1543 = vmax.xlane.f32.xlu0 %v1394
        %v1544 = vpop.xlane.xlu0 %1543
        %1545 = vmax.xlane.f32.xlu0 %v1399
        %v1546 = vpop.xlane.xlu0 %1545
        %1547 = vmax.xlane.f32.xlu0 %v1404
        %v1548 = vpop.xlane.xlu0 %1547
        %1549 = vmax.xlane.f32.xlu0 %v1409
        %v1550 = vpop.xlane.xlu0 %1549
        %1551 = vmax.xlane.f32.xlu0 %v1414
        %v1552 = vpop.xlane.xlu0 %1551
        %1553 = vmax.xlane.f32.xlu0 %v1419
        %v1554 = vpop.xlane.xlu0 %1553
        %1555 = vmax.xlane.f32.xlu0 %v1424
        %v1556 = vpop.xlane.xlu0 %1555
        %1557 = vmax.xlane.f32.xlu0 %v1429
        %v1558 = vpop.xlane.xlu0 %1557
        %1559 = vmax.xlane.f32.xlu0 %v1434
        %v1560 = vpop.xlane.xlu0 %1559
        %1561 = vmax.xlane.f32.xlu0 %v1439
        %v1562 = vpop.xlane.xlu0 %1561
        %1563 = vmax.xlane.f32.xlu0 %v1444
        %v1564 = vpop.xlane.xlu0 %1563
        %1565 = vmax.xlane.f32.xlu0 %v1449
        %v1566 = vpop.xlane.xlu0 %1565
        %1567 = vmax.xlane.f32.xlu0 %v1454
        %v1568 = vpop.xlane.xlu0 %1567
        %1569 = vmax.xlane.f32.xlu0 %v1459
        %v1570 = vpop.xlane.xlu0 %1569
        %1571 = vmax.xlane.f32.xlu0 %v1464
        %v1572 = vpop.xlane.xlu0 %1571
        %1573 = vmax.xlane.f32.xlu0 %v1469
        %v1574 = vpop.xlane.xlu0 %1573
        %1575 = vmax.xlane.f32.xlu0 %v1474
        %v1576 = vpop.xlane.xlu0 %1575
        %1577 = vmax.xlane.f32.xlu0 %v1479
        %v1578 = vpop.xlane.xlu0 %1577
        %1579 = vmax.xlane.f32.xlu0 %v1484
        %v1580 = vpop.xlane.xlu0 %1579
        %1581 = vmax.xlane.f32.xlu0 %v1489
        %v1582 = vpop.xlane.xlu0 %1581
        %1583 = vmax.xlane.f32.xlu0 %v1494
        %v1584 = vpop.xlane.xlu0 %1583
        %1585 = vmax.xlane.f32.xlu0 %v1499
        %v1586 = vpop.xlane.xlu0 %1585
        %1587 = vmax.xlane.f32.xlu0 %v1504
        %v1588 = vpop.xlane.xlu0 %1587
        %1589 = vmax.xlane.f32.xlu0 %v1509
        %v1590 = vpop.xlane.xlu0 %1589
        %1591 = vmax.xlane.f32.xlu0 %v1514
        %v1592 = vpop.xlane.xlu0 %1591
        %1593 = vmax.xlane.f32.xlu0 %v1519
        %v1594 = vpop.xlane.xlu0 %1593
        %1595 = vmax.xlane.f32.xlu0 %v1524
        %v1596 = vpop.xlane.xlu0 %1595
        %1597 = vmax.xlane.f32.xlu0 %v1529
        %v1598 = vpop.xlane.xlu0 %1597
        %1599 = vmax.xlane.f32.xlu0 %v1534
        %v1600 = vpop.xlane.xlu0 %1599
        %v1601 = vsub.f32 %v1379, %v1538
        %v1602 = vsub.f32 %v1384, %v1540
        %v1603 = vsub.f32 %v1389, %v1542
        %v1604 = vsub.f32 %v1394, %v1544
        %v1605 = vsub.f32 %v1399, %v1546
        %v1606 = vsub.f32 %v1404, %v1548
        %v1607 = vsub.f32 %v1409, %v1550
        %v1608 = vsub.f32 %v1414, %v1552
        %v1609 = vsub.f32 %v1419, %v1554
        %v1610 = vsub.f32 %v1424, %v1556
        %v1611 = vsub.f32 %v1429, %v1558
        %v1612 = vsub.f32 %v1434, %v1560
        %v1613 = vsub.f32 %v1439, %v1562
        %v1614 = vsub.f32 %v1444, %v1564
        %v1615 = vsub.f32 %v1449, %v1566
        %v1616 = vsub.f32 %v1454, %v1568
        %v1617 = vsub.f32 %v1459, %v1570
        %v1618 = vsub.f32 %v1464, %v1572
        %v1619 = vsub.f32 %v1469, %v1574
        %v1620 = vsub.f32 %v1474, %v1576
        %v1621 = vsub.f32 %v1479, %v1578
        %v1622 = vsub.f32 %v1484, %v1580
        %v1623 = vsub.f32 %v1489, %v1582
        %v1624 = vsub.f32 %v1494, %v1584
        %v1625 = vsub.f32 %v1499, %v1586
        %v1626 = vsub.f32 %v1504, %v1588
        %v1627 = vsub.f32 %v1509, %v1590
        %v1628 = vsub.f32 %v1514, %v1592
        %v1629 = vsub.f32 %v1519, %v1594
        %v1630 = vsub.f32 %v1524, %v1596
        %v1631 = vsub.f32 %v1529, %v1598
        %v1632 = vsub.f32 %v1534, %v1600
        %v1633 = vmul.f32 %v1601, 1.442695
        %v1634 = vpow.pop %v1633
        %v1635 = vmul.f32 %v1602, 1.442695
        %v1636 = vpow.pop %v1635
        %v1637 = vmul.f32 %v1603, 1.442695
        %v1638 = vpow.pop %v1637
        %v1639 = vmul.f32 %v1604, 1.442695
        %v1640 = vpow.pop %v1639
        %v1641 = vmul.f32 %v1605, 1.442695
        %v1642 = vpow.pop %v1641
        %v1643 = vmul.f32 %v1606, 1.442695
        %v1644 = vpow.pop %v1643
        %v1645 = vmul.f32 %v1607, 1.442695
        %v1646 = vpow.pop %v1645
        %v1647 = vmul.f32 %v1608, 1.442695
        %v1648 = vpow.pop %v1647
        %v1649 = vmul.f32 %v1609, 1.442695
        %v1650 = vpow.pop %v1649
        %v1651 = vmul.f32 %v1610, 1.442695
        %v1652 = vpow.pop %v1651
        %v1653 = vmul.f32 %v1611, 1.442695
        %v1654 = vpow.pop %v1653
        %v1655 = vmul.f32 %v1612, 1.442695
        %v1656 = vpow.pop %v1655
        %v1657 = vmul.f32 %v1613, 1.442695
        %v1658 = vpow.pop %v1657
        %v1659 = vmul.f32 %v1614, 1.442695
        %v1660 = vpow.pop %v1659
        %v1661 = vmul.f32 %v1615, 1.442695
        %v1662 = vpow.pop %v1661
        %v1663 = vmul.f32 %v1616, 1.442695
        %v1664 = vpow.pop %v1663
        %v1665 = vmul.f32 %v1617, 1.442695
        %v1666 = vpow.pop %v1665
        %v1667 = vmul.f32 %v1618, 1.442695
        %v1668 = vpow.pop %v1667
        %v1669 = vmul.f32 %v1619, 1.442695
        %v1670 = vpow.pop %v1669
        %v1671 = vmul.f32 %v1620, 1.442695
        %v1672 = vpow.pop %v1671
        %v1673 = vmul.f32 %v1621, 1.442695
        %v1674 = vpow.pop %v1673
        %v1675 = vmul.f32 %v1622, 1.442695
        %v1676 = vpow.pop %v1675
        %v1677 = vmul.f32 %v1623, 1.442695
        %v1678 = vpow.pop %v1677
        %v1679 = vmul.f32 %v1624, 1.442695
        %v1680 = vpow.pop %v1679
        %v1681 = vmul.f32 %v1625, 1.442695
        %v1682 = vpow.pop %v1681
        %v1683 = vmul.f32 %v1626, 1.442695
        %v1684 = vpow.pop %v1683
        %v1685 = vmul.f32 %v1627, 1.442695
        %v1686 = vpow.pop %v1685
        %v1687 = vmul.f32 %v1628, 1.442695
        %v1688 = vpow.pop %v1687
        %v1689 = vmul.f32 %v1629, 1.442695
        %v1690 = vpow.pop %v1689
        %v1691 = vmul.f32 %v1630, 1.442695
        %v1692 = vpow.pop %v1691
        %v1693 = vmul.f32 %v1631, 1.442695
        %v1694 = vpow.pop %v1693
        %v1695 = vmul.f32 %v1632, 1.442695
        %v1696 = vpow.pop %v1695
        %1697 = vadd.xlane.f32.xlu0 %v1634
        %v1698 = vpop.xlane.xlu0 %1697
        %1699 = vadd.xlane.f32.xlu0 %v1636
        %v1700 = vpop.xlane.xlu0 %1699
        %1701 = vadd.xlane.f32.xlu0 %v1638
        %v1702 = vpop.xlane.xlu0 %1701
        %1703 = vadd.xlane.f32.xlu0 %v1640
        %v1704 = vpop.xlane.xlu0 %1703
        %1705 = vadd.xlane.f32.xlu0 %v1642
        %v1706 = vpop.xlane.xlu0 %1705
        %1707 = vadd.xlane.f32.xlu0 %v1644
        %v1708 = vpop.xlane.xlu0 %1707
        %1709 = vadd.xlane.f32.xlu0 %v1646
        %v1710 = vpop.xlane.xlu0 %1709
        %1711 = vadd.xlane.f32.xlu0 %v1648
        %v1712 = vpop.xlane.xlu0 %1711
        %1713 = vadd.xlane.f32.xlu0 %v1650
        %v1714 = vpop.xlane.xlu0 %1713
        %1715 = vadd.xlane.f32.xlu0 %v1652
        %v1716 = vpop.xlane.xlu0 %1715
        %1717 = vadd.xlane.f32.xlu0 %v1654
        %v1718 = vpop.xlane.xlu0 %1717
        %1719 = vadd.xlane.f32.xlu0 %v1656
        %v1720 = vpop.xlane.xlu0 %1719
        %1721 = vadd.xlane.f32.xlu0 %v1658
        %v1722 = vpop.xlane.xlu0 %1721
        %1723 = vadd.xlane.f32.xlu0 %v1660
        %v1724 = vpop.xlane.xlu0 %1723
        %1725 = vadd.xlane.f32.xlu0 %v1662
        %v1726 = vpop.xlane.xlu0 %1725
        %1727 = vadd.xlane.f32.xlu0 %v1664
        %v1728 = vpop.xlane.xlu0 %1727
        %1729 = vadd.xlane.f32.xlu0 %v1666
        %v1730 = vpop.xlane.xlu0 %1729
        %1731 = vadd.xlane.f32.xlu0 %v1668
        %v1732 = vpop.xlane.xlu0 %1731
        %1733 = vadd.xlane.f32.xlu0 %v1670
        %v1734 = vpop.xlane.xlu0 %1733
        %1735 = vadd.xlane.f32.xlu0 %v1672
        %v1736 = vpop.xlane.xlu0 %1735
        %1737 = vadd.xlane.f32.xlu0 %v1674
        %v1738 = vpop.xlane.xlu0 %1737
        %1739 = vadd.xlane.f32.xlu0 %v1676
        %v1740 = vpop.xlane.xlu0 %1739
        %1741 = vadd.xlane.f32.xlu0 %v1678
        %v1742 = vpop.xlane.xlu0 %1741
        %1743 = vadd.xlane.f32.xlu0 %v1680
        %v1744 = vpop.xlane.xlu0 %1743
        %1745 = vadd.xlane.f32.xlu0 %v1682
        %v1746 = vpop.xlane.xlu0 %1745
        %1747 = vadd.xlane.f32.xlu0 %v1684
        %v1748 = vpop.xlane.xlu0 %1747
        %1749 = vadd.xlane.f32.xlu0 %v1686
        %v1750 = vpop.xlane.xlu0 %1749
        %1751 = vadd.xlane.f32.xlu0 %v1688
        %v1752 = vpop.xlane.xlu0 %1751
        %1753 = vadd.xlane.f32.xlu0 %v1690
        %v1754 = vpop.xlane.xlu0 %1753
        %1755 = vadd.xlane.f32.xlu0 %v1692
        %v1756 = vpop.xlane.xlu0 %1755
        %1757 = vadd.xlane.f32.xlu0 %v1694
        %v1758 = vpop.xlane.xlu0 %1757
        %1759 = vadd.xlane.f32.xlu0 %v1696
        %v1760 = vpop.xlane.xlu0 %1759
        %v1761 = vrcp.pop %v1698
        %v1762 = vrcp.pop %v1700
        %v1763 = vrcp.pop %v1702
        %v1764 = vrcp.pop %v1704
        %v1765 = vrcp.pop %v1706
        %v1766 = vrcp.pop %v1708
        %v1767 = vrcp.pop %v1710
        %v1768 = vrcp.pop %v1712
        %v1769 = vrcp.pop %v1714
        %v1770 = vrcp.pop %v1716
        %v1771 = vrcp.pop %v1718
        %v1772 = vrcp.pop %v1720
        %v1773 = vrcp.pop %v1722
        %v1774 = vrcp.pop %v1724
        %v1775 = vrcp.pop %v1726
        %v1776 = vrcp.pop %v1728
        %v1777 = vrcp.pop %v1730
        %v1778 = vrcp.pop %v1732
        %v1779 = vrcp.pop %v1734
        %v1780 = vrcp.pop %v1736
        %v1781 = vrcp.pop %v1738
        %v1782 = vrcp.pop %v1740
        %v1783 = vrcp.pop %v1742
        %v1784 = vrcp.pop %v1744
        %v1785 = vrcp.pop %v1746
        %v1786 = vrcp.pop %v1748
        %v1787 = vrcp.pop %v1750
        %v1788 = vrcp.pop %v1752
        %v1789 = vrcp.pop %v1754
        %v1790 = vrcp.pop %v1756
        %v1791 = vrcp.pop %v1758
        %v1792 = vrcp.pop %v1760
        %v1793 = vmul.f32 %v1634, %v1761
        %v1794 = vmul.f32 %v1636, %v1762
        %v1795 = vmul.f32 %v1638, %v1763
        %v1796 = vmul.f32 %v1640, %v1764
        %v1797 = vmul.f32 %v1642, %v1765
        %v1798 = vmul.f32 %v1644, %v1766
        %v1799 = vmul.f32 %v1646, %v1767
        %v1800 = vmul.f32 %v1648, %v1768
        %v1801 = vmul.f32 %v1650, %v1769
        %v1802 = vmul.f32 %v1652, %v1770
        %v1803 = vmul.f32 %v1654, %v1771
        %v1804 = vmul.f32 %v1656, %v1772
        %v1805 = vmul.f32 %v1658, %v1773
        %v1806 = vmul.f32 %v1660, %v1774
        %v1807 = vmul.f32 %v1662, %v1775
        %v1808 = vmul.f32 %v1664, %v1776
        %v1809 = vmul.f32 %v1666, %v1777
        %v1810 = vmul.f32 %v1668, %v1778
        %v1811 = vmul.f32 %v1670, %v1779
        %v1812 = vmul.f32 %v1672, %v1780
        %v1813 = vmul.f32 %v1674, %v1781
        %v1814 = vmul.f32 %v1676, %v1782
        %v1815 = vmul.f32 %v1678, %v1783
        %v1816 = vmul.f32 %v1680, %v1784
        %v1817 = vmul.f32 %v1682, %v1785
        %v1818 = vmul.f32 %v1684, %v1786
        %v1819 = vmul.f32 %v1686, %v1787
        %v1820 = vmul.f32 %v1688, %v1788
        %v1821 = vmul.f32 %v1690, %v1789
        %v1822 = vmul.f32 %v1692, %v1790
        %v1823 = vmul.f32 %v1694, %v1791
        %v1824 = vmul.f32 %v1696, %v1792
        %1825 = vst [vmem:[%s467] sm:$0xff] %v1793
        %1826 = vst [vmem:[%s467 + $0x8] sm:$0xff] %v1794
        %1827 = vst [vmem:[%s467 + $0x10] sm:$0xff] %v1795
        %1828 = vst [vmem:[%s467 + $0x18] sm:$0xff] %v1796
        %1829 = vst [vmem:[%s467 + $0x20] sm:$0xff] %v1797
        %1830 = vst [vmem:[%s467 + $0x28] sm:$0xff] %v1798
        %1831 = vst [vmem:[%s467 + $0x30] sm:$0xff] %v1799
        %1832 = vst [vmem:[%s467 + $0x38] sm:$0xff] %v1800
        %1833 = vst [vmem:[%s467 + $0x40] sm:$0xff] %v1801
        %1834 = vst [vmem:[%s467 + $0x48] sm:$0xff] %v1802
        %1835 = vst [vmem:[%s467 + $0x50] sm:$0xff] %v1803
        %1836 = vst [vmem:[%s467 + $0x58] sm:$0xff] %v1804
        %1837 = vst [vmem:[%s467 + $0x60] sm:$0xff] %v1805
        %1838 = vst [vmem:[%s467 + $0x68] sm:$0xff] %v1806
        %1839 = vst [vmem:[%s467 + $0x70] sm:$0xff] %v1807
        %1840 = vst [vmem:[%s467 + $0x78] sm:$0xff] %v1808
        %1841 = vst [vmem:[%s467 + $0x80] sm:$0xff] %v1809
        %1842 = vst [vmem:[%s467 + $0x88] sm:$0xff] %v1810
        %1843 = vst [vmem:[%s467 + $0x90] sm:$0xff] %v1811
        %1844 = vst [vmem:[%s467 + $0x98] sm:$0xff] %v1812
        %1845 = vst [vmem:[%s467 + $0xa0] sm:$0xff] %v1813
        %1846 = vst [vmem:[%s467 + $0xa8] sm:$0xff] %v1814
        %1847 = vst [vmem:[%s467 + $0xb0] sm:$0xff] %v1815
        %1848 = vst [vmem:[%s467 + $0xb8] sm:$0xff] %v1816
        %1849 = vst [vmem:[%s467 + $0xc0] sm:$0xff] %v1817
        %1850 = vst [vmem:[%s467 + $0xc8] sm:$0xff] %v1818
        %1851 = vst [vmem:[%s467 + $0xd0] sm:$0xff] %v1819
        %1852 = vst [vmem:[%s467 + $0xd8] sm:$0xff] %v1820
        %1853 = vst [vmem:[%s467 + $0xe0] sm:$0xff] %v1821
        %1854 = vst [vmem:[%s467 + $0xe8] sm:$0xff] %v1822
        %1855 = vst [vmem:[%s467 + $0xf0] sm:$0xff] %v1823
        %1856 = vst [vmem:[%s467 + $0xf8] sm:$0xff] %v1824
        %v1857 = vld [vmem:[%s7] sm:$0xff]
        %v1858 = vld [vmem:[%s7 + $0x8] sm:$0xff]
        %v1859 = vld [vmem:[%s7 + $0x10] sm:$0xff]
        %v1860 = vld [vmem:[%s7 + $0x18] sm:$0xff]
        %v1861 = vld [vmem:[%s7 + $0x20] sm:$0xff]
        %v1862 = vld [vmem:[%s7 + $0x28] sm:$0xff]
        %v1863 = vld [vmem:[%s7 + $0x30] sm:$0xff]
        %v1864 = vld [vmem:[%s7 + $0x38] sm:$0xff]
        %v1865 = vld [vmem:[%s7 + $0x40] sm:$0xff]
        %v1866 = vld [vmem:[%s7 + $0x48] sm:$0xff]
        %v1867 = vld [vmem:[%s7 + $0x50] sm:$0xff]
        %v1868 = vld [vmem:[%s7 + $0x58] sm:$0xff]
        %v1869 = vld [vmem:[%s7 + $0x60] sm:$0xff]
        %v1870 = vld [vmem:[%s7 + $0x68] sm:$0xff]
        %v1871 = vld [vmem:[%s7 + $0x70] sm:$0xff]
        %v1872 = vld [vmem:[%s7 + $0x78] sm:$0xff]
        %v1873 = vld [vmem:[%s8] sm:$0x1]
        %v1875 = vlaneseq
        %v1876 = vshrl.u32 %v1875, 7
        %v1877 = vsub.s32 0, %v1876
        %v1878 = vrot.slane %v1873, %v1877
        %1880 = vmatprep.subr.mxu0 0.0
        %1881 = vmatpush1.msra.mxu0 %v1857
        %1882 = vmatprep.subr.mxu0 0.0
        %1883 = vmatpush1.msra.mxu0 %v1858
        %1884 = vmatprep.subr.mxu0 0.0
        %1885 = vmatpush1.msra.mxu0 %v1859
        %1886 = vmatprep.subr.mxu0 0.0
        %1887 = vmatpush1.msra.mxu0 %v1860
        %1888 = vmatprep.subr.mxu0 0.0
        %1889 = vmatpush1.msra.mxu0 %v1861
        %1890 = vmatprep.subr.mxu0 0.0
        %1891 = vmatpush1.msra.mxu0 %v1862
        %1892 = vmatprep.subr.mxu0 0.0
        %1893 = vmatpush1.msra.mxu0 %v1863
        %1894 = vmatprep.subr.mxu0 0.0
        %1895 = vmatpush1.msra.mxu0 %v1864
        %1896 = vmatprep.subr.mxu0 0.0
        %1897 = vmatpush1.msra.mxu0 %v1865
        %1898 = vmatprep.subr.mxu0 0.0
        %1899 = vmatpush1.msra.mxu0 %v1866
        %1900 = vmatprep.subr.mxu0 0.0
        %1901 = vmatpush1.msra.mxu0 %v1867
        %1902 = vmatprep.subr.mxu0 0.0
        %1903 = vmatpush1.msra.mxu0 %v1868
        %1904 = vmatprep.subr.mxu0 0.0
        %1905 = vmatpush1.msra.mxu0 %v1869
        %1906 = vmatprep.subr.mxu0 0.0
        %1907 = vmatpush1.msra.mxu0 %v1870
        %1908 = vmatprep.subr.mxu0 0.0
        %1909 = vmatpush1.msra.mxu0 %v1871
        %1910 = vmatprep.subr.mxu0 0.0
        %1911 = vmatpush1.msra.mxu0 %v1872
        %1912 = vmatprep.subr.mxu0 0.0
        %1913 = vmatpush1.msra.mxu0 0.0
        %1914 = vmatprep.subr.mxu0 0.0
        %1915 = vmatpush1.msra.mxu0 0.0
        %1916 = vmatprep.subr.mxu0 0.0
        %1917 = vmatpush1.msra.mxu0 0.0
        %1918 = vmatprep.subr.mxu0 0.0
        %1919 = vmatpush1.msra.mxu0 0.0
        %1920 = vmatprep.subr.mxu0 0.0
        %1921 = vmatpush1.msra.mxu0 0.0
        %1922 = vmatprep.subr.mxu0 0.0
        %1923 = vmatpush1.msra.mxu0 0.0
        %1924 = vmatprep.subr.mxu0 0.0
        %1925 = vmatpush1.msra.mxu0 0.0
        %1926 = vmatprep.subr.mxu0 0.0
        %1927 = vmatpush1.msra.mxu0 0.0
        %1928 = vmatprep.subr.mxu0 0.0
        %1929 = vmatpush1.msra.mxu0 0.0
        %1930 = vmatprep.subr.mxu0 0.0
        %1931 = vmatpush1.msra.mxu0 0.0
        %1932 = vmatprep.subr.mxu0 0.0
        %1933 = vmatpush1.msra.mxu0 0.0
        %1934 = vmatprep.subr.mxu0 0.0
        %1935 = vmatpush1.msra.mxu0 0.0
        %1936 = vmatprep.subr.mxu0 0.0
        %1937 = vmatpush1.msra.mxu0 0.0
        %1938 = vmatprep.subr.mxu0 0.0
        %1939 = vmatpush1.msra.mxu0 0.0
        %1940 = vmatprep.subr.mxu0 0.0
        %1941 = vmatpush1.msra.mxu0 0.0
        %1942 = vmatprep.subr.mxu0 0.0
        %1943 = vmatpush1.msra.mxu0 0.0
        %1944 = vmatprep.mubr.f32.mxu0 0.0
        %1945 = vmatmul.mubr.f32.gmra.mrb[0].mxu0 %v1793
        %v1946 = vpop.f32.mrb[0].mxu0
        %v1947 = vadd.f32 %v1878, %v1946
        %v1948 = vpop.f32.mrb[0].mxu0
        %1949 = vmatprep.mubr.f32.mxu0 0.0
        %1950 = vmatmul.mubr.f32.gmra.mrb[0].mxu0 %v1794
        %v1951 = vpop.f32.mrb[0].mxu0
        %v1952 = vadd.f32 %v1878, %v1951
        %v1953 = vpop.f32.mrb[0].mxu0
        %1954 = vmatprep.mubr.f32.mxu0 0.0
        %1955 = vmatmul.mubr.f32.gmra.mrb[0].mxu0 %v1795
        %v1956 = vpop.f32.mrb[0].mxu0
        %v1957 = vadd.f32 %v1878, %v1956
        %v1958 = vpop.f32.mrb[0].mxu0
        %1959 = vmatprep.mubr.f32.mxu0 0.0
        %1960 = vmatmul.mubr.f32.gmra.mrb[0].mxu0 %v1796
        %v1961 = vpop.f32.mrb[0].mxu0
        %v1962 = vadd.f32 %v1878, %v1961
        %v1963 = vpop.f32.mrb[0].mxu0
        %1964 = vmatprep.mubr.f32.mxu0 0.0
        %1965 = vmatmul.mubr.f32.gmra.mrb[0].mxu0 %v1797
        %v1966 = vpop.f32.mrb[0].mxu0
        %v1967 = vadd.f32 %v1878, %v1966
        %v1968 = vpop.f32.mrb[0].mxu0
        %1969 = vmatprep.mubr.f32.mxu0 0.0
        %1970 = vmatmul.mubr.f32.gmra.mrb[0].mxu0 %v1798
        %v1971 = vpop.f32.mrb[0].mxu0
        %v1972 = vadd.f32 %v1878, %v1971
        %v1973 = vpop.f32.mrb[0].mxu0
        %1974 = vmatprep.mubr.f32.mxu0 0.0
        %1975 = vmatmul.mubr.f32.gmra.mrb[0].mxu0 %v1799
        %v1976 = vpop.f32.mrb[0].mxu0
        %v1977 = vadd.f32 %v1878, %v1976
        %v1978 = vpop.f32.mrb[0].mxu0
        %1979 = vmatprep.mubr.f32.mxu0 0.0
        %1980 = vmatmul.mubr.f32.gmra.mrb[0].mxu0 %v1800
        %v1981 = vpop.f32.mrb[0].mxu0
        %v1982 = vadd.f32 %v1878, %v1981
        %v1983 = vpop.f32.mrb[0].mxu0
        %1984 = vmatprep.mubr.f32.mxu0 0.0
        %1985 = vmatmul.mubr.f32.gmra.mrb[0].mxu0 %v1801
        %v1986 = vpop.f32.mrb[0].mxu0
        %v1987 = vadd.f32 %v1878, %v1986
        %v1988 = vpop.f32.mrb[0].mxu0
        %1989 = vmatprep.mubr.f32.mxu0 0.0
        %1990 = vmatmul.mubr.f32.gmra.mrb[0].mxu0 %v1802
        %v1991 = vpop.f32.mrb[0].mxu0
        %v1992 = vadd.f32 %v1878, %v1991
        %v1993 = vpop.f32.mrb[0].mxu0
        %1994 = vmatprep.mubr.f32.mxu0 0.0
        %1995 = vmatmul.mubr.f32.gmra.mrb[0].mxu0 %v1803
        %v1996 = vpop.f32.mrb[0].mxu0
        %v1997 = vadd.f32 %v1878, %v1996
        %v1998 = vpop.f32.mrb[0].mxu0
        %1999 = vmatprep.mubr.f32.mxu0 0.0
        %2000 = vmatmul.mubr.f32.gmra.mrb[0].mxu0 %v1804
        %v2001 = vpop.f32.mrb[0].mxu0
        %v2002 = vadd.f32 %v1878, %v2001
        %v2003 = vpop.f32.mrb[0].mxu0
        %2004 = vmatprep.mubr.f32.mxu0 0.0
        %2005 = vmatmul.mubr.f32.gmra.mrb[0].mxu0 %v1805
        %v2006 = vpop.f32.mrb[0].mxu0
        %v2007 = vadd.f32 %v1878, %v2006
        %v2008 = vpop.f32.mrb[0].mxu0
        %2009 = vmatprep.mubr.f32.mxu0 0.0
        %2010 = vmatmul.mubr.f32.gmra.mrb[0].mxu0 %v1806
        %v2011 = vpop.f32.mrb[0].mxu0
        %v2012 = vadd.f32 %v1878, %v2011
        %v2013 = vpop.f32.mrb[0].mxu0
        %2014 = vmatprep.mubr.f32.mxu0 0.0
        %2015 = vmatmul.mubr.f32.gmra.mrb[0].mxu0 %v1807
        %v2016 = vpop.f32.mrb[0].mxu0
        %v2017 = vadd.f32 %v1878, %v2016
        %v2018 = vpop.f32.mrb[0].mxu0
        %2019 = vmatprep.mubr.f32.mxu0 0.0
        %2020 = vmatmul.mubr.f32.gmra.mrb[0].mxu0 %v1808
        %v2021 = vpop.f32.mrb[0].mxu0
        %v2022 = vadd.f32 %v1878, %v2021
        %v2023 = vpop.f32.mrb[0].mxu0
        %2024 = vmatprep.mubr.f32.mxu0 0.0
        %2025 = vmatmul.mubr.f32.gmra.mrb[0].mxu0 %v1809
        %v2026 = vpop.f32.mrb[0].mxu0
        %v2027 = vadd.f32 %v1878, %v2026
        %v2028 = vpop.f32.mrb[0].mxu0
        %2029 = vmatprep.mubr.f32.mxu0 0.0
        %2030 = vmatmul.mubr.f32.gmra.mrb[0].mxu0 %v1810
        %v2031 = vpop.f32.mrb[0].mxu0
        %v2032 = vadd.f32 %v1878, %v2031
        %v2033 = vpop.f32.mrb[0].mxu0
        %2034 = vmatprep.mubr.f32.mxu0 0.0
        %2035 = vmatmul.mubr.f32.gmra.mrb[0].mxu0 %v1811
        %v2036 = vpop.f32.mrb[0].mxu0
        %v2037 = vadd.f32 %v1878, %v2036
        %v2038 = vpop.f32.mrb[0].mxu0
        %2039 = vmatprep.mubr.f32.mxu0 0.0
        %2040 = vmatmul.mubr.f32.gmra.mrb[0].mxu0 %v1812
        %v2041 = vpop.f32.mrb[0].mxu0
        %v2042 = vadd.f32 %v1878, %v2041
        %v2043 = vpop.f32.mrb[0].mxu0
        %2044 = vmatprep.mubr.f32.mxu0 0.0
        %2045 = vmatmul.mubr.f32.gmra.mrb[0].mxu0 %v1813
        %v2046 = vpop.f32.mrb[0].mxu0
        %v2047 = vadd.f32 %v1878, %v2046
        %v2048 = vpop.f32.mrb[0].mxu0
        %2049 = vmatprep.mubr.f32.mxu0 0.0
        %2050 = vmatmul.mubr.f32.gmra.mrb[0].mxu0 %v1814
        %v2051 = vpop.f32.mrb[0].mxu0
        %v2052 = vadd.f32 %v1878, %v2051
        %v2053 = vpop.f32.mrb[0].mxu0
        %2054 = vmatprep.mubr.f32.mxu0 0.0
        %2055 = vmatmul.mubr.f32.gmra.mrb[0].mxu0 %v1815
        %v2056 = vpop.f32.mrb[0].mxu0
        %v2057 = vadd.f32 %v1878, %v2056
        %v2058 = vpop.f32.mrb[0].mxu0
        %2059 = vmatprep.mubr.f32.mxu0 0.0
        %2060 = vmatmul.mubr.f32.gmra.mrb[0].mxu0 %v1816
        %v2061 = vpop.f32.mrb[0].mxu0
        %v2062 = vadd.f32 %v1878, %v2061
        %v2063 = vpop.f32.mrb[0].mxu0
        %2064 = vmatprep.mubr.f32.mxu0 0.0
        %2065 = vmatmul.mubr.f32.gmra.mrb[0].mxu0 %v1817
        %v2066 = vpop.f32.mrb[0].mxu0
        %v2067 = vadd.f32 %v1878, %v2066
        %v2068 = vpop.f32.mrb[0].mxu0
        %2069 = vmatprep.mubr.f32.mxu0 0.0
        %2070 = vmatmul.mubr.f32.gmra.mrb[0].mxu0 %v1818
        %v2071 = vpop.f32.mrb[0].mxu0
        %v2072 = vadd.f32 %v1878, %v2071
        %v2073 = vpop.f32.mrb[0].mxu0
        %2074 = vmatprep.mubr.f32.mxu0 0.0
        %2075 = vmatmul.mubr.f32.gmra.mrb[0].mxu0 %v1819
        %v2076 = vpop.f32.mrb[0].mxu0
        %v2077 = vadd.f32 %v1878, %v2076
        %v2078 = vpop.f32.mrb[0].mxu0
        %2079 = vmatprep.mubr.f32.mxu0 0.0
        %2080 = vmatmul.mubr.f32.gmra.mrb[0].mxu0 %v1820
        %v2081 = vpop.f32.mrb[0].mxu0
        %v2082 = vadd.f32 %v1878, %v2081
        %v2083 = vpop.f32.mrb[0].mxu0
        %2084 = vmatprep.mubr.f32.mxu0 0.0
        %2085 = vmatmul.mubr.f32.gmra.mrb[0].mxu0 %v1821
        %v2086 = vpop.f32.mrb[0].mxu0
        %v2087 = vadd.f32 %v1878, %v2086
        %v2088 = vpop.f32.mrb[0].mxu0
        %2089 = vmatprep.mubr.f32.mxu0 0.0
        %2090 = vmatmul.mubr.f32.gmra.mrb[0].mxu0 %v1822
        %v2091 = vpop.f32.mrb[0].mxu0
        %v2092 = vadd.f32 %v1878, %v2091
        %v2093 = vpop.f32.mrb[0].mxu0
        %2094 = vmatprep.mubr.f32.mxu0 0.0
        %2095 = vmatmul.mubr.f32.gmra.mrb[0].mxu0 %v1823
        %v2096 = vpop.f32.mrb[0].mxu0
        %v2097 = vadd.f32 %v1878, %v2096
        %v2098 = vpop.f32.mrb[0].mxu0
        %2099 = vmatprep.mubr.f32.mxu0 0.0
        %2100 = vmatmul.mubr.f32.gmra.mrb[0].mxu0 %v1824
        %v2101 = vpop.f32.mrb[0].mxu0
        %v2102 = vadd.f32 %v1878, %v2101
        %v2103 = vpop.f32.mrb[0].mxu0
        %2104 = vdwg.mxu0
        %vm2105 = vcmp.gt.f32.partialorder %v1947, 0.0
        %vm2106 = vcmp.gt.f32.partialorder %v1952, 0.0
        %vm2107 = vcmp.gt.f32.partialorder %v1957, 0.0
        %vm2108 = vcmp.gt.f32.partialorder %v1962, 0.0
        %vm2109 = vcmp.gt.f32.partialorder %v1967, 0.0
        %vm2110 = vcmp.gt.f32.partialorder %v1972, 0.0
        %vm2111 = vcmp.gt.f32.partialorder %v1977, 0.0
        %vm2112 = vcmp.gt.f32.partialorder %v1982, 0.0
        %vm2113 = vcmp.gt.f32.partialorder %v1987, 0.0
        %vm2114 = vcmp.gt.f32.partialorder %v1992, 0.0
        %vm2115 = vcmp.gt.f32.partialorder %v1997, 0.0
        %vm2116 = vcmp.gt.f32.partialorder %v2002, 0.0
        %vm2117 = vcmp.gt.f32.partialorder %v2007, 0.0
        %vm2118 = vcmp.gt.f32.partialorder %v2012, 0.0
        %vm2119 = vcmp.gt.f32.partialorder %v2017, 0.0
        %vm2120 = vcmp.gt.f32.partialorder %v2022, 0.0
        %vm2121 = vcmp.gt.f32.partialorder %v2027, 0.0
        %vm2122 = vcmp.gt.f32.partialorder %v2032, 0.0
        %vm2123 = vcmp.gt.f32.partialorder %v2037, 0.0
        %vm2124 = vcmp.gt.f32.partialorder %v2042, 0.0
        %vm2125 = vcmp.gt.f32.partialorder %v2047, 0.0
        %vm2126 = vcmp.gt.f32.partialorder %v2052, 0.0
        %vm2127 = vcmp.gt.f32.partialorder %v2057, 0.0
        %vm2128 = vcmp.gt.f32.partialorder %v2062, 0.0
        %vm2129 = vcmp.gt.f32.partialorder %v2067, 0.0
        %vm2130 = vcmp.gt.f32.partialorder %v2072, 0.0
        %vm2131 = vcmp.gt.f32.partialorder %v2077, 0.0
        %vm2132 = vcmp.gt.f32.partialorder %v2082, 0.0
        %vm2133 = vcmp.gt.f32.partialorder %v2087, 0.0
        %vm2134 = vcmp.gt.f32.partialorder %v2092, 0.0
        %vm2135 = vcmp.gt.f32.partialorder %v2097, 0.0
        %vm2136 = vcmp.gt.f32.partialorder %v2102, 0.0
        %v2137 = vmul.f32 %v1947, 0.01
        %v2138 = vmul.f32 %v1952, 0.01
        %v2139 = vmul.f32 %v1957, 0.01
        %v2140 = vmul.f32 %v1962, 0.01
        %v2141 = vmul.f32 %v1967, 0.01
        %v2142 = vmul.f32 %v1972, 0.01
        %v2143 = vmul.f32 %v1977, 0.01
        %v2144 = vmul.f32 %v1982, 0.01
        %v2145 = vmul.f32 %v1987, 0.01
        %v2146 = vmul.f32 %v1992, 0.01
        %v2147 = vmul.f32 %v1997, 0.01
        %v2148 = vmul.f32 %v2002, 0.01
        %v2149 = vmul.f32 %v2007, 0.01
        %v2150 = vmul.f32 %v2012, 0.01
        %v2151 = vmul.f32 %v2017, 0.01
        %v2152 = vmul.f32 %v2022, 0.01
        %v2153 = vmul.f32 %v2027, 0.01
        %v2154 = vmul.f32 %v2032, 0.01
        %v2155 = vmul.f32 %v2037, 0.01
        %v2156 = vmul.f32 %v2042, 0.01
        %v2157 = vmul.f32 %v2047, 0.01
        %v2158 = vmul.f32 %v2052, 0.01
        %v2159 = vmul.f32 %v2057, 0.01
        %v2160 = vmul.f32 %v2062, 0.01
        %v2161 = vmul.f32 %v2067, 0.01
        %v2162 = vmul.f32 %v2072, 0.01
        %v2163 = vmul.f32 %v2077, 0.01
        %v2164 = vmul.f32 %v2082, 0.01
        %v2165 = vmul.f32 %v2087, 0.01
        %v2166 = vmul.f32 %v2092, 0.01
        %v2167 = vmul.f32 %v2097, 0.01
        %v2168 = vmul.f32 %v2102, 0.01
        %v2169 = vsel %vm2105, %v1947, %v2137
        %v2170 = vsel %vm2106, %v1952, %v2138
        %v2171 = vsel %vm2107, %v1957, %v2139
        %v2172 = vsel %vm2108, %v1962, %v2140
        %v2173 = vsel %vm2109, %v1967, %v2141
        %v2174 = vsel %vm2110, %v1972, %v2142
        %v2175 = vsel %vm2111, %v1977, %v2143
        %v2176 = vsel %vm2112, %v1982, %v2144
        %v2177 = vsel %vm2113, %v1987, %v2145
        %v2178 = vsel %vm2114, %v1992, %v2146
        %v2179 = vsel %vm2115, %v1997, %v2147
        %v2180 = vsel %vm2116, %v2002, %v2148
        %v2181 = vsel %vm2117, %v2007, %v2149
        %v2182 = vsel %vm2118, %v2012, %v2150
        %v2183 = vsel %vm2119, %v2017, %v2151
        %v2184 = vsel %vm2120, %v2022, %v2152
        %v2185 = vsel %vm2121, %v2027, %v2153
        %v2186 = vsel %vm2122, %v2032, %v2154
        %v2187 = vsel %vm2123, %v2037, %v2155
        %v2188 = vsel %vm2124, %v2042, %v2156
        %v2189 = vsel %vm2125, %v2047, %v2157
        %v2190 = vsel %vm2126, %v2052, %v2158
        %v2191 = vsel %vm2127, %v2057, %v2159
        %v2192 = vsel %vm2128, %v2062, %v2160
        %v2193 = vsel %vm2129, %v2067, %v2161
        %v2194 = vsel %vm2130, %v2072, %v2162
        %v2195 = vsel %vm2131, %v2077, %v2163
        %v2196 = vsel %vm2132, %v2082, %v2164
        %v2197 = vsel %vm2133, %v2087, %v2165
        %v2198 = vsel %vm2134, %v2092, %v2166
        %v2199 = vsel %vm2135, %v2097, %v2167
        %v2200 = vsel %vm2136, %v2102, %v2168
        %v2201 = vld [vmem:[%s9] sm:$0xff]
        %v2202 = vld [vmem:[%s9 + $0x8] sm:$0xff]
        %v2203 = vld [vmem:[%s9 + $0x10] sm:$0xff]
        %v2204 = vld [vmem:[%s9 + $0x18] sm:$0xff]
        %v2205 = vld [vmem:[%s9 + $0x20] sm:$0xff]
        %v2206 = vld [vmem:[%s9 + $0x28] sm:$0xff]
        %v2207 = vld [vmem:[%s9 + $0x30] sm:$0xff]
        %v2208 = vld [vmem:[%s9 + $0x38] sm:$0xff]
        %v2209 = vld [vmem:[%s9 + $0x40] sm:$0xff]
        %v2210 = vld [vmem:[%s9 + $0x48] sm:$0xff]
        %v2211 = vld [vmem:[%s9 + $0x50] sm:$0xff]
        %v2212 = vld [vmem:[%s9 + $0x58] sm:$0xff]
        %v2213 = vld [vmem:[%s9 + $0x60] sm:$0xff]
        %v2214 = vld [vmem:[%s9 + $0x68] sm:$0xff]
        %v2215 = vld [vmem:[%s9 + $0x70] sm:$0xff]
        %v2216 = vld [vmem:[%s9 + $0x78] sm:$0xff]
        %v2217 = vld [vmem:[%s10] sm:$0x1]
        %v2219 = vlaneseq
        %v2220 = vshrl.u32 %v2219, 7
        %v2221 = vsub.s32 0, %v2220
        %v2222 = vrot.slane %v2217, %v2221
        %2224 = vmatprep.subr.mxu0 0.0
        %2225 = vmatpush1.msra.mxu0 %v2201
        %2226 = vmatprep.subr.mxu0 0.0
        %2227 = vmatpush1.msra.mxu0 %v2202
        %2228 = vmatprep.subr.mxu0 0.0
        %2229 = vmatpush1.msra.mxu0 %v2203
        %2230 = vmatprep.subr.mxu0 0.0
        %2231 = vmatpush1.msra.mxu0 %v2204
        %2232 = vmatprep.subr.mxu0 0.0
        %2233 = vmatpush1.msra.mxu0 %v2205
        %2234 = vmatprep.subr.mxu0 0.0
        %2235 = vmatpush1.msra.mxu0 %v2206
        %2236 = vmatprep.subr.mxu0 0.0
        %2237 = vmatpush1.msra.mxu0 %v2207
        %2238 = vmatprep.subr.mxu0 0.0
        %2239 = vmatpush1.msra.mxu0 %v2208
        %2240 = vmatprep.subr.mxu0 0.0
        %2241 = vmatpush1.msra.mxu0 %v2209
        %2242 = vmatprep.subr.mxu0 0.0
        %2243 = vmatpush1.msra.mxu0 %v2210
        %2244 = vmatprep.subr.mxu0 0.0
        %2245 = vmatpush1.msra.mxu0 %v2211
        %2246 = vmatprep.subr.mxu0 0.0
        %2247 = vmatpush1.msra.mxu0 %v2212
        %2248 = vmatprep.subr.mxu0 0.0
        %2249 = vmatpush1.msra.mxu0 %v2213
        %2250 = vmatprep.subr.mxu0 0.0
        %2251 = vmatpush1.msra.mxu0 %v2214
        %2252 = vmatprep.subr.mxu0 0.0
        %2253 = vmatpush1.msra.mxu0 %v2215
        %2254 = vmatprep.subr.mxu0 0.0
        %2255 = vmatpush1.msra.mxu0 %v2216
        %2256 = vmatprep.subr.mxu0 0.0
        %2257 = vmatpush1.msra.mxu0 0.0
        %2258 = vmatprep.subr.mxu0 0.0
        %2259 = vmatpush1.msra.mxu0 0.0
        %2260 = vmatprep.subr.mxu0 0.0
        %2261 = vmatpush1.msra.mxu0 0.0
        %2262 = vmatprep.subr.mxu0 0.0
        %2263 = vmatpush1.msra.mxu0 0.0
        %2264 = vmatprep.subr.mxu0 0.0
        %2265 = vmatpush1.msra.mxu0 0.0
        %2266 = vmatprep.subr.mxu0 0.0
        %2267 = vmatpush1.msra.mxu0 0.0
        %2268 = vmatprep.subr.mxu0 0.0
        %2269 = vmatpush1.msra.mxu0 0.0
        %2270 = vmatprep.subr.mxu0 0.0
        %2271 = vmatpush1.msra.mxu0 0.0
        %2272 = vmatprep.subr.mxu0 0.0
        %2273 = vmatpush1.msra.mxu0 0.0
        %2274 = vmatprep.subr.mxu0 0.0
        %2275 = vmatpush1.msra.mxu0 0.0
        %2276 = vmatprep.subr.mxu0 0.0
        %2277 = vmatpush1.msra.mxu0 0.0
        %2278 = vmatprep.subr.mxu0 0.0
        %2279 = vmatpush1.msra.mxu0 0.0
        %2280 = vmatprep.subr.mxu0 0.0
        %2281 = vmatpush1.msra.mxu0 0.0
        %2282 = vmatprep.subr.mxu0 0.0
        %2283 = vmatpush1.msra.mxu0 0.0
        %2284 = vmatprep.subr.mxu0 0.0
        %2285 = vmatpush1.msra.mxu0 0.0
        %2286 = vmatprep.subr.mxu0 0.0
        %2287 = vmatpush1.msra.mxu0 0.0
        %2288 = vmatprep.mubr.f32.mxu0 0.0
        %2289 = vmatmul.mubr.f32.gmra.mrb[0].mxu0 %v2169
        %v2290 = vpop.f32.mrb[0].mxu0
        %v2291 = vadd.f32 %v2222, %v2290
        %v2292 = vpop.f32.mrb[0].mxu0
        %2293 = vmatprep.mubr.f32.mxu0 0.0
        %2294 = vmatmul.mubr.f32.gmra.mrb[0].mxu0 %v2170
        %v2295 = vpop.f32.mrb[0].mxu0
        %v2296 = vadd.f32 %v2222, %v2295
        %v2297 = vpop.f32.mrb[0].mxu0
        %2298 = vmatprep.mubr.f32.mxu0 0.0
        %2299 = vmatmul.mubr.f32.gmra.mrb[0].mxu0 %v2171
        %v2300 = vpop.f32.mrb[0].mxu0
        %v2301 = vadd.f32 %v2222, %v2300
        %v2302 = vpop.f32.mrb[0].mxu0
        %2303 = vmatprep.mubr.f32.mxu0 0.0
        %2304 = vmatmul.mubr.f32.gmra.mrb[0].mxu0 %v2172
        %v2305 = vpop.f32.mrb[0].mxu0
        %v2306 = vadd.f32 %v2222, %v2305
        %v2307 = vpop.f32.mrb[0].mxu0
        %2308 = vmatprep.mubr.f32.mxu0 0.0
        %2309 = vmatmul.mubr.f32.gmra.mrb[0].mxu0 %v2173
        %v2310 = vpop.f32.mrb[0].mxu0
        %v2311 = vadd.f32 %v2222, %v2310
        %v2312 = vpop.f32.mrb[0].mxu0
        %2313 = vmatprep.mubr.f32.mxu0 0.0
        %2314 = vmatmul.mubr.f32.gmra.mrb[0].mxu0 %v2174
        %v2315 = vpop.f32.mrb[0].mxu0
        %v2316 = vadd.f32 %v2222, %v2315
        %v2317 = vpop.f32.mrb[0].mxu0
        %2318 = vmatprep.mubr.f32.mxu0 0.0
        %2319 = vmatmul.mubr.f32.gmra.mrb[0].mxu0 %v2175
        %v2320 = vpop.f32.mrb[0].mxu0
        %v2321 = vadd.f32 %v2222, %v2320
        %v2322 = vpop.f32.mrb[0].mxu0
        %2323 = vmatprep.mubr.f32.mxu0 0.0
        %2324 = vmatmul.mubr.f32.gmra.mrb[0].mxu0 %v2176
        %v2325 = vpop.f32.mrb[0].mxu0
        %v2326 = vadd.f32 %v2222, %v2325
        %v2327 = vpop.f32.mrb[0].mxu0
        %2328 = vmatprep.mubr.f32.mxu0 0.0
        %2329 = vmatmul.mubr.f32.gmra.mrb[0].mxu0 %v2177
        %v2330 = vpop.f32.mrb[0].mxu0
        %v2331 = vadd.f32 %v2222, %v2330
        %v2332 = vpop.f32.mrb[0].mxu0
        %2333 = vmatprep.mubr.f32.mxu0 0.0
        %2334 = vmatmul.mubr.f32.gmra.mrb[0].mxu0 %v2178
        %v2335 = vpop.f32.mrb[0].mxu0
        %v2336 = vadd.f32 %v2222, %v2335
        %v2337 = vpop.f32.mrb[0].mxu0
        %2338 = vmatprep.mubr.f32.mxu0 0.0
        %2339 = vmatmul.mubr.f32.gmra.mrb[0].mxu0 %v2179
        %v2340 = vpop.f32.mrb[0].mxu0
        %v2341 = vadd.f32 %v2222, %v2340
        %v2342 = vpop.f32.mrb[0].mxu0
        %2343 = vmatprep.mubr.f32.mxu0 0.0
        %2344 = vmatmul.mubr.f32.gmra.mrb[0].mxu0 %v2180
        %v2345 = vpop.f32.mrb[0].mxu0
        %v2346 = vadd.f32 %v2222, %v2345
        %v2347 = vpop.f32.mrb[0].mxu0
        %2348 = vmatprep.mubr.f32.mxu0 0.0
        %2349 = vmatmul.mubr.f32.gmra.mrb[0].mxu0 %v2181
        %v2350 = vpop.f32.mrb[0].mxu0
        %v2351 = vadd.f32 %v2222, %v2350
        %v2352 = vpop.f32.mrb[0].mxu0
        %2353 = vmatprep.mubr.f32.mxu0 0.0
        %2354 = vmatmul.mubr.f32.gmra.mrb[0].mxu0 %v2182
        %v2355 = vpop.f32.mrb[0].mxu0
        %v2356 = vadd.f32 %v2222, %v2355
        %v2357 = vpop.f32.mrb[0].mxu0
        %2358 = vmatprep.mubr.f32.mxu0 0.0
        %2359 = vmatmul.mubr.f32.gmra.mrb[0].mxu0 %v2183
        %v2360 = vpop.f32.mrb[0].mxu0
        %v2361 = vadd.f32 %v2222, %v2360
        %v2362 = vpop.f32.mrb[0].mxu0
        %2363 = vmatprep.mubr.f32.mxu0 0.0
        %2364 = vmatmul.mubr.f32.gmra.mrb[0].mxu0 %v2184
        %v2365 = vpop.f32.mrb[0].mxu0
        %v2366 = vadd.f32 %v2222, %v2365
        %v2367 = vpop.f32.mrb[0].mxu0
        %2368 = vmatprep.mubr.f32.mxu0 0.0
        %2369 = vmatmul.mubr.f32.gmra.mrb[0].mxu0 %v2185
        %v2370 = vpop.f32.mrb[0].mxu0
        %v2371 = vadd.f32 %v2222, %v2370
        %v2372 = vpop.f32.mrb[0].mxu0
        %2373 = vmatprep.mubr.f32.mxu0 0.0
        %2374 = vmatmul.mubr.f32.gmra.mrb[0].mxu0 %v2186
        %v2375 = vpop.f32.mrb[0].mxu0
        %v2376 = vadd.f32 %v2222, %v2375
        %v2377 = vpop.f32.mrb[0].mxu0
        %2378 = vmatprep.mubr.f32.mxu0 0.0
        %2379 = vmatmul.mubr.f32.gmra.mrb[0].mxu0 %v2187
        %v2380 = vpop.f32.mrb[0].mxu0
        %v2381 = vadd.f32 %v2222, %v2380
        %v2382 = vpop.f32.mrb[0].mxu0
        %2383 = vmatprep.mubr.f32.mxu0 0.0
        %2384 = vmatmul.mubr.f32.gmra.mrb[0].mxu0 %v2188
        %v2385 = vpop.f32.mrb[0].mxu0
        %v2386 = vadd.f32 %v2222, %v2385
        %v2387 = vpop.f32.mrb[0].mxu0
        %2388 = vmatprep.mubr.f32.mxu0 0.0
        %2389 = vmatmul.mubr.f32.gmra.mrb[0].mxu0 %v2189
        %v2390 = vpop.f32.mrb[0].mxu0
        %v2391 = vadd.f32 %v2222, %v2390
        %v2392 = vpop.f32.mrb[0].mxu0
        %2393 = vmatprep.mubr.f32.mxu0 0.0
        %2394 = vmatmul.mubr.f32.gmra.mrb[0].mxu0 %v2190
        %v2395 = vpop.f32.mrb[0].mxu0
        %v2396 = vadd.f32 %v2222, %v2395
        %v2397 = vpop.f32.mrb[0].mxu0
        %2398 = vmatprep.mubr.f32.mxu0 0.0
        %2399 = vmatmul.mubr.f32.gmra.mrb[0].mxu0 %v2191
        %v2400 = vpop.f32.mrb[0].mxu0
        %v2401 = vadd.f32 %v2222, %v2400
        %v2402 = vpop.f32.mrb[0].mxu0
        %2403 = vmatprep.mubr.f32.mxu0 0.0
        %2404 = vmatmul.mubr.f32.gmra.mrb[0].mxu0 %v2192
        %v2405 = vpop.f32.mrb[0].mxu0
        %v2406 = vadd.f32 %v2222, %v2405
        %v2407 = vpop.f32.mrb[0].mxu0
        %2408 = vmatprep.mubr.f32.mxu0 0.0
        %2409 = vmatmul.mubr.f32.gmra.mrb[0].mxu0 %v2193
        %v2410 = vpop.f32.mrb[0].mxu0
        %v2411 = vadd.f32 %v2222, %v2410
        %v2412 = vpop.f32.mrb[0].mxu0
        %2413 = vmatprep.mubr.f32.mxu0 0.0
        %2414 = vmatmul.mubr.f32.gmra.mrb[0].mxu0 %v2194
        %v2415 = vpop.f32.mrb[0].mxu0
        %v2416 = vadd.f32 %v2222, %v2415
        %v2417 = vpop.f32.mrb[0].mxu0
        %2418 = vmatprep.mubr.f32.mxu0 0.0
        %2419 = vmatmul.mubr.f32.gmra.mrb[0].mxu0 %v2195
        %v2420 = vpop.f32.mrb[0].mxu0
        %v2421 = vadd.f32 %v2222, %v2420
        %v2422 = vpop.f32.mrb[0].mxu0
        %2423 = vmatprep.mubr.f32.mxu0 0.0
        %2424 = vmatmul.mubr.f32.gmra.mrb[0].mxu0 %v2196
        %v2425 = vpop.f32.mrb[0].mxu0
        %v2426 = vadd.f32 %v2222, %v2425
        %v2427 = vpop.f32.mrb[0].mxu0
        %2428 = vmatprep.mubr.f32.mxu0 0.0
        %2429 = vmatmul.mubr.f32.gmra.mrb[0].mxu0 %v2197
        %v2430 = vpop.f32.mrb[0].mxu0
        %v2431 = vadd.f32 %v2222, %v2430
        %v2432 = vpop.f32.mrb[0].mxu0
        %2433 = vmatprep.mubr.f32.mxu0 0.0
        %2434 = vmatmul.mubr.f32.gmra.mrb[0].mxu0 %v2198
        %v2435 = vpop.f32.mrb[0].mxu0
        %v2436 = vadd.f32 %v2222, %v2435
        %v2437 = vpop.f32.mrb[0].mxu0
        %2438 = vmatprep.mubr.f32.mxu0 0.0
        %2439 = vmatmul.mubr.f32.gmra.mrb[0].mxu0 %v2199
        %v2440 = vpop.f32.mrb[0].mxu0
        %v2441 = vadd.f32 %v2222, %v2440
        %v2442 = vpop.f32.mrb[0].mxu0
        %2443 = vmatprep.mubr.f32.mxu0 0.0
        %2444 = vmatmul.mubr.f32.gmra.mrb[0].mxu0 %v2200
        %v2445 = vpop.f32.mrb[0].mxu0
        %v2446 = vadd.f32 %v2222, %v2445
        %v2447 = vpop.f32.mrb[0].mxu0
        %2448 = vdwg.mxu0
        %vm2449 = vcmp.gt.f32.partialorder %v2291, 0.0
        %vm2450 = vcmp.gt.f32.partialorder %v2296, 0.0
        %vm2451 = vcmp.gt.f32.partialorder %v2301, 0.0
        %vm2452 = vcmp.gt.f32.partialorder %v2306, 0.0
        %vm2453 = vcmp.gt.f32.partialorder %v2311, 0.0
        %vm2454 = vcmp.gt.f32.partialorder %v2316, 0.0
        %vm2455 = vcmp.gt.f32.partialorder %v2321, 0.0
        %vm2456 = vcmp.gt.f32.partialorder %v2326, 0.0
        %vm2457 = vcmp.gt.f32.partialorder %v2331, 0.0
        %vm2458 = vcmp.gt.f32.partialorder %v2336, 0.0
        %vm2459 = vcmp.gt.f32.partialorder %v2341, 0.0
        %vm2460 = vcmp.gt.f32.partialorder %v2346, 0.0
        %vm2461 = vcmp.gt.f32.partialorder %v2351, 0.0
        %vm2462 = vcmp.gt.f32.partialorder %v2356, 0.0
        %vm2463 = vcmp.gt.f32.partialorder %v2361, 0.0
        %vm2464 = vcmp.gt.f32.partialorder %v2366, 0.0
        %vm2465 = vcmp.gt.f32.partialorder %v2371, 0.0
        %vm2466 = vcmp.gt.f32.partialorder %v2376, 0.0
        %vm2467 = vcmp.gt.f32.partialorder %v2381, 0.0
        %vm2468 = vcmp.gt.f32.partialorder %v2386, 0.0
        %vm2469 = vcmp.gt.f32.partialorder %v2391, 0.0
        %vm2470 = vcmp.gt.f32.partialorder %v2396, 0.0
        %vm2471 = vcmp.gt.f32.partialorder %v2401, 0.0
        %vm2472 = vcmp.gt.f32.partialorder %v2406, 0.0
        %vm2473 = vcmp.gt.f32.partialorder %v2411, 0.0
        %vm2474 = vcmp.gt.f32.partialorder %v2416, 0.0
        %vm2475 = vcmp.gt.f32.partialorder %v2421, 0.0
        %vm2476 = vcmp.gt.f32.partialorder %v2426, 0.0
        %vm2477 = vcmp.gt.f32.partialorder %v2431, 0.0
        %vm2478 = vcmp.gt.f32.partialorder %v2436, 0.0
        %vm2479 = vcmp.gt.f32.partialorder %v2441, 0.0
        %vm2480 = vcmp.gt.f32.partialorder %v2446, 0.0
        %v2481 = vmul.f32 %v2291, 0.01
        %v2482 = vmul.f32 %v2296, 0.01
        %v2483 = vmul.f32 %v2301, 0.01
        %v2484 = vmul.f32 %v2306, 0.01
        %v2485 = vmul.f32 %v2311, 0.01
        %v2486 = vmul.f32 %v2316, 0.01
        %v2487 = vmul.f32 %v2321, 0.01
        %v2488 = vmul.f32 %v2326, 0.01
        %v2489 = vmul.f32 %v2331, 0.01
        %v2490 = vmul.f32 %v2336, 0.01
        %v2491 = vmul.f32 %v2341, 0.01
        %v2492 = vmul.f32 %v2346, 0.01
        %v2493 = vmul.f32 %v2351, 0.01
        %v2494 = vmul.f32 %v2356, 0.01
        %v2495 = vmul.f32 %v2361, 0.01
        %v2496 = vmul.f32 %v2366, 0.01
        %v2497 = vmul.f32 %v2371, 0.01
        %v2498 = vmul.f32 %v2376, 0.01
        %v2499 = vmul.f32 %v2381, 0.01
        %v2500 = vmul.f32 %v2386, 0.01
        %v2501 = vmul.f32 %v2391, 0.01
        %v2502 = vmul.f32 %v2396, 0.01
        %v2503 = vmul.f32 %v2401, 0.01
        %v2504 = vmul.f32 %v2406, 0.01
        %v2505 = vmul.f32 %v2411, 0.01
        %v2506 = vmul.f32 %v2416, 0.01
        %v2507 = vmul.f32 %v2421, 0.01
        %v2508 = vmul.f32 %v2426, 0.01
        %v2509 = vmul.f32 %v2431, 0.01
        %v2510 = vmul.f32 %v2436, 0.01
        %v2511 = vmul.f32 %v2441, 0.01
        %v2512 = vmul.f32 %v2446, 0.01
        %v2513 = vsel %vm2449, %v2291, %v2481
        %v2514 = vsel %vm2450, %v2296, %v2482
        %v2515 = vsel %vm2451, %v2301, %v2483
        %v2516 = vsel %vm2452, %v2306, %v2484
        %v2517 = vsel %vm2453, %v2311, %v2485
        %v2518 = vsel %vm2454, %v2316, %v2486
        %v2519 = vsel %vm2455, %v2321, %v2487
        %v2520 = vsel %vm2456, %v2326, %v2488
        %v2521 = vsel %vm2457, %v2331, %v2489
        %v2522 = vsel %vm2458, %v2336, %v2490
        %v2523 = vsel %vm2459, %v2341, %v2491
        %v2524 = vsel %vm2460, %v2346, %v2492
        %v2525 = vsel %vm2461, %v2351, %v2493
        %v2526 = vsel %vm2462, %v2356, %v2494
        %v2527 = vsel %vm2463, %v2361, %v2495
        %v2528 = vsel %vm2464, %v2366, %v2496
        %v2529 = vsel %vm2465, %v2371, %v2497
        %v2530 = vsel %vm2466, %v2376, %v2498
        %v2531 = vsel %vm2467, %v2381, %v2499
        %v2532 = vsel %vm2468, %v2386, %v2500
        %v2533 = vsel %vm2469, %v2391, %v2501
        %v2534 = vsel %vm2470, %v2396, %v2502
        %v2535 = vsel %vm2471, %v2401, %v2503
        %v2536 = vsel %vm2472, %v2406, %v2504
        %v2537 = vsel %vm2473, %v2411, %v2505
        %v2538 = vsel %vm2474, %v2416, %v2506
        %v2539 = vsel %vm2475, %v2421, %v2507
        %v2540 = vsel %vm2476, %v2426, %v2508
        %v2541 = vsel %vm2477, %v2431, %v2509
        %v2542 = vsel %vm2478, %v2436, %v2510
        %v2543 = vsel %vm2479, %v2441, %v2511
        %v2544 = vsel %vm2480, %v2446, %v2512
        %v2545 = vld [vmem:[%s11] sm:$0x1]
        %v2547 = vlaneseq
        %v2548 = vshrl.u32 %v2547, 7
        %v2549 = vsub.s32 0, %v2548
        %v2550 = vrot.slane %v2545, %v2549
        %v2552 = vmul.f32 %v2513, %v2550
        %v2553 = vmul.f32 %v2514, %v2550
        %v2554 = vmul.f32 %v2515, %v2550
        %v2555 = vmul.f32 %v2516, %v2550
        %v2556 = vmul.f32 %v2517, %v2550
        %v2557 = vmul.f32 %v2518, %v2550
        %v2558 = vmul.f32 %v2519, %v2550
        %v2559 = vmul.f32 %v2520, %v2550
        %v2560 = vmul.f32 %v2521, %v2550
        %v2561 = vmul.f32 %v2522, %v2550
        %v2562 = vmul.f32 %v2523, %v2550
        %v2563 = vmul.f32 %v2524, %v2550
        %v2564 = vmul.f32 %v2525, %v2550
        %v2565 = vmul.f32 %v2526, %v2550
        %v2566 = vmul.f32 %v2527, %v2550
        %v2567 = vmul.f32 %v2528, %v2550
        %v2568 = vmul.f32 %v2529, %v2550
        %v2569 = vmul.f32 %v2530, %v2550
        %v2570 = vmul.f32 %v2531, %v2550
        %v2571 = vmul.f32 %v2532, %v2550
        %v2572 = vmul.f32 %v2533, %v2550
        %v2573 = vmul.f32 %v2534, %v2550
        %v2574 = vmul.f32 %v2535, %v2550
        %v2575 = vmul.f32 %v2536, %v2550
        %v2576 = vmul.f32 %v2537, %v2550
        %v2577 = vmul.f32 %v2538, %v2550
        %v2578 = vmul.f32 %v2539, %v2550
        %v2579 = vmul.f32 %v2540, %v2550
        %v2580 = vmul.f32 %v2541, %v2550
        %v2581 = vmul.f32 %v2542, %v2550
        %v2582 = vmul.f32 %v2543, %v2550
        %v2583 = vmul.f32 %v2544, %v2550
        %2584 = vadd.xlane.f32.xlu0 %v2552
        %v2585 = vpop.xlane.xlu0 %2584
        %2586 = vadd.xlane.f32.xlu0 %v2553
        %v2587 = vpop.xlane.xlu0 %2586
        %2588 = vadd.xlane.f32.xlu0 %v2554
        %v2589 = vpop.xlane.xlu0 %2588
        %2590 = vadd.xlane.f32.xlu0 %v2555
        %v2591 = vpop.xlane.xlu0 %2590
        %2592 = vadd.xlane.f32.xlu0 %v2556
        %v2593 = vpop.xlane.xlu0 %2592
        %2594 = vadd.xlane.f32.xlu0 %v2557
        %v2595 = vpop.xlane.xlu0 %2594
        %2596 = vadd.xlane.f32.xlu0 %v2558
        %v2597 = vpop.xlane.xlu0 %2596
        %2598 = vadd.xlane.f32.xlu0 %v2559
        %v2599 = vpop.xlane.xlu0 %2598
        %2600 = vadd.xlane.f32.xlu0 %v2560
        %v2601 = vpop.xlane.xlu0 %2600
        %2602 = vadd.xlane.f32.xlu0 %v2561
        %v2603 = vpop.xlane.xlu0 %2602
        %2604 = vadd.xlane.f32.xlu0 %v2562
        %v2605 = vpop.xlane.xlu0 %2604
        %2606 = vadd.xlane.f32.xlu0 %v2563
        %v2607 = vpop.xlane.xlu0 %2606
        %2608 = vadd.xlane.f32.xlu0 %v2564
        %v2609 = vpop.xlane.xlu0 %2608
        %2610 = vadd.xlane.f32.xlu0 %v2565
        %v2611 = vpop.xlane.xlu0 %2610
        %2612 = vadd.xlane.f32.xlu0 %v2566
        %v2613 = vpop.xlane.xlu0 %2612
        %2614 = vadd.xlane.f32.xlu0 %v2567
        %v2615 = vpop.xlane.xlu0 %2614
        %2616 = vadd.xlane.f32.xlu0 %v2568
        %v2617 = vpop.xlane.xlu0 %2616
        %2618 = vadd.xlane.f32.xlu0 %v2569
        %v2619 = vpop.xlane.xlu0 %2618
        %2620 = vadd.xlane.f32.xlu0 %v2570
        %v2621 = vpop.xlane.xlu0 %2620
        %2622 = vadd.xlane.f32.xlu0 %v2571
        %v2623 = vpop.xlane.xlu0 %2622
        %2624 = vadd.xlane.f32.xlu0 %v2572
        %v2625 = vpop.xlane.xlu0 %2624
        %2626 = vadd.xlane.f32.xlu0 %v2573
        %v2627 = vpop.xlane.xlu0 %2626
        %2628 = vadd.xlane.f32.xlu0 %v2574
        %v2629 = vpop.xlane.xlu0 %2628
        %2630 = vadd.xlane.f32.xlu0 %v2575
        %v2631 = vpop.xlane.xlu0 %2630
        %2632 = vadd.xlane.f32.xlu0 %v2576
        %v2633 = vpop.xlane.xlu0 %2632
        %2634 = vadd.xlane.f32.xlu0 %v2577
        %v2635 = vpop.xlane.xlu0 %2634
        %2636 = vadd.xlane.f32.xlu0 %v2578
        %v2637 = vpop.xlane.xlu0 %2636
        %2638 = vadd.xlane.f32.xlu0 %v2579
        %v2639 = vpop.xlane.xlu0 %2638
        %2640 = vadd.xlane.f32.xlu0 %v2580
        %v2641 = vpop.xlane.xlu0 %2640
        %2642 = vadd.xlane.f32.xlu0 %v2581
        %v2643 = vpop.xlane.xlu0 %2642
        %2644 = vadd.xlane.f32.xlu0 %v2582
        %v2645 = vpop.xlane.xlu0 %2644
        %2646 = vadd.xlane.f32.xlu0 %v2583
        %v2647 = vpop.xlane.xlu0 %2646
        %v2648 = vld [vmem:[#allocation2] sm:$0x1]
        %v2650 = vlaneseq
        %v2651 = vshrl.u32 %v2650, 7
        %v2652 = vsub.s32 0, %v2651
        %v2653 = vrot.slane %v2648, %v2652
        %v2655 = vadd.f32 %v2585, %v2653
        %v2656 = vadd.f32 %v2587, %v2653
        %v2657 = vadd.f32 %v2589, %v2653
        %v2658 = vadd.f32 %v2591, %v2653
        %v2659 = vadd.f32 %v2593, %v2653
        %v2660 = vadd.f32 %v2595, %v2653
        %v2661 = vadd.f32 %v2597, %v2653
        %v2662 = vadd.f32 %v2599, %v2653
        %v2663 = vadd.f32 %v2601, %v2653
        %v2664 = vadd.f32 %v2603, %v2653
        %v2665 = vadd.f32 %v2605, %v2653
        %v2666 = vadd.f32 %v2607, %v2653
        %v2667 = vadd.f32 %v2609, %v2653
        %v2668 = vadd.f32 %v2611, %v2653
        %v2669 = vadd.f32 %v2613, %v2653
        %v2670 = vadd.f32 %v2615, %v2653
        %v2671 = vadd.f32 %v2617, %v2653
        %v2672 = vadd.f32 %v2619, %v2653
        %v2673 = vadd.f32 %v2621, %v2653
        %v2674 = vadd.f32 %v2623, %v2653
        %v2675 = vadd.f32 %v2625, %v2653
        %v2676 = vadd.f32 %v2627, %v2653
        %v2677 = vadd.f32 %v2629, %v2653
        %v2678 = vadd.f32 %v2631, %v2653
        %v2679 = vadd.f32 %v2633, %v2653
        %v2680 = vadd.f32 %v2635, %v2653
        %v2681 = vadd.f32 %v2637, %v2653
        %v2682 = vadd.f32 %v2639, %v2653
        %v2683 = vadd.f32 %v2641, %v2653
        %v2684 = vadd.f32 %v2643, %v2653
        %v2685 = vadd.f32 %v2645, %v2653
        %v2686 = vadd.f32 %v2647, %v2653
        %2688 = vset.pattern.permute.xlu0 0
        %2689 = vperm.xlu0 %2688, %v2655
        %v2690 = vpop.permute.xlu0 %2689
        %2693 = vset.pattern.permute.xlu0 0
        %2694 = vperm.xlu0 %2693, %v2656
        %v2695 = vpop.permute.xlu0 %2694
        %2698 = vset.pattern.permute.xlu0 0
        %2699 = vperm.xlu0 %2698, %v2657
        %v2700 = vpop.permute.xlu0 %2699
        %2703 = vset.pattern.permute.xlu0 0
        %2704 = vperm.xlu0 %2703, %v2658
        %v2705 = vpop.permute.xlu0 %2704
        %2708 = vset.pattern.permute.xlu0 0
        %2709 = vperm.xlu0 %2708, %v2659
        %v2710 = vpop.permute.xlu0 %2709
        %2713 = vset.pattern.permute.xlu0 0
        %2714 = vperm.xlu0 %2713, %v2660
        %v2715 = vpop.permute.xlu0 %2714
        %2718 = vset.pattern.permute.xlu0 0
        %2719 = vperm.xlu0 %2718, %v2661
        %v2720 = vpop.permute.xlu0 %2719
        %2723 = vset.pattern.permute.xlu0 0
        %2724 = vperm.xlu0 %2723, %v2662
        %v2725 = vpop.permute.xlu0 %2724
        %2728 = vset.pattern.permute.xlu0 0
        %2729 = vperm.xlu0 %2728, %v2663
        %v2730 = vpop.permute.xlu0 %2729
        %2733 = vset.pattern.permute.xlu0 0
        %2734 = vperm.xlu0 %2733, %v2664
        %v2735 = vpop.permute.xlu0 %2734
        %2738 = vset.pattern.permute.xlu0 0
        %2739 = vperm.xlu0 %2738, %v2665
        %v2740 = vpop.permute.xlu0 %2739
        %2743 = vset.pattern.permute.xlu0 0
        %2744 = vperm.xlu0 %2743, %v2666
        %v2745 = vpop.permute.xlu0 %2744
        %2748 = vset.pattern.permute.xlu0 0
        %2749 = vperm.xlu0 %2748, %v2667
        %v2750 = vpop.permute.xlu0 %2749
        %2753 = vset.pattern.permute.xlu0 0
        %2754 = vperm.xlu0 %2753, %v2668
        %v2755 = vpop.permute.xlu0 %2754
        %2758 = vset.pattern.permute.xlu0 0
        %2759 = vperm.xlu0 %2758, %v2669
        %v2760 = vpop.permute.xlu0 %2759
        %2763 = vset.pattern.permute.xlu0 0
        %2764 = vperm.xlu0 %2763, %v2670
        %v2765 = vpop.permute.xlu0 %2764
        %2768 = vset.pattern.permute.xlu0 0
        %2769 = vperm.xlu0 %2768, %v2671
        %v2770 = vpop.permute.xlu0 %2769
        %2773 = vset.pattern.permute.xlu0 0
        %2774 = vperm.xlu0 %2773, %v2672
        %v2775 = vpop.permute.xlu0 %2774
        %2778 = vset.pattern.permute.xlu0 0
        %2779 = vperm.xlu0 %2778, %v2673
        %v2780 = vpop.permute.xlu0 %2779
        %2783 = vset.pattern.permute.xlu0 0
        %2784 = vperm.xlu0 %2783, %v2674
        %v2785 = vpop.permute.xlu0 %2784
        %2788 = vset.pattern.permute.xlu0 0
        %2789 = vperm.xlu0 %2788, %v2675
        %v2790 = vpop.permute.xlu0 %2789
        %2793 = vset.pattern.permute.xlu0 0
        %2794 = vperm.xlu0 %2793, %v2676
        %v2795 = vpop.permute.xlu0 %2794
        %2798 = vset.pattern.permute.xlu0 0
        %2799 = vperm.xlu0 %2798, %v2677
        %v2800 = vpop.permute.xlu0 %2799
        %2803 = vset.pattern.permute.xlu0 0
        %2804 = vperm.xlu0 %2803, %v2678
        %v2805 = vpop.permute.xlu0 %2804
        %2808 = vset.pattern.permute.xlu0 0
        %2809 = vperm.xlu0 %2808, %v2679
        %v2810 = vpop.permute.xlu0 %2809
        %2813 = vset.pattern.permute.xlu0 0
        %2814 = vperm.xlu0 %2813, %v2680
        %v2815 = vpop.permute.xlu0 %2814
        %2818 = vset.pattern.permute.xlu0 0
        %2819 = vperm.xlu0 %2818, %v2681
        %v2820 = vpop.permute.xlu0 %2819
        %2823 = vset.pattern.permute.xlu0 0
        %2824 = vperm.xlu0 %2823, %v2682
        %v2825 = vpop.permute.xlu0 %2824
        %2828 = vset.pattern.permute.xlu0 0
        %2829 = vperm.xlu0 %2828, %v2683
        %v2830 = vpop.permute.xlu0 %2829
        %2833 = vset.pattern.permute.xlu0 0
        %2834 = vperm.xlu0 %2833, %v2684
        %v2835 = vpop.permute.xlu0 %2834
        %2838 = vset.pattern.permute.xlu0 0
        %2839 = vperm.xlu0 %2838, %v2685
        %v2840 = vpop.permute.xlu0 %2839
        %2843 = vset.pattern.permute.xlu0 0
        %2844 = vperm.xlu0 %2843, %v2686
        %v2845 = vpop.permute.xlu0 %2844
        %2847 = vst [vmem:[%s474] sm:$0xff] %v2690
        %2848 = vst [vmem:[%s474 + $0x8] sm:$0xff] %v2695
        %2849 = vst [vmem:[%s474 + $0x10] sm:$0xff] %v2700
        %2850 = vst [vmem:[%s474 + $0x18] sm:$0xff] %v2705
        %2851 = vst [vmem:[%s474 + $0x20] sm:$0xff] %v2710
        %2852 = vst [vmem:[%s474 + $0x28] sm:$0xff] %v2715
        %2853 = vst [vmem:[%s474 + $0x30] sm:$0xff] %v2720
        %2854 = vst [vmem:[%s474 + $0x38] sm:$0xff] %v2725
        %2855 = vst [vmem:[%s474 + $0x40] sm:$0xff] %v2730
        %2856 = vst [vmem:[%s474 + $0x48] sm:$0xff] %v2735
        %2857 = vst [vmem:[%s474 + $0x50] sm:$0xff] %v2740
        %2858 = vst [vmem:[%s474 + $0x58] sm:$0xff] %v2745
        %2859 = vst [vmem:[%s474 + $0x60] sm:$0xff] %v2750
        %2860 = vst [vmem:[%s474 + $0x68] sm:$0xff] %v2755
        %2861 = vst [vmem:[%s474 + $0x70] sm:$0xff] %v2760
        %2862 = vst [vmem:[%s474 + $0x78] sm:$0xff] %v2765
        %2863 = vst [vmem:[%s474 + $0x80] sm:$0xff] %v2770
        %2864 = vst [vmem:[%s474 + $0x88] sm:$0xff] %v2775
        %2865 = vst [vmem:[%s474 + $0x90] sm:$0xff] %v2780
        %2866 = vst [vmem:[%s474 + $0x98] sm:$0xff] %v2785
        %2867 = vst [vmem:[%s474 + $0xa0] sm:$0xff] %v2790
        %2868 = vst [vmem:[%s474 + $0xa8] sm:$0xff] %v2795
        %2869 = vst [vmem:[%s474 + $0xb0] sm:$0xff] %v2800
        %2870 = vst [vmem:[%s474 + $0xb8] sm:$0xff] %v2805
        %2871 = vst [vmem:[%s474 + $0xc0] sm:$0xff] %v2810
        %2872 = vst [vmem:[%s474 + $0xc8] sm:$0xff] %v2815
        %2873 = vst [vmem:[%s474 + $0xd0] sm:$0xff] %v2820
        %2874 = vst [vmem:[%s474 + $0xd8] sm:$0xff] %v2825
        %2875 = vst [vmem:[%s474 + $0xe0] sm:$0xff] %v2830
        %2876 = vst [vmem:[%s474 + $0xe8] sm:$0xff] %v2835
        %2877 = vst [vmem:[%s474 + $0xf0] sm:$0xff] %v2840
        %2878 = vst [vmem:[%s474 + $0xf8] sm:$0xff] %v2845
        %s2879 = sand.u32 %s320, 1
        %s2880 = scalar_lea.sflag [#allocation4], %s2879
        %s2881 = sand.u32 %s320, 1
        %s2882 = smul.addr %s2881, 256
        %s2883 = scalar_lea.vmem [#allocation3], %s2882
        %s2884 = sand.u32 %s346, 1
        %s2885 = scalar_lea.sflag [#allocation6], %s2884
        %s2886 = sand.u32 %s346, 1
        %s2887 = smul.addr %s2886, 256
        %s2888 = scalar_lea.vmem [#allocation5], %s2887
        // Predicated region
        $region73: #{tpu_custom_call.1} parent=71 // pred_check
          %p2889 = pneg %p330
        $region74: #{tpu_custom_call.1} parent=71 // pred_check_branch
          %2891 = sbr.rel (%p2889) target = $region76
        $region75: #{tpu_custom_call.1} parent=71 // pred_region
          %s2892 = smul.u32 32, %s34
          %s2894 = ssub.s32 4096, 4096
          %2895 = vsyncadd %s2880, %s2894
          %s2896 = smul.addr %s2892, 128
          %s2897 = scalar_lea.hbm %s13, %s2896
          %s2898 = sshll.u32 %s2883, 4
          %s2899 = int_to_ptr.vmem [resolvable:$true] %s2898
          %2904 = dma.vmem_to_hbm [thread:$0]  %s2899, 4096, %s2897, %s2880, 128, 128, 8
        $region76: #{tpu_custom_call.1} parent=71 // pred_fallthru
          _
        // Predicated region
        $region77: #{tpu_custom_call.1} parent=71 // pred_check
          %p2905 = pneg %p356
        $region78: #{tpu_custom_call.1} parent=71 // pred_check_branch
          %2907 = sbr.rel (%p2905) target = $region80
        $region79: #{tpu_custom_call.1} parent=71 // pred_region
          %s2908 = smul.u32 32, %s34
          %s2910 = ssub.s32 4096, 4096
          %2911 = vsyncadd %s2885, %s2910
          %s2912 = smul.addr %s2908, 128
          %s2913 = scalar_lea.hbm %s14, %s2912
          %s2914 = sshll.u32 %s2888, 4
          %s2915 = int_to_ptr.vmem [resolvable:$true] %s2914
          %2920 = dma.vmem_to_hbm [thread:$0]  %s2915, 4096, %s2913, %s2885, 128, 128, 8
        $region80: #{tpu_custom_call.1} parent=71 // pred_fallthru
          _
      $region72: #{tpu_custom_call.1} parent=5 // pred_fallthru
        _
      %p2921 = scmp.le.s32.totalorder 2, %s29
      // Predicated region
      $region81: #{tpu_custom_call.1} parent=5 // pred_check
        %p2922 = pneg %p2921
      $region82: #{tpu_custom_call.1} parent=5 // pred_check_branch
        %2924 = sbr.rel (%p2922) target = $region84
      $region83: #{tpu_custom_call.1} parent=5 // pred_region
        %s2925 = ssub.s32 %s29, 2
        // Predicated region
        $region85: #{tpu_custom_call.1} parent=83 // pred_check
          %p2926 = pneg %p336
        $region86: #{tpu_custom_call.1} parent=83 // pred_check_branch
          %2928 = sbr.rel (%p2926) target = $region88
        $region87: #{tpu_custom_call.1} parent=83 // pred_region
          %s2929 = sand.u32 %s321, 1
          %s2930 = scalar_lea.sflag [#allocation4], %s2929
          %s2931 = sand.u32 %s321, 1
          %s2932 = smul.addr %s2931, 256
          %s2933 = scalar_lea.vmem [#allocation3], %s2932
          %2934 = dma.done %s2930, 4096
        $region88: #{tpu_custom_call.1} parent=83 // pred_fallthru
          _
        // Predicated region
        $region89: #{tpu_custom_call.1} parent=83 // pred_check
          %p2935 = pneg %p362
        $region90: #{tpu_custom_call.1} parent=83 // pred_check_branch
          %2937 = sbr.rel (%p2935) target = $region92
        $region91: #{tpu_custom_call.1} parent=83 // pred_region
          %s2938 = sand.u32 %s347, 1
          %s2939 = scalar_lea.sflag [#allocation6], %s2938
          %s2940 = sand.u32 %s347, 1
          %s2941 = smul.addr %s2940, 256
          %s2942 = scalar_lea.vmem [#allocation5], %s2941
          %2943 = dma.done %s2939, 4096
        $region92: #{tpu_custom_call.1} parent=83 // pred_fallthru
          _
      $region84: #{tpu_custom_call.1} parent=5 // pred_fallthru
        _
    $region6: #{tpu_custom_call.1} parent=1 // loop_footer
      %s33 = sadd.s32 1, %s29
    $region7: #{tpu_custom_call.1} parent=1 // loop_footer_branch
      %28 = sbr.rel target = $region3
    $region8: #{tpu_custom_call.1} parent=1 // loop_exit
      _
    %2944 = vsyncpa [#allocation4], 1
    %s2945 = scalar_lea.sflag [#allocation4], 1
    %2946 = vsyncpa %s2945, 1
    %2947 = vsyncpa [#allocation6], 1
    %s2948 = scalar_lea.sflag [#allocation6], 1
    %2949 = vsyncpa %s2948, 1

</llo_original>
